<compile_context>
chip_gen: v6e
topology: v6e:2x2x1
jax: 0.10.0
libtpu: 0.0.40
codegen_flags: <defaults>
</compile_context>

<pallas_src>
import functools

import jax
import jax.numpy as jnp
from jax import lax
from jax.experimental import pallas as pl
from jax.experimental.pallas import tpu as pltpu

EPS = 1e-12  # torch F.normalize eps


def ghostvlad_kernel(x_ref, w_ref, b_ref, cent_t_ref, out_ref, *, K, unroll):
    # x_ref:      (Bn, C, P)  channels-first features (f32 or bf16)
    # w_ref:      (KG, C)     1x1 conv weight
    # b_ref:      (KG, 1)     1x1 conv bias (column -> broadcasts over P lanes)
    # cent_t_ref: (C, K)      VLAD centroids, pre-transposed
    # out_ref:    (Bn, C, K)  per-sample normalized VLAD, channel-major
    Bn, C, P = x_ref.shape
    KG = w_ref.shape[0]
    w = w_ref[...]
    cent_t = cent_t_ref[...]
    # Hoist broadcasts/constants out of the (unrolled) per-sample loop: JAX
    # does not CSE broadcast_in_dim, so these would be re-emitted per sample.
    b_full = jnp.broadcast_to(b_ref[...], (KG, P))
    ones8 = jnp.ones((8, P), jnp.float32)

    def per_sample(i, carry):
        x = x_ref[i].astype(jnp.float32)                              # (C, P)

        # --- L2 normalize over channels (sublane reduce + EUP rsqrt).
        # rsqrt(max(ssq, EPS^2)) == 1 / max(||x||, EPS) (sqrt is monotone).
        ssq = jnp.sum(x * x, axis=0, keepdims=True)                   # (1, P)
        xn = x * lax.rsqrt(jnp.maximum(ssq, EPS * EPS))               # (C, P)

        # --- 1x1 conv: logits[k, p] = sum_c w[k, c] * xn[c, p] + b[k]
        logits = lax.dot_general(
            w, xn, (((1,), (0,)), ((), ())),
            preferred_element_type=jnp.float32) + b_full              # (KG, P)

        # --- softmax over clusters (sublane axis), drop ghost clusters.
        m = jnp.max(logits, axis=0, keepdims=True)                    # (1, P)
        e = jnp.exp(logits - m)                                       # (KG, P)
        inv_den = 1.0 / jnp.sum(e, axis=0, keepdims=True)             # (1, P)
        a = e[:K] * inv_den                                           # (K, P)

        # --- VLAD aggregation in channel-major (C, K) layout:
        #       aggT[c, k] = sum_p xn[c, p] * a[k, p]
        #     xn is the canonical LHS, so only the tiny (K, P) attention
        #     matrix needs a relayout (not the (C, P) xn slab).
        agg_t = lax.dot_general(
            xn, a, (((1,), (1,)), ((), ())),
            preferred_element_type=jnp.float32)                       # (C, K)
        # asum directly as a (1, K) lane row via a small MXU matvec.
        asum_row = lax.dot_general(
            ones8, a, (((1,), (1,)), ((), ())),
            preferred_element_type=jnp.float32)[:1]                   # (1, K)
        vlad_t = agg_t - asum_row * cent_t                            # (C, K)

        # --- intra-normalize each cluster (column) over C (sublane reduce).
        vss = jnp.sum(vlad_t * vlad_t, axis=0, keepdims=True)         # (1, K)
        vlad_t = vlad_t * lax.rsqrt(jnp.maximum(vss, EPS * EPS))

        # --- global L2 norm over the flattened (K*C) vector.
        tot = jnp.sum(jnp.sum(vlad_t * vlad_t, axis=0, keepdims=True),
                      axis=1, keepdims=True)                          # (1, 1)
        vlad_t = vlad_t * lax.rsqrt(jnp.maximum(tot, EPS * EPS))

        out_ref[i] = vlad_t
        return carry

    lax.fori_loop(0, Bn, per_sample, 0, unroll=unroll)


def _chip_params():
    """Best-effort (vmem_capacity_bytes, tensorcores_per_chip, hbm_bytes_per_s)."""
    vmem = 128 * 1024 * 1024          # v5e / v6e
    cores = 1                         # TensorCores per chip
    hbm = 0.8e12                      # bytes/s, conservative (v5e)
    kind = ""
    try:
        kind = jax.devices()[0].device_kind.lower()
    except Exception:
        pass
    if "v6" in kind:
        hbm = 1.3e12
    if "v7" in kind or "7x" in kind:
        vmem = 64 * 1024 * 1024
        cores = 2
        hbm = 3.2e12
    try:  # Prefer the real number when the query is available.
        cap = int(pltpu.get_tpu_info().vmem_capacity_bytes)
        if cap >= (16 << 20):
            vmem = cap
    except Exception:
        pass
    return vmem, cores, hbm


def ghost_vlad_forward(x_nchw, conv_w, conv_b, centroids, K, block_n=None):
    """x_nchw: (N, C, H, W) float32 or bfloat16. Returns (N, K*C) float32."""
    N, C, H, W = x_nchw.shape
    P = H * W
    KG = conv_w.shape[0]

    # Stream x in its own dtype (bf16 halves the dominant HBM read); upcast to
    # f32 happens in-kernel.  Other dtypes are promoted to f32 up front.
    if x_nchw.dtype not in (jnp.float32, jnp.bfloat16):
        x_nchw = x_nchw.astype(jnp.float32)
    x_ncp = x_nchw.reshape(N, C, P)          # contiguous view -> no HBM copy
    x_bpe = x_ncp.dtype.itemsize

    w = conv_w.astype(jnp.float32)
    b2 = conv_b.reshape(KG, 1).astype(jnp.float32)
    cent_t = jnp.transpose(centroids.astype(jnp.float32))   # (C, K), tiny, once

    vmem_cap, n_cores, hbm_bps = _chip_params()

    # Per-sample VMEM footprint of the pipelined blocks, including the 2x
    # double-buffering Pallas applies to streamed inputs/outputs.
    per_sample_db = 2 * (C * P * x_bpe + C * K * 4)
    if block_n is None:
        budget = min(int(vmem_cap * 0.4), 48 * 1024 * 1024)
        vmem_block_cap = max(1, budget // per_sample_db)
        # Samples per step needed so one step's HBM traffic amortizes the
        # ~0.35us per-step overhead to <~10%.
        min_amortize = max(1, int(3.5e-6 * hbm_bps) // (C * P * x_bpe))
        n_steps = max(1, -(-N // vmem_block_cap))
        if n_cores >= 2 and N >= 2 * min_amortize:
            n_steps = max(n_steps, n_cores)   # one step per TensorCore (v7x)
        block_n = max(1, -(-N // n_steps))
    block_n = max(1, min(block_n, N))

    n_steps = -(-N // block_n)
    N_pad = n_steps * block_n
    if N_pad != N:   # pad the batch; padded zero samples are sliced off below
        x_ncp = jnp.pad(x_ncp, ((0, N_pad - N), (0, 0), (0, 0)))

    # Bound the unroll so large blocks don't blow code size / vreg pressure.
    unroll = block_n if block_n <= 8 else 4

    # Scoped-VMEM limit: double-buffered blocks + params + loop temporaries.
    temp_bytes = max(unroll, 1) * (C * P + 2 * KG * P + 4 * C * K) * 4
    param_bytes = 2 * (KG * C + KG + K * C) * 4
    vmem_needed = block_n * per_sample_db + param_bytes + temp_bytes + (4 << 20)
    vmem_limit = int(min(vmem_cap, max(vmem_needed, 32 << 20)))

    out = pl.pallas_call(
        functools.partial(ghostvlad_kernel, K=K, unroll=unroll),
        out_shape=jax.ShapeDtypeStruct((N_pad, C, K), jnp.float32),
        grid_spec=pltpu.PrefetchScalarGridSpec(
            num_scalar_prefetch=0,
            grid=(n_steps,),
            in_specs=[
                pl.BlockSpec((block_n, C, P), lambda n: (n, 0, 0)),
                pl.BlockSpec((KG, C), lambda n: (0, 0)),
                pl.BlockSpec((KG, 1), lambda n: (0, 0)),
                pl.BlockSpec((C, K), lambda n: (0, 0)),
            ],
            out_specs=pl.BlockSpec((block_n, C, K), lambda n: (n, 0, 0)),
        ),
        # TODO(synk): confirm via xprof that the "parallel" batch axis really
        # lands one step per TensorCore on v7x; else use pltpu.CORE_PARALLEL.
        compiler_params=pltpu.CompilerParams(
            dimension_semantics=("parallel",),
            vmem_limit_bytes=vmem_limit),
    )(x_ncp, w, b2, cent_t)

    # (N, C, K) -> (N, K, C) -> (N, K*C): ~4 KiB/sample reorder in XLA, cheap
    # relative to the 128 KiB/sample feature read the kernel performs.
    return out[:N].transpose(0, 2, 1).reshape(N, K * C)


def ghost_vlad_reference(x, conv_w, conv_b, centroids, K):
    """Pure-JAX mirror of the PyTorch forward for verification."""
    N, C, H, W = x.shape
    norm = jnp.sqrt(jnp.sum(x * x, axis=1, keepdims=True))
    xn = x / jnp.maximum(norm, EPS)
    logits = jnp.einsum('nchw,kc->nkhw', xn, conv_w) + conv_b[None, :, None, None]
    sa = jax.nn.softmax(logits.reshape(N, -1, H * W), axis=1)[:, :K, :]
    xf = xn.reshape(N, C, H * W)
    vlad = (jnp.einsum('nkp,ncp->nkc', sa, xf)
            - jnp.sum(sa, axis=2)[:, :, None] * centroids[None])
    vlad = vlad / jnp.maximum(
        jnp.sqrt(jnp.sum(vlad * vlad, axis=2, keepdims=True)), EPS)
    vlad = vlad.reshape(N, -1)
    vlad = vlad / jnp.maximum(
        jnp.sqrt(jnp.sum(vlad * vlad, axis=1, keepdims=True)), EPS)
    return vlad


if __name__ == "__main__":
    # Module hyperparameters (dim must equal the channel count).
    K, G, Df = 8, 1, 128
    N, H, W = 4, 16, 16

    key = jax.random.PRNGKey(0)
    k_x, k_w, k_b, k_c = jax.random.split(key, 4)

    x = jax.random.normal(k_x, (N, Df, H, W), dtype=jnp.float32)
    conv_w = jax.random.normal(k_w, (K + G, Df), dtype=jnp.float32) * 0.1
    conv_b = jax.random.normal(k_b, (K + G,), dtype=jnp.float32) * 0.1
    centroids = jax.random.uniform(k_c, (K, Df), dtype=jnp.float32)

    out = jax.block_until_ready(
        ghost_vlad_forward(x, conv_w, conv_b, centroids, K))
    ref = jax.block_until_ready(
        ghost_vlad_reference(x, conv_w, conv_b, centroids, K))

    assert out.shape == (N, K * Df), out.shape
    assert jnp.all(jnp.isfinite(out))
    assert jnp.allclose(out, ref, rtol=1e-4, atol=1e-4), \
        f"max abs err {jnp.max(jnp.abs(out - ref))}"

    # Exercise the batch-padding path (odd N, multi-step grid, forced block_n).
    out_odd = jax.block_until_ready(
        ghost_vlad_forward(x[:3], conv_w, conv_b, centroids, K, block_n=2))
    assert out_odd.shape == (3, K * Df)
    assert jnp.allclose(out_odd, ref[:3], rtol=1e-4, atol=1e-4), \
        f"max abs err (padded) {jnp.max(jnp.abs(out_odd - ref[:3]))}"

    print("KERNEL_OK")
</pallas_src>

<mosaic_0001>
module attributes {stable_mosaic.version = 11 : i64} {
  func.func @ghostvlad_kernel(%arg0: i32, %arg1: memref<4x128x256xf32, #tpu.memory_space<vmem>>, %arg2: memref<9x128xf32, #tpu.memory_space<vmem>>, %arg3: memref<9x1xf32, #tpu.memory_space<vmem>>, %arg4: memref<128x8xf32, #tpu.memory_space<vmem>>, %arg5: memref<4x128x8xf32, #tpu.memory_space<vmem>>) attributes {dimension_semantics = [#tpu.dimension_semantics<parallel>], iteration_bounds = array<i64: 1>, scalar_prefetch = 0 : i64, scratch_operands = 0 : i64, tpu.core_type = #tpu.core_type<tc>, window_params = [{transform_indices = @transform_0, window_bounds = array<i64: 4, 128, 256>}, {pipeline_mode = #tpu.pipeline_mode<synchronous>, transform_indices = @transform_1, window_bounds = array<i64: 9, 128>}, {pipeline_mode = #tpu.pipeline_mode<synchronous>, transform_indices = @transform_2, window_bounds = array<i64: 9, 1>}, {pipeline_mode = #tpu.pipeline_mode<synchronous>, transform_indices = @transform_3, window_bounds = array<i64: 128, 8>}, {transform_indices = @transform_4, window_bounds = array<i64: 4, 128, 8>}]} {
    %c0 = arith.constant 0 : index
    %c0_0 = arith.constant 0 : index
    %0 = vector.load %arg2[%c0, %c0_0] : memref<9x128xf32, #tpu.memory_space<vmem>>, vector<9x128xf32>
    %c0_1 = arith.constant 0 : index
    %c0_2 = arith.constant 0 : index
    %1 = vector.load %arg4[%c0_1, %c0_2] : memref<128x8xf32, #tpu.memory_space<vmem>>, vector<128x8xf32>
    %c0_3 = arith.constant 0 : index
    %c0_4 = arith.constant 0 : index
    %2 = vector.load %arg3[%c0_3, %c0_4] : memref<9x1xf32, #tpu.memory_space<vmem>>, vector<9x1xf32>
    %3 = vector.shape_cast %2 : vector<9x1xf32> to vector<9x1xf32>
    %4 = vector.broadcast %3 : vector<9x1xf32> to vector<9x256xf32>
    %cst = arith.constant 1.000000e+00 : f32
    %5 = vector.broadcast %cst : f32 to vector<8x256xf32>
    %c0_i32 = arith.constant 0 : i32
    %6 = arith.index_cast %c0_i32 : i32 to index
    %c0_5 = arith.constant 0 : index
    %c0_6 = arith.constant 0 : index
    %7 = vector.load %arg1[%6, %c0_5, %c0_6] : memref<4x128x256xf32, #tpu.memory_space<vmem>>, vector<1x128x256xf32>
    %8 = vector.shape_cast %7 : vector<1x128x256xf32> to vector<128x256xf32>
    %9 = arith.mulf %8, %8 : vector<128x256xf32>
    %cst_7 = arith.constant dense<0.000000e+00> : vector<256xf32>
    %10 = vector.multi_reduction <add>, %9, %cst_7 [0] : vector<128x256xf32> to vector<256xf32>
    %11 = vector.shape_cast %10 : vector<256xf32> to vector<1x256xf32>
    %cst_8 = arith.constant 1.000000e-24 : f32
    %12 = vector.broadcast %cst_8 : f32 to vector<1x256xf32>
    %13 = arith.maximumf %11, %12 : vector<1x256xf32>
    %14 = math.rsqrt %13 : vector<1x256xf32>
    %15 = vector.broadcast %14 : vector<1x256xf32> to vector<128x256xf32>
    %16 = arith.mulf %8, %15 : vector<128x256xf32>
    %cst_9 = arith.constant dense<0.000000e+00> : vector<9x256xf32>
    %17 = tpu.matmul %0, %16, %cst_9 {dimension_numbers = #tpu.dot_dimension_numbers<[1], [0], [0], [1], [0, 0, 1, 1], [], []>} : vector<9x128xf32>, vector<128x256xf32>, vector<9x256xf32> -> vector<9x256xf32>
    %18 = arith.addf %17, %4 : vector<9x256xf32>
    %cst_10 = arith.constant dense<0xFF800000> : vector<256xf32>
    %19 = vector.multi_reduction <maximumf>, %18, %cst_10 [0] : vector<9x256xf32> to vector<256xf32>
    %20 = vector.shape_cast %19 : vector<256xf32> to vector<1x256xf32>
    %21 = vector.broadcast %20 : vector<1x256xf32> to vector<9x256xf32>
    %22 = arith.subf %18, %21 : vector<9x256xf32>
    %23 = math.exp %22 : vector<9x256xf32>
    %cst_11 = arith.constant dense<0.000000e+00> : vector<256xf32>
    %24 = vector.multi_reduction <add>, %23, %cst_11 [0] : vector<9x256xf32> to vector<256xf32>
    %25 = vector.shape_cast %24 : vector<256xf32> to vector<1x256xf32>
    %cst_12 = arith.constant 1.000000e+00 : f32
    %26 = vector.broadcast %cst_12 : f32 to vector<1x256xf32>
    %27 = arith.divf %26, %25 : vector<1x256xf32>
    %28 = vector.extract_strided_slice %23 {offsets = [0, 0], sizes = [8, 256], strides = [1, 1]} : vector<9x256xf32> to vector<8x256xf32>
    %29 = vector.broadcast %27 : vector<1x256xf32> to vector<8x256xf32>
    %30 = arith.mulf %28, %29 : vector<8x256xf32>
    %cst_13 = arith.constant dense<0.000000e+00> : vector<128x8xf32>
    %31 = tpu.matmul %16, %30, %cst_13 {dimension_numbers = #tpu.dot_dimension_numbers<[1], [1], [0], [0], [0, 0, 1, 0], [], []>} : vector<128x256xf32>, vector<8x256xf32>, vector<128x8xf32> -> vector<128x8xf32>
    %cst_14 = arith.constant dense<0.000000e+00> : vector<8x8xf32>
    %32 = tpu.matmul %5, %30, %cst_14 {dimension_numbers = #tpu.dot_dimension_numbers<[1], [1], [0], [0], [0, 0, 1, 0], [], []>} : vector<8x256xf32>, vector<8x256xf32>, vector<8x8xf32> -> vector<8x8xf32>
    %33 = vector.extract_strided_slice %32 {offsets = [0, 0], sizes = [1, 8], strides = [1, 1]} : vector<8x8xf32> to vector<1x8xf32>
    %34 = vector.broadcast %33 : vector<1x8xf32> to vector<128x8xf32>
    %35 = arith.mulf %34, %1 : vector<128x8xf32>
    %36 = arith.subf %31, %35 : vector<128x8xf32>
    %37 = arith.mulf %36, %36 : vector<128x8xf32>
    %cst_15 = arith.constant dense<0.000000e+00> : vector<8xf32>
    %38 = vector.multi_reduction <add>, %37, %cst_15 [0] : vector<128x8xf32> to vector<8xf32>
    %39 = vector.shape_cast %38 : vector<8xf32> to vector<1x8xf32>
    %cst_16 = arith.constant 1.000000e-24 : f32
    %40 = vector.broadcast %cst_16 : f32 to vector<1x8xf32>
    %41 = arith.maximumf %39, %40 : vector<1x8xf32>
    %42 = math.rsqrt %41 : vector<1x8xf32>
    %43 = vector.broadcast %42 : vector<1x8xf32> to vector<128x8xf32>
    %44 = arith.mulf %36, %43 : vector<128x8xf32>
    %45 = arith.mulf %44, %44 : vector<128x8xf32>
    %cst_17 = arith.constant dense<0.000000e+00> : vector<8xf32>
    %46 = vector.multi_reduction <add>, %45, %cst_17 [0] : vector<128x8xf32> to vector<8xf32>
    %47 = vector.shape_cast %46 : vector<8xf32> to vector<1x8xf32>
    %cst_18 = arith.constant dense<0.000000e+00> : vector<1xf32>
    %48 = vector.multi_reduction <add>, %47, %cst_18 [1] : vector<1x8xf32> to vector<1xf32>
    %49 = vector.shape_cast %48 : vector<1xf32> to vector<1x1xf32>
    %cst_19 = arith.constant 1.000000e-24 : f32
    %50 = vector.broadcast %cst_19 : f32 to vector<1x1xf32>
    %51 = arith.maximumf %49, %50 : vector<1x1xf32>
    %52 = math.rsqrt %51 : vector<1x1xf32>
    %53 = vector.broadcast %52 : vector<1x1xf32> to vector<128x8xf32>
    %54 = arith.mulf %44, %53 : vector<128x8xf32>
    %55 = arith.index_cast %c0_i32 : i32 to index
    %c0_20 = arith.constant 0 : index
    %c0_21 = arith.constant 0 : index
    %56 = vector.load %arg5[%55, %c0_20, %c0_21] : memref<4x128x8xf32, #tpu.memory_space<vmem>>, vector<1x128x8xf32>
    %57 = vector.shape_cast %56 : vector<1x128x8xf32> to vector<128x8xf32>
    %58 = vector.shape_cast %54 : vector<128x8xf32> to vector<1x128x8xf32>
    tpu.vector_store %arg5[%55, %c0_20, %c0_21], %58 {strides = array<i32>} : memref<4x128x8xf32, #tpu.memory_space<vmem>>, vector<1x128x8xf32>,
    %c1_i32 = arith.constant 1 : i32
    %59 = arith.index_cast %c1_i32 : i32 to index
    %c0_22 = arith.constant 0 : index
    %c0_23 = arith.constant 0 : index
    %60 = vector.load %arg1[%59, %c0_22, %c0_23] : memref<4x128x256xf32, #tpu.memory_space<vmem>>, vector<1x128x256xf32>
    %61 = vector.shape_cast %60 : vector<1x128x256xf32> to vector<128x256xf32>
    %62 = arith.mulf %61, %61 : vector<128x256xf32>
    %cst_24 = arith.constant dense<0.000000e+00> : vector<256xf32>
    %63 = vector.multi_reduction <add>, %62, %cst_24 [0] : vector<128x256xf32> to vector<256xf32>
    %64 = vector.shape_cast %63 : vector<256xf32> to vector<1x256xf32>
    %cst_25 = arith.constant 1.000000e-24 : f32
    %65 = vector.broadcast %cst_25 : f32 to vector<1x256xf32>
    %66 = arith.maximumf %64, %65 : vector<1x256xf32>
    %67 = math.rsqrt %66 : vector<1x256xf32>
    %68 = vector.broadcast %67 : vector<1x256xf32> to vector<128x256xf32>
    %69 = arith.mulf %61, %68 : vector<128x256xf32>
    %cst_26 = arith.constant dense<0.000000e+00> : vector<9x256xf32>
    %70 = tpu.matmul %0, %69, %cst_26 {dimension_numbers = #tpu.dot_dimension_numbers<[1], [0], [0], [1], [0, 0, 1, 1], [], []>} : vector<9x128xf32>, vector<128x256xf32>, vector<9x256xf32> -> vector<9x256xf32>
    %71 = arith.addf %70, %4 : vector<9x256xf32>
    %cst_27 = arith.constant dense<0xFF800000> : vector<256xf32>
    %72 = vector.multi_reduction <maximumf>, %71, %cst_27 [0] : vector<9x256xf32> to vector<256xf32>
    %73 = vector.shape_cast %72 : vector<256xf32> to vector<1x256xf32>
    %74 = vector.broadcast %73 : vector<1x256xf32> to vector<9x256xf32>
    %75 = arith.subf %71, %74 : vector<9x256xf32>
    %76 = math.exp %75 : vector<9x256xf32>
    %cst_28 = arith.constant dense<0.000000e+00> : vector<256xf32>
    %77 = vector.multi_reduction <add>, %76, %cst_28 [0] : vector<9x256xf32> to vector<256xf32>
    %78 = vector.shape_cast %77 : vector<256xf32> to vector<1x256xf32>
    %cst_29 = arith.constant 1.000000e+00 : f32
    %79 = vector.broadcast %cst_29 : f32 to vector<1x256xf32>
    %80 = arith.divf %79, %78 : vector<1x256xf32>
    %81 = vector.extract_strided_slice %76 {offsets = [0, 0], sizes = [8, 256], strides = [1, 1]} : vector<9x256xf32> to vector<8x256xf32>
    %82 = vector.broadcast %80 : vector<1x256xf32> to vector<8x256xf32>
    %83 = arith.mulf %81, %82 : vector<8x256xf32>
    %cst_30 = arith.constant dense<0.000000e+00> : vector<128x8xf32>
    %84 = tpu.matmul %69, %83, %cst_30 {dimension_numbers = #tpu.dot_dimension_numbers<[1], [1], [0], [0], [0, 0, 1, 0], [], []>} : vector<128x256xf32>, vector<8x256xf32>, vector<128x8xf32> -> vector<128x8xf32>
    %cst_31 = arith.constant dense<0.000000e+00> : vector<8x8xf32>
    %85 = tpu.matmul %5, %83, %cst_31 {dimension_numbers = #tpu.dot_dimension_numbers<[1], [1], [0], [0], [0, 0, 1, 0], [], []>} : vector<8x256xf32>, vector<8x256xf32>, vector<8x8xf32> -> vector<8x8xf32>
    %86 = vector.extract_strided_slice %85 {offsets = [0, 0], sizes = [1, 8], strides = [1, 1]} : vector<8x8xf32> to vector<1x8xf32>
    %87 = vector.broadcast %86 : vector<1x8xf32> to vector<128x8xf32>
    %88 = arith.mulf %87, %1 : vector<128x8xf32>
    %89 = arith.subf %84, %88 : vector<128x8xf32>
    %90 = arith.mulf %89, %89 : vector<128x8xf32>
    %cst_32 = arith.constant dense<0.000000e+00> : vector<8xf32>
    %91 = vector.multi_reduction <add>, %90, %cst_32 [0] : vector<128x8xf32> to vector<8xf32>
    %92 = vector.shape_cast %91 : vector<8xf32> to vector<1x8xf32>
    %cst_33 = arith.constant 1.000000e-24 : f32
    %93 = vector.broadcast %cst_33 : f32 to vector<1x8xf32>
    %94 = arith.maximumf %92, %93 : vector<1x8xf32>
    %95 = math.rsqrt %94 : vector<1x8xf32>
    %96 = vector.broadcast %95 : vector<1x8xf32> to vector<128x8xf32>
    %97 = arith.mulf %89, %96 : vector<128x8xf32>
    %98 = arith.mulf %97, %97 : vector<128x8xf32>
    %cst_34 = arith.constant dense<0.000000e+00> : vector<8xf32>
    %99 = vector.multi_reduction <add>, %98, %cst_34 [0] : vector<128x8xf32> to vector<8xf32>
    %100 = vector.shape_cast %99 : vector<8xf32> to vector<1x8xf32>
    %cst_35 = arith.constant dense<0.000000e+00> : vector<1xf32>
    %101 = vector.multi_reduction <add>, %100, %cst_35 [1] : vector<1x8xf32> to vector<1xf32>
    %102 = vector.shape_cast %101 : vector<1xf32> to vector<1x1xf32>
    %cst_36 = arith.constant 1.000000e-24 : f32
    %103 = vector.broadcast %cst_36 : f32 to vector<1x1xf32>
    %104 = arith.maximumf %102, %103 : vector<1x1xf32>
    %105 = math.rsqrt %104 : vector<1x1xf32>
    %106 = vector.broadcast %105 : vector<1x1xf32> to vector<128x8xf32>
    %107 = arith.mulf %97, %106 : vector<128x8xf32>
    %108 = arith.index_cast %c1_i32 : i32 to index
    %c0_37 = arith.constant 0 : index
    %c0_38 = arith.constant 0 : index
    %109 = vector.load %arg5[%108, %c0_37, %c0_38] : memref<4x128x8xf32, #tpu.memory_space<vmem>>, vector<1x128x8xf32>
    %110 = vector.shape_cast %109 : vector<1x128x8xf32> to vector<128x8xf32>
    %111 = vector.shape_cast %107 : vector<128x8xf32> to vector<1x128x8xf32>
    tpu.vector_store %arg5[%108, %c0_37, %c0_38], %111 {strides = array<i32>} : memref<4x128x8xf32, #tpu.memory_space<vmem>>, vector<1x128x8xf32>,
    %c2_i32 = arith.constant 2 : i32
    %112 = arith.index_cast %c2_i32 : i32 to index
    %c0_39 = arith.constant 0 : index
    %c0_40 = arith.constant 0 : index
    %113 = vector.load %arg1[%112, %c0_39, %c0_40] : memref<4x128x256xf32, #tpu.memory_space<vmem>>, vector<1x128x256xf32>
    %114 = vector.shape_cast %113 : vector<1x128x256xf32> to vector<128x256xf32>
    %115 = arith.mulf %114, %114 : vector<128x256xf32>
    %cst_41 = arith.constant dense<0.000000e+00> : vector<256xf32>
    %116 = vector.multi_reduction <add>, %115, %cst_41 [0] : vector<128x256xf32> to vector<256xf32>
    %117 = vector.shape_cast %116 : vector<256xf32> to vector<1x256xf32>
    %cst_42 = arith.constant 1.000000e-24 : f32
    %118 = vector.broadcast %cst_42 : f32 to vector<1x256xf32>
    %119 = arith.maximumf %117, %118 : vector<1x256xf32>
    %120 = math.rsqrt %119 : vector<1x256xf32>
    %121 = vector.broadcast %120 : vector<1x256xf32> to vector<128x256xf32>
    %122 = arith.mulf %114, %121 : vector<128x256xf32>
    %cst_43 = arith.constant dense<0.000000e+00> : vector<9x256xf32>
    %123 = tpu.matmul %0, %122, %cst_43 {dimension_numbers = #tpu.dot_dimension_numbers<[1], [0], [0], [1], [0, 0, 1, 1], [], []>} : vector<9x128xf32>, vector<128x256xf32>, vector<9x256xf32> -> vector<9x256xf32>
    %124 = arith.addf %123, %4 : vector<9x256xf32>
    %cst_44 = arith.constant dense<0xFF800000> : vector<256xf32>
    %125 = vector.multi_reduction <maximumf>, %124, %cst_44 [0] : vector<9x256xf32> to vector<256xf32>
    %126 = vector.shape_cast %125 : vector<256xf32> to vector<1x256xf32>
    %127 = vector.broadcast %126 : vector<1x256xf32> to vector<9x256xf32>
    %128 = arith.subf %124, %127 : vector<9x256xf32>
    %129 = math.exp %128 : vector<9x256xf32>
    %cst_45 = arith.constant dense<0.000000e+00> : vector<256xf32>
    %130 = vector.multi_reduction <add>, %129, %cst_45 [0] : vector<9x256xf32> to vector<256xf32>
    %131 = vector.shape_cast %130 : vector<256xf32> to vector<1x256xf32>
    %cst_46 = arith.constant 1.000000e+00 : f32
    %132 = vector.broadcast %cst_46 : f32 to vector<1x256xf32>
    %133 = arith.divf %132, %131 : vector<1x256xf32>
    %134 = vector.extract_strided_slice %129 {offsets = [0, 0], sizes = [8, 256], strides = [1, 1]} : vector<9x256xf32> to vector<8x256xf32>
    %135 = vector.broadcast %133 : vector<1x256xf32> to vector<8x256xf32>
    %136 = arith.mulf %134, %135 : vector<8x256xf32>
    %cst_47 = arith.constant dense<0.000000e+00> : vector<128x8xf32>
    %137 = tpu.matmul %122, %136, %cst_47 {dimension_numbers = #tpu.dot_dimension_numbers<[1], [1], [0], [0], [0, 0, 1, 0], [], []>} : vector<128x256xf32>, vector<8x256xf32>, vector<128x8xf32> -> vector<128x8xf32>
    %cst_48 = arith.constant dense<0.000000e+00> : vector<8x8xf32>
    %138 = tpu.matmul %5, %136, %cst_48 {dimension_numbers = #tpu.dot_dimension_numbers<[1], [1], [0], [0], [0, 0, 1, 0], [], []>} : vector<8x256xf32>, vector<8x256xf32>, vector<8x8xf32> -> vector<8x8xf32>
    %139 = vector.extract_strided_slice %138 {offsets = [0, 0], sizes = [1, 8], strides = [1, 1]} : vector<8x8xf32> to vector<1x8xf32>
    %140 = vector.broadcast %139 : vector<1x8xf32> to vector<128x8xf32>
    %141 = arith.mulf %140, %1 : vector<128x8xf32>
    %142 = arith.subf %137, %141 : vector<128x8xf32>
    %143 = arith.mulf %142, %142 : vector<128x8xf32>
    %cst_49 = arith.constant dense<0.000000e+00> : vector<8xf32>
    %144 = vector.multi_reduction <add>, %143, %cst_49 [0] : vector<128x8xf32> to vector<8xf32>
    %145 = vector.shape_cast %144 : vector<8xf32> to vector<1x8xf32>
    %cst_50 = arith.constant 1.000000e-24 : f32
    %146 = vector.broadcast %cst_50 : f32 to vector<1x8xf32>
    %147 = arith.maximumf %145, %146 : vector<1x8xf32>
    %148 = math.rsqrt %147 : vector<1x8xf32>
    %149 = vector.broadcast %148 : vector<1x8xf32> to vector<128x8xf32>
    %150 = arith.mulf %142, %149 : vector<128x8xf32>
    %151 = arith.mulf %150, %150 : vector<128x8xf32>
    %cst_51 = arith.constant dense<0.000000e+00> : vector<8xf32>
    %152 = vector.multi_reduction <add>, %151, %cst_51 [0] : vector<128x8xf32> to vector<8xf32>
    %153 = vector.shape_cast %152 : vector<8xf32> to vector<1x8xf32>
    %cst_52 = arith.constant dense<0.000000e+00> : vector<1xf32>
    %154 = vector.multi_reduction <add>, %153, %cst_52 [1] : vector<1x8xf32> to vector<1xf32>
    %155 = vector.shape_cast %154 : vector<1xf32> to vector<1x1xf32>
    %cst_53 = arith.constant 1.000000e-24 : f32
    %156 = vector.broadcast %cst_53 : f32 to vector<1x1xf32>
    %157 = arith.maximumf %155, %156 : vector<1x1xf32>
    %158 = math.rsqrt %157 : vector<1x1xf32>
    %159 = vector.broadcast %158 : vector<1x1xf32> to vector<128x8xf32>
    %160 = arith.mulf %150, %159 : vector<128x8xf32>
    %161 = arith.index_cast %c2_i32 : i32 to index
    %c0_54 = arith.constant 0 : index
    %c0_55 = arith.constant 0 : index
    %162 = vector.load %arg5[%161, %c0_54, %c0_55] : memref<4x128x8xf32, #tpu.memory_space<vmem>>, vector<1x128x8xf32>
    %163 = vector.shape_cast %162 : vector<1x128x8xf32> to vector<128x8xf32>
    %164 = vector.shape_cast %160 : vector<128x8xf32> to vector<1x128x8xf32>
    tpu.vector_store %arg5[%161, %c0_54, %c0_55], %164 {strides = array<i32>} : memref<4x128x8xf32, #tpu.memory_space<vmem>>, vector<1x128x8xf32>,
    %c3_i32 = arith.constant 3 : i32
    %165 = arith.index_cast %c3_i32 : i32 to index
    %c0_56 = arith.constant 0 : index
    %c0_57 = arith.constant 0 : index
    %166 = vector.load %arg1[%165, %c0_56, %c0_57] : memref<4x128x256xf32, #tpu.memory_space<vmem>>, vector<1x128x256xf32>
    %167 = vector.shape_cast %166 : vector<1x128x256xf32> to vector<128x256xf32>
    %168 = arith.mulf %167, %167 : vector<128x256xf32>
    %cst_58 = arith.constant dense<0.000000e+00> : vector<256xf32>
    %169 = vector.multi_reduction <add>, %168, %cst_58 [0] : vector<128x256xf32> to vector<256xf32>
    %170 = vector.shape_cast %169 : vector<256xf32> to vector<1x256xf32>
    %cst_59 = arith.constant 1.000000e-24 : f32
    %171 = vector.broadcast %cst_59 : f32 to vector<1x256xf32>
    %172 = arith.maximumf %170, %171 : vector<1x256xf32>
    %173 = math.rsqrt %172 : vector<1x256xf32>
    %174 = vector.broadcast %173 : vector<1x256xf32> to vector<128x256xf32>
    %175 = arith.mulf %167, %174 : vector<128x256xf32>
    %cst_60 = arith.constant dense<0.000000e+00> : vector<9x256xf32>
    %176 = tpu.matmul %0, %175, %cst_60 {dimension_numbers = #tpu.dot_dimension_numbers<[1], [0], [0], [1], [0, 0, 1, 1], [], []>} : vector<9x128xf32>, vector<128x256xf32>, vector<9x256xf32> -> vector<9x256xf32>
    %177 = arith.addf %176, %4 : vector<9x256xf32>
    %cst_61 = arith.constant dense<0xFF800000> : vector<256xf32>
    %178 = vector.multi_reduction <maximumf>, %177, %cst_61 [0] : vector<9x256xf32> to vector<256xf32>
    %179 = vector.shape_cast %178 : vector<256xf32> to vector<1x256xf32>
    %180 = vector.broadcast %179 : vector<1x256xf32> to vector<9x256xf32>
    %181 = arith.subf %177, %180 : vector<9x256xf32>
    %182 = math.exp %181 : vector<9x256xf32>
    %cst_62 = arith.constant dense<0.000000e+00> : vector<256xf32>
    %183 = vector.multi_reduction <add>, %182, %cst_62 [0] : vector<9x256xf32> to vector<256xf32>
    %184 = vector.shape_cast %183 : vector<256xf32> to vector<1x256xf32>
    %cst_63 = arith.constant 1.000000e+00 : f32
    %185 = vector.broadcast %cst_63 : f32 to vector<1x256xf32>
    %186 = arith.divf %185, %184 : vector<1x256xf32>
    %187 = vector.extract_strided_slice %182 {offsets = [0, 0], sizes = [8, 256], strides = [1, 1]} : vector<9x256xf32> to vector<8x256xf32>
    %188 = vector.broadcast %186 : vector<1x256xf32> to vector<8x256xf32>
    %189 = arith.mulf %187, %188 : vector<8x256xf32>
    %cst_64 = arith.constant dense<0.000000e+00> : vector<128x8xf32>
    %190 = tpu.matmul %175, %189, %cst_64 {dimension_numbers = #tpu.dot_dimension_numbers<[1], [1], [0], [0], [0, 0, 1, 0], [], []>} : vector<128x256xf32>, vector<8x256xf32>, vector<128x8xf32> -> vector<128x8xf32>
    %cst_65 = arith.constant dense<0.000000e+00> : vector<8x8xf32>
    %191 = tpu.matmul %5, %189, %cst_65 {dimension_numbers = #tpu.dot_dimension_numbers<[1], [1], [0], [0], [0, 0, 1, 0], [], []>} : vector<8x256xf32>, vector<8x256xf32>, vector<8x8xf32> -> vector<8x8xf32>
    %192 = vector.extract_strided_slice %191 {offsets = [0, 0], sizes = [1, 8], strides = [1, 1]} : vector<8x8xf32> to vector<1x8xf32>
    %193 = vector.broadcast %192 : vector<1x8xf32> to vector<128x8xf32>
    %194 = arith.mulf %193, %1 : vector<128x8xf32>
    %195 = arith.subf %190, %194 : vector<128x8xf32>
    %196 = arith.mulf %195, %195 : vector<128x8xf32>
    %cst_66 = arith.constant dense<0.000000e+00> : vector<8xf32>
    %197 = vector.multi_reduction <add>, %196, %cst_66 [0] : vector<128x8xf32> to vector<8xf32>
    %198 = vector.shape_cast %197 : vector<8xf32> to vector<1x8xf32>
    %cst_67 = arith.constant 1.000000e-24 : f32
    %199 = vector.broadcast %cst_67 : f32 to vector<1x8xf32>
    %200 = arith.maximumf %198, %199 : vector<1x8xf32>
    %201 = math.rsqrt %200 : vector<1x8xf32>
    %202 = vector.broadcast %201 : vector<1x8xf32> to vector<128x8xf32>
    %203 = arith.mulf %195, %202 : vector<128x8xf32>
    %204 = arith.mulf %203, %203 : vector<128x8xf32>
    %cst_68 = arith.constant dense<0.000000e+00> : vector<8xf32>
    %205 = vector.multi_reduction <add>, %204, %cst_68 [0] : vector<128x8xf32> to vector<8xf32>
    %206 = vector.shape_cast %205 : vector<8xf32> to vector<1x8xf32>
    %cst_69 = arith.constant dense<0.000000e+00> : vector<1xf32>
    %207 = vector.multi_reduction <add>, %206, %cst_69 [1] : vector<1x8xf32> to vector<1xf32>
    %208 = vector.shape_cast %207 : vector<1xf32> to vector<1x1xf32>
    %cst_70 = arith.constant 1.000000e-24 : f32
    %209 = vector.broadcast %cst_70 : f32 to vector<1x1xf32>
    %210 = arith.maximumf %208, %209 : vector<1x1xf32>
    %211 = math.rsqrt %210 : vector<1x1xf32>
    %212 = vector.broadcast %211 : vector<1x1xf32> to vector<128x8xf32>
    %213 = arith.mulf %203, %212 : vector<128x8xf32>
    %214 = arith.index_cast %c3_i32 : i32 to index
    %c0_71 = arith.constant 0 : index
    %c0_72 = arith.constant 0 : index
    %215 = vector.load %arg5[%214, %c0_71, %c0_72] : memref<4x128x8xf32, #tpu.memory_space<vmem>>, vector<1x128x8xf32>
    %216 = vector.shape_cast %215 : vector<1x128x8xf32> to vector<128x8xf32>
    %217 = vector.shape_cast %213 : vector<128x8xf32> to vector<1x128x8xf32>
    tpu.vector_store %arg5[%214, %c0_71, %c0_72], %217 {strides = array<i32>} : memref<4x128x8xf32, #tpu.memory_space<vmem>>, vector<1x128x8xf32>,
    %c4_i32 = arith.constant 4 : i32
    return
  }
  func.func @transform_0(%arg0: i32) -> (i32, i32, i32) {
    %c0_i32 = arith.constant 0 : i32
    %c0_i32_0 = arith.constant 0 : i32
    %c0_i32_1 = arith.constant 0 : i32
    return %arg0, %c0_i32, %c0_i32_0 : i32, i32, i32
  }
  func.func @transform_1(%arg0: i32) -> (i32, i32) {
    %c0_i32 = arith.constant 0 : i32
    %c0_i32_0 = arith.constant 0 : i32
    %c0_i32_1 = arith.constant 0 : i32
    return %c0_i32, %c0_i32_0 : i32, i32
  }
  func.func @transform_2(%arg0: i32) -> (i32, i32) {
    %c0_i32 = arith.constant 0 : i32
    %c0_i32_0 = arith.constant 0 : i32
    %c0_i32_1 = arith.constant 0 : i32
    return %c0_i32, %c0_i32_0 : i32, i32
  }
  func.func @transform_3(%arg0: i32) -> (i32, i32) {
    %c0_i32 = arith.constant 0 : i32
    %c0_i32_0 = arith.constant 0 : i32
    %c0_i32_1 = arith.constant 0 : i32
    return %c0_i32, %c0_i32_0 : i32, i32
  }
  func.func @transform_4(%arg0: i32) -> (i32, i32, i32) {
    %c0_i32 = arith.constant 0 : i32
    %c0_i32_0 = arith.constant 0 : i32
    %c0_i32_1 = arith.constant 0 : i32
    return %arg0, %c0_i32, %c0_i32_0 : i32, i32, i32
  }
}

</mosaic_0001>

<llo_original>
// kernel: tpu_custom_call.1
$region0: #{tpu_custom_call.1}
  #allocation0 [shape = 'u32[]', space=smem, size = 0x4, offset = 0x4, fixed_abs, tag = 'smem constant byte address 0x4 - core index']
  #allocation1 [shape = 'u32[144,128]{1,0:T(1,128)}', space=vmem, size = 0x12000, scoped, tag = 'internal scratch']
  %s0 = inlined_call_operand.hbm [shape: f32[4,128,256], index: 0, kind: input, shape index: {}]
  %s1 = inlined_call_operand.vmem [shape: f32[9,128], index: 1, kind: input, shape index: {}]
  %s2 = inlined_call_operand.vmem [shape: f32[9,1], index: 2, kind: input, shape index: {}]
  %s3 = inlined_call_operand.vmem [shape: f32[128,8], index: 3, kind: input, shape index: {}]
  %s4 = inlined_call_operand.vmem [shape: f32[4,128,8], index: 4, kind: output, shape index: {}]
  %s5 = sld [smem:[#allocation0]]
  $region30: #{tpu_custom_call.1} parent=0
    _
  %s7 = ssub.s32 1, %s5
  %s8 = scalar_select 0, %s7, %s5
  $region1: #{tpu_custom_call.1} parent=0
    #allocation2 [shape = 'u8[524288]{0}', space=vmem, size = 0x80000, scoped, tag = 'input window, operand 0, single buffered']
    #allocation3 [shape = 's32[1]{0}', space=sflag, size = 0x4, scoped, tag = 'scoped memory for tpu_custom_call.1']
    %9 = vsyncpa [#allocation3], 0
    // Predicated region
    $region2: #{tpu_custom_call.1} parent=1 // pred_check
      _
    $region3: #{tpu_custom_call.1} parent=1 // pred_check_branch
      %11 = sbr.rel (0) target = $region5
    $region4: #{tpu_custom_call.1} parent=1 // pred_region
      %s13 = ssub.s32 16384, 16384
      %14 = vsyncadd [#allocation3], %s13
      %s15 = sshll.u32 [#allocation2], 4
      %s16 = int_to_ptr.vmem [resolvable:$true] %s15
      %21 = dma.hbm_to_vmem [thread:$0]  %s0, 16384, %s16, [#allocation3], 256, 256, 16
    $region5: #{tpu_custom_call.1} parent=1 // pred_fallthru
      _
    // Predicated region
    $region6: #{tpu_custom_call.1} parent=1 // pred_check
      _
    $region7: #{tpu_custom_call.1} parent=1 // pred_check_branch
      %23 = sbr.rel (0) target = $region9
    $region8: #{tpu_custom_call.1} parent=1 // pred_region
      _
    $region9: #{tpu_custom_call.1} parent=1 // pred_fallthru
      _
    // Predicated region
    $region10: #{tpu_custom_call.1} parent=1 // pred_check
      _
    $region11: #{tpu_custom_call.1} parent=1 // pred_check_branch
      %25 = sbr.rel (0) target = $region13
    $region12: #{tpu_custom_call.1} parent=1 // pred_region
      _
    $region13: #{tpu_custom_call.1} parent=1 // pred_fallthru
      _
    // Predicated region
    $region14: #{tpu_custom_call.1} parent=1 // pred_check
      _
    $region15: #{tpu_custom_call.1} parent=1 // pred_check_branch
      %27 = sbr.rel (0) target = $region17
    $region16: #{tpu_custom_call.1} parent=1 // pred_region
      _
    $region17: #{tpu_custom_call.1} parent=1 // pred_fallthru
      _
    // Predicated region
    $region18: #{tpu_custom_call.1} parent=1 // pred_check
      _
    $region19: #{tpu_custom_call.1} parent=1 // pred_check_branch
      %29 = sbr.rel (0) target = $region21
    $region20: #{tpu_custom_call.1} parent=1 // pred_region
      %30 = dma.done [#allocation3], 16384
    $region21: #{tpu_custom_call.1} parent=1 // pred_fallthru
      _
    %v31 = vld [vmem:[%s1] sm:$0xff]
    %v32 = vld [vmem:[%s1 + $0x8] sm:$0x1]
    %v33 = vld [vmem:[%s3] sm:$0xff]
    %v34 = vld [vmem:[%s3 + $0x8] sm:$0xff]
    %v35 = vld [vmem:[%s3 + $0x10] sm:$0xff]
    %v36 = vld [vmem:[%s3 + $0x18] sm:$0xff]
    %v37 = vld [vmem:[%s3 + $0x20] sm:$0xff]
    %v38 = vld [vmem:[%s3 + $0x28] sm:$0xff]
    %v39 = vld [vmem:[%s3 + $0x30] sm:$0xff]
    %v40 = vld [vmem:[%s3 + $0x38] sm:$0xff]
    %v41 = vld [vmem:[%s3 + $0x40] sm:$0xff]
    %v42 = vld [vmem:[%s3 + $0x48] sm:$0xff]
    %v43 = vld [vmem:[%s3 + $0x50] sm:$0xff]
    %v44 = vld [vmem:[%s3 + $0x58] sm:$0xff]
    %v45 = vld [vmem:[%s3 + $0x60] sm:$0xff]
    %v46 = vld [vmem:[%s3 + $0x68] sm:$0xff]
    %v47 = vld [vmem:[%s3 + $0x70] sm:$0xff]
    %v48 = vld [vmem:[%s3 + $0x78] sm:$0xff]
    %v49 = vld [vmem:[%s2] sm:$0xff]
    %v50 = vld [vmem:[%s2 + $0x8] sm:$0x1]
    %52 = vset.pattern.permute.xlu0 0
    %53 = vperm.xlu0 %52, %v49
    %v54 = vpop.permute.xlu0 %53
    %57 = vset.pattern.permute.xlu0 0
    %58 = vperm.xlu0 %57, %v50
    %v59 = vpop.permute.xlu0 %58
    %v61 = vld [vmem:[#allocation2] sm:$0xff]
    %v62 = vld [vmem:[#allocation2 + $0x8] sm:$0xff]
    %v63 = vld [vmem:[#allocation2 + $0x10] sm:$0xff]
    %v64 = vld [vmem:[#allocation2 + $0x18] sm:$0xff]
    %v65 = vld [vmem:[#allocation2 + $0x20] sm:$0xff]
    %v66 = vld [vmem:[#allocation2 + $0x28] sm:$0xff]
    %v67 = vld [vmem:[#allocation2 + $0x30] sm:$0xff]
    %v68 = vld [vmem:[#allocation2 + $0x38] sm:$0xff]
    %v69 = vld [vmem:[#allocation2 + $0x40] sm:$0xff]
    %v70 = vld [vmem:[#allocation2 + $0x48] sm:$0xff]
    %v71 = vld [vmem:[#allocation2 + $0x50] sm:$0xff]
    %v72 = vld [vmem:[#allocation2 + $0x58] sm:$0xff]
    %v73 = vld [vmem:[#allocation2 + $0x60] sm:$0xff]
    %v74 = vld [vmem:[#allocation2 + $0x68] sm:$0xff]
    %v75 = vld [vmem:[#allocation2 + $0x70] sm:$0xff]
    %v76 = vld [vmem:[#allocation2 + $0x78] sm:$0xff]
    %v77 = vld [vmem:[#allocation2 + $0x80] sm:$0xff]
    %v78 = vld [vmem:[#allocation2 + $0x88] sm:$0xff]
    %v79 = vld [vmem:[#allocation2 + $0x90] sm:$0xff]
    %v80 = vld [vmem:[#allocation2 + $0x98] sm:$0xff]
    %v81 = vld [vmem:[#allocation2 + $0xa0] sm:$0xff]
    %v82 = vld [vmem:[#allocation2 + $0xa8] sm:$0xff]
    %v83 = vld [vmem:[#allocation2 + $0xb0] sm:$0xff]
    %v84 = vld [vmem:[#allocation2 + $0xb8] sm:$0xff]
    %v85 = vld [vmem:[#allocation2 + $0xc0] sm:$0xff]
    %v86 = vld [vmem:[#allocation2 + $0xc8] sm:$0xff]
    %v87 = vld [vmem:[#allocation2 + $0xd0] sm:$0xff]
    %v88 = vld [vmem:[#allocation2 + $0xd8] sm:$0xff]
    %v89 = vld [vmem:[#allocation2 + $0xe0] sm:$0xff]
    %v90 = vld [vmem:[#allocation2 + $0xe8] sm:$0xff]
    %v91 = vld [vmem:[#allocation2 + $0xf0] sm:$0xff]
    %v92 = vld [vmem:[#allocation2 + $0xf8] sm:$0xff]
    %v93 = vmul.f32 %v61, %v61
    %v94 = vmul.f32 %v62, %v62
    %v95 = vmul.f32 %v63, %v63
    %v96 = vmul.f32 %v64, %v64
    %v97 = vmul.f32 %v65, %v65
    %v98 = vmul.f32 %v66, %v66
    %v99 = vmul.f32 %v67, %v67
    %v100 = vmul.f32 %v68, %v68
    %v101 = vmul.f32 %v69, %v69
    %v102 = vmul.f32 %v70, %v70
    %v103 = vmul.f32 %v71, %v71
    %v104 = vmul.f32 %v72, %v72
    %v105 = vmul.f32 %v73, %v73
    %v106 = vmul.f32 %v74, %v74
    %v107 = vmul.f32 %v75, %v75
    %v108 = vmul.f32 %v76, %v76
    %v109 = vmul.f32 %v77, %v77
    %v110 = vmul.f32 %v78, %v78
    %v111 = vmul.f32 %v79, %v79
    %v112 = vmul.f32 %v80, %v80
    %v113 = vmul.f32 %v81, %v81
    %v114 = vmul.f32 %v82, %v82
    %v115 = vmul.f32 %v83, %v83
    %v116 = vmul.f32 %v84, %v84
    %v117 = vmul.f32 %v85, %v85
    %v118 = vmul.f32 %v86, %v86
    %v119 = vmul.f32 %v87, %v87
    %v120 = vmul.f32 %v88, %v88
    %v121 = vmul.f32 %v89, %v89
    %v122 = vmul.f32 %v90, %v90
    %v123 = vmul.f32 %v91, %v91
    %v124 = vmul.f32 %v92, %v92
    %v125 = vadd.f32 %v93, %v95
    %v126 = vadd.f32 %v125, %v97
    %v127 = vadd.f32 %v126, %v99
    %v128 = vadd.f32 %v127, %v101
    %v129 = vadd.f32 %v128, %v103
    %v130 = vadd.f32 %v129, %v105
    %v131 = vadd.f32 %v130, %v107
    %v132 = vadd.f32 %v131, %v109
    %v133 = vadd.f32 %v132, %v111
    %v134 = vadd.f32 %v133, %v113
    %v135 = vadd.f32 %v134, %v115
    %v136 = vadd.f32 %v135, %v117
    %v137 = vadd.f32 %v136, %v119
    %v138 = vadd.f32 %v137, %v121
    %v139 = vadd.f32 %v138, %v123
    %v140 = vrot.slane %v139, 4
    %v141 = vadd.f32 %v139, %v140
    %v142 = vrot.slane %v141, 2
    %v143 = vadd.f32 %v141, %v142
    %v144 = vrot.slane %v143, 1
    %v145 = vadd.f32 %v143, %v144
    %v146 = vadd.f32 %v94, %v96
    %v147 = vadd.f32 %v146, %v98
    %v148 = vadd.f32 %v147, %v100
    %v149 = vadd.f32 %v148, %v102
    %v150 = vadd.f32 %v149, %v104
    %v151 = vadd.f32 %v150, %v106
    %v152 = vadd.f32 %v151, %v108
    %v153 = vadd.f32 %v152, %v110
    %v154 = vadd.f32 %v153, %v112
    %v155 = vadd.f32 %v154, %v114
    %v156 = vadd.f32 %v155, %v116
    %v157 = vadd.f32 %v156, %v118
    %v158 = vadd.f32 %v157, %v120
    %v159 = vadd.f32 %v158, %v122
    %v160 = vadd.f32 %v159, %v124
    %v161 = vrot.slane %v160, 4
    %v162 = vadd.f32 %v160, %v161
    %v163 = vrot.slane %v162, 2
    %v164 = vadd.f32 %v162, %v163
    %v165 = vrot.slane %v164, 1
    %v166 = vadd.f32 %v164, %v165
    %v167 = vmax.f32 %v145, 1e-24
    %v168 = vmax.f32 %v166, 1e-24
    %v169 = vrsqrt.pop %v167
    %v170 = vrsqrt.pop %v168
    %v171 = vmul.f32 %v61, %v169
    %v172 = vmul.f32 %v62, %v170
    %v173 = vmul.f32 %v63, %v169
    %v174 = vmul.f32 %v64, %v170
    %v175 = vmul.f32 %v65, %v169
    %v176 = vmul.f32 %v66, %v170
    %v177 = vmul.f32 %v67, %v169
    %v178 = vmul.f32 %v68, %v170
    %v179 = vmul.f32 %v69, %v169
    %v180 = vmul.f32 %v70, %v170
    %v181 = vmul.f32 %v71, %v169
    %v182 = vmul.f32 %v72, %v170
    %v183 = vmul.f32 %v73, %v169
    %v184 = vmul.f32 %v74, %v170
    %v185 = vmul.f32 %v75, %v169
    %v186 = vmul.f32 %v76, %v170
    %v187 = vmul.f32 %v77, %v169
    %v188 = vmul.f32 %v78, %v170
    %v189 = vmul.f32 %v79, %v169
    %v190 = vmul.f32 %v80, %v170
    %v191 = vmul.f32 %v81, %v169
    %v192 = vmul.f32 %v82, %v170
    %v193 = vmul.f32 %v83, %v169
    %v194 = vmul.f32 %v84, %v170
    %v195 = vmul.f32 %v85, %v169
    %v196 = vmul.f32 %v86, %v170
    %v197 = vmul.f32 %v87, %v169
    %v198 = vmul.f32 %v88, %v170
    %v199 = vmul.f32 %v89, %v169
    %v200 = vmul.f32 %v90, %v170
    %v201 = vmul.f32 %v91, %v169
    %v202 = vmul.f32 %v92, %v170
    %203 = vmatprep.subr.mxu0 %v202
    %204 = vmatpush1.msra.mxu0 %v201
    %205 = vmatprep.subr.mxu0 %v200
    %206 = vmatpush1.msra.mxu0 %v199
    %207 = vmatprep.subr.mxu0 %v198
    %208 = vmatpush1.msra.mxu0 %v197
    %209 = vmatprep.subr.mxu0 %v196
    %210 = vmatpush1.msra.mxu0 %v195
    %211 = vmatprep.subr.mxu0 %v194
    %212 = vmatpush1.msra.mxu0 %v193
    %213 = vmatprep.subr.mxu0 %v192
    %214 = vmatpush1.msra.mxu0 %v191
    %215 = vmatprep.subr.mxu0 %v190
    %216 = vmatpush1.msra.mxu0 %v189
    %217 = vmatprep.subr.mxu0 %v188
    %218 = vmatpush1.msra.mxu0 %v187
    %219 = vmatprep.subr.mxu0 %v186
    %220 = vmatpush1.msra.mxu0 %v185
    %221 = vmatprep.subr.mxu0 %v184
    %222 = vmatpush1.msra.mxu0 %v183
    %223 = vmatprep.subr.mxu0 %v182
    %224 = vmatpush1.msra.mxu0 %v181
    %225 = vmatprep.subr.mxu0 %v180
    %226 = vmatpush1.msra.mxu0 %v179
    %227 = vmatprep.subr.mxu0 %v178
    %228 = vmatpush1.msra.mxu0 %v177
    %229 = vmatprep.subr.mxu0 %v176
    %230 = vmatpush1.msra.mxu0 %v175
    %231 = vmatprep.subr.mxu0 %v174
    %232 = vmatpush1.msra.mxu0 %v173
    %233 = vmatprep.subr.mxu0 %v172
    %234 = vmatpush1.msra.mxu0 %v171
    %235 = vmatprep.subr.mxu0 0.0
    %236 = vmatpush2.msra.mxu0 0.0
    %237 = vmatprep.subr.mxu0 0.0
    %238 = vmatpush2.msra.mxu0 0.0
    %239 = vmatprep.subr.mxu0 0.0
    %240 = vmatpush2.msra.mxu0 0.0
    %241 = vmatprep.subr.mxu0 0.0
    %242 = vmatpush2.msra.mxu0 0.0
    %243 = vmatprep.subr.mxu0 0.0
    %244 = vmatpush2.msra.mxu0 0.0
    %245 = vmatprep.subr.mxu0 0.0
    %246 = vmatpush2.msra.mxu0 0.0
    %247 = vmatprep.subr.mxu0 0.0
    %248 = vmatpush2.msra.mxu0 0.0
    %249 = vmatprep.subr.mxu0 0.0
    %250 = vmatpush2.msra.mxu0 0.0
    %251 = vmatprep.subr.mxu0 0.0
    %252 = vmatpush2.msra.mxu0 0.0
    %253 = vmatprep.subr.mxu0 0.0
    %254 = vmatpush2.msra.mxu0 0.0
    %255 = vmatprep.subr.mxu0 0.0
    %256 = vmatpush2.msra.mxu0 0.0
    %257 = vmatprep.subr.mxu0 0.0
    %258 = vmatpush2.msra.mxu0 0.0
    %259 = vmatprep.subr.mxu0 0.0
    %260 = vmatpush2.msra.mxu0 0.0
    %261 = vmatprep.subr.mxu0 0.0
    %262 = vmatpush2.msra.mxu0 0.0
    %263 = vmatprep.subr.mxu0 0.0
    %264 = vmatpush2.msra.mxu0 0.0
    %265 = vmatprep.subr.mxu0 0.0
    %266 = vmatpush2.msra.mxu0 0.0
    %267 = vmatprep.mubr.f32.mxu0 0.0
    %268 = vmatmul.mubr.f32.gmra.mxu0 %v31
    %v269 = vpop.f32.mrf.mxu0
    %v270 = vadd.f32 %v54, %v269
    %v271 = vpop.f32.mrf.mxu0
    %v272 = vadd.f32 %v54, %v271
    %273 = vmatprep.mubr.f32.mxu0 0.0
    %274 = vmatmul.mubr.f32.gmra.mxu0 %v32
    %v275 = vpop.f32.mrf.mxu0
    %v276 = vadd.f32 %v59, %v275
    %v277 = vpop.f32.mrf.mxu0
    %v278 = vadd.f32 %v59, %v277
    %279 = vdwg.mxu0
    %vm280 = vcmask 1040384
    %v281 = vsel %vm280, %v276, -inf
    %v282 = vmax.f32 %v270, %v281
    %v283 = vrot.slane %v282, 4
    %v284 = vmax.f32 %v282, %v283
    %v285 = vrot.slane %v284, 2
    %v286 = vmax.f32 %v284, %v285
    %v287 = vrot.slane %v286, 1
    %v288 = vmax.f32 %v286, %v287
    %v289 = vsel %vm280, %v278, -inf
    %v290 = vmax.f32 %v272, %v289
    %v291 = vrot.slane %v290, 4
    %v292 = vmax.f32 %v290, %v291
    %v293 = vrot.slane %v292, 2
    %v294 = vmax.f32 %v292, %v293
    %v295 = vrot.slane %v294, 1
    %v296 = vmax.f32 %v294, %v295
    %v297 = vsub.f32 %v270, %v288
    %v298 = vsub.f32 %v272, %v296
    %v299 = vsub.f32 %v276, %v288
    %v300 = vsub.f32 %v278, %v296
    %v301 = vmul.f32 %v297, 1.442695
    %v302 = vpow.pop %v301
    %v303 = vmul.f32 %v298, 1.442695
    %v304 = vpow.pop %v303
    %v305 = vmul.f32 %v299, 1.442695
    %v306 = vpow.pop %v305
    %v307 = vmul.f32 %v300, 1.442695
    %v308 = vpow.pop %v307
    %v309 = vsel %vm280, %v306, 0.0
    %v310 = vadd.f32 %v302, %v309
    %v311 = vrot.slane %v310, 4
    %v312 = vadd.f32 %v310, %v311
    %v313 = vrot.slane %v312, 2
    %v314 = vadd.f32 %v312, %v313
    %v315 = vrot.slane %v314, 1
    %v316 = vadd.f32 %v314, %v315
    %v317 = vsel %vm280, %v308, 0.0
    %v318 = vadd.f32 %v304, %v317
    %v319 = vrot.slane %v318, 4
    %v320 = vadd.f32 %v318, %v319
    %v321 = vrot.slane %v320, 2
    %v322 = vadd.f32 %v320, %v321
    %v323 = vrot.slane %v322, 1
    %v324 = vadd.f32 %v322, %v323
    %v325 = vrcp.pop %v316
    %v326 = vmul.f32 1.0, %v325
    %v327 = vrcp.pop %v324
    %v328 = vmul.f32 1.0, %v327
    %v329 = vmul.f32 %v302, %v326
    %v330 = vmul.f32 %v304, %v328
    %331 = vmatprep.subr.mxu0 0.0
    %332 = vmatpush1.xpose.msra.mxu0 0.0
    %333 = vmatprep.subr.mxu0 0.0
    %334 = vmatpush1.xpose.msra.mxu0 0.0
    %335 = vmatprep.subr.mxu0 0.0
    %336 = vmatpush1.xpose.msra.mxu0 0.0
    %337 = vmatprep.subr.mxu0 0.0
    %338 = vmatpush1.xpose.msra.mxu0 0.0
    %339 = vmatprep.subr.mxu0 0.0
    %340 = vmatpush1.xpose.msra.mxu0 0.0
    %341 = vmatprep.subr.mxu0 0.0
    %342 = vmatpush1.xpose.msra.mxu0 0.0
    %343 = vmatprep.subr.mxu0 0.0
    %344 = vmatpush1.xpose.msra.mxu0 0.0
    %345 = vmatprep.subr.mxu0 0.0
    %346 = vmatpush1.xpose.msra.mxu0 0.0
    %347 = vmatprep.subr.mxu0 0.0
    %348 = vmatpush1.xpose.msra.mxu0 0.0
    %349 = vmatprep.subr.mxu0 0.0
    %350 = vmatpush1.xpose.msra.mxu0 0.0
    %351 = vmatprep.subr.mxu0 0.0
    %352 = vmatpush1.xpose.msra.mxu0 0.0
    %353 = vmatprep.subr.mxu0 0.0
    %354 = vmatpush1.xpose.msra.mxu0 0.0
    %355 = vmatprep.subr.mxu0 0.0
    %356 = vmatpush1.xpose.msra.mxu0 0.0
    %357 = vmatprep.subr.mxu0 0.0
    %358 = vmatpush1.xpose.msra.mxu0 0.0
    %359 = vmatprep.subr.mxu0 0.0
    %360 = vmatpush1.xpose.msra.mxu0 0.0
    %361 = vmatprep.subr.mxu0 %v330
    %362 = vmatpush1.xpose.msra.mxu0 %v329
    %363 = vmatprep.subr.mxu0 0.0
    %364 = vmatpush2.xpose.msra.mxu0 0.0
    %365 = vmatprep.subr.mxu0 0.0
    %366 = vmatpush2.xpose.msra.mxu0 0.0
    %367 = vmatprep.subr.mxu0 0.0
    %368 = vmatpush2.xpose.msra.mxu0 0.0
    %369 = vmatprep.subr.mxu0 0.0
    %370 = vmatpush2.xpose.msra.mxu0 0.0
    %371 = vmatprep.subr.mxu0 0.0
    %372 = vmatpush2.xpose.msra.mxu0 0.0
    %373 = vmatprep.subr.mxu0 0.0
    %374 = vmatpush2.xpose.msra.mxu0 0.0
    %375 = vmatprep.subr.mxu0 0.0
    %376 = vmatpush2.xpose.msra.mxu0 0.0
    %377 = vmatprep.subr.mxu0 0.0
    %378 = vmatpush2.xpose.msra.mxu0 0.0
    %379 = vmatprep.subr.mxu0 0.0
    %380 = vmatpush2.xpose.msra.mxu0 0.0
    %381 = vmatprep.subr.mxu0 0.0
    %382 = vmatpush2.xpose.msra.mxu0 0.0
    %383 = vmatprep.subr.mxu0 0.0
    %384 = vmatpush2.xpose.msra.mxu0 0.0
    %385 = vmatprep.subr.mxu0 0.0
    %386 = vmatpush2.xpose.msra.mxu0 0.0
    %387 = vmatprep.subr.mxu0 0.0
    %388 = vmatpush2.xpose.msra.mxu0 0.0
    %389 = vmatprep.subr.mxu0 0.0
    %390 = vmatpush2.xpose.msra.mxu0 0.0
    %391 = vmatprep.subr.mxu0 0.0
    %392 = vmatpush2.xpose.msra.mxu0 0.0
    %393 = vmatprep.subr.mxu0 0.0
    %394 = vmatpush2.xpose.msra.mxu0 0.0
    %395 = vmatprep.mubr.f32.mxu0 %v172
    %396 = vmatmul.mubr.f32.gmra.mxu0 %v171
    %v397 = vpop.f32.mrf.mxu0
    %v398 = vadd.f32 0.0, %v397
    %v399 = vpop.f32.mrf.mxu0
    %400 = vmatprep.mubr.f32.mxu0 %v174
    %401 = vmatmul.mubr.f32.gmra.mxu0 %v173
    %v402 = vpop.f32.mrf.mxu0
    %v403 = vadd.f32 0.0, %v402
    %v404 = vpop.f32.mrf.mxu0
    %405 = vmatprep.mubr.f32.mxu0 %v176
    %406 = vmatmul.mubr.f32.gmra.mxu0 %v175
    %v407 = vpop.f32.mrf.mxu0
    %v408 = vadd.f32 0.0, %v407
    %v409 = vpop.f32.mrf.mxu0
    %410 = vmatprep.mubr.f32.mxu0 %v178
    %411 = vmatmul.mubr.f32.gmra.mxu0 %v177
    %v412 = vpop.f32.mrf.mxu0
    %v413 = vadd.f32 0.0, %v412
    %v414 = vpop.f32.mrf.mxu0
    %415 = vmatprep.mubr.f32.mxu0 %v180
    %416 = vmatmul.mubr.f32.gmra.mxu0 %v179
    %v417 = vpop.f32.mrf.mxu0
    %v418 = vadd.f32 0.0, %v417
    %v419 = vpop.f32.mrf.mxu0
    %420 = vmatprep.mubr.f32.mxu0 %v182
    %421 = vmatmul.mubr.f32.gmra.mxu0 %v181
    %v422 = vpop.f32.mrf.mxu0
    %v423 = vadd.f32 0.0, %v422
    %v424 = vpop.f32.mrf.mxu0
    %425 = vmatprep.mubr.f32.mxu0 %v184
    %426 = vmatmul.mubr.f32.gmra.mxu0 %v183
    %v427 = vpop.f32.mrf.mxu0
    %v428 = vadd.f32 0.0, %v427
    %v429 = vpop.f32.mrf.mxu0
    %430 = vmatprep.mubr.f32.mxu0 %v186
    %431 = vmatmul.mubr.f32.gmra.mxu0 %v185
    %v432 = vpop.f32.mrf.mxu0
    %v433 = vadd.f32 0.0, %v432
    %v434 = vpop.f32.mrf.mxu0
    %435 = vmatprep.mubr.f32.mxu0 %v188
    %436 = vmatmul.mubr.f32.gmra.mxu0 %v187
    %v437 = vpop.f32.mrf.mxu0
    %v438 = vadd.f32 0.0, %v437
    %v439 = vpop.f32.mrf.mxu0
    %440 = vmatprep.mubr.f32.mxu0 %v190
    %441 = vmatmul.mubr.f32.gmra.mxu0 %v189
    %v442 = vpop.f32.mrf.mxu0
    %v443 = vadd.f32 0.0, %v442
    %v444 = vpop.f32.mrf.mxu0
    %445 = vmatprep.mubr.f32.mxu0 %v192
    %446 = vmatmul.mubr.f32.gmra.mxu0 %v191
    %v447 = vpop.f32.mrf.mxu0
    %v448 = vadd.f32 0.0, %v447
    %v449 = vpop.f32.mrf.mxu0
    %450 = vmatprep.mubr.f32.mxu0 %v194
    %451 = vmatmul.mubr.f32.gmra.mxu0 %v193
    %v452 = vpop.f32.mrf.mxu0
    %v453 = vadd.f32 0.0, %v452
    %v454 = vpop.f32.mrf.mxu0
    %455 = vmatprep.mubr.f32.mxu0 %v196
    %456 = vmatmul.mubr.f32.gmra.mxu0 %v195
    %v457 = vpop.f32.mrf.mxu0
    %v458 = vadd.f32 0.0, %v457
    %v459 = vpop.f32.mrf.mxu0
    %460 = vmatprep.mubr.f32.mxu0 %v198
    %461 = vmatmul.mubr.f32.gmra.mxu0 %v197
    %v462 = vpop.f32.mrf.mxu0
    %v463 = vadd.f32 0.0, %v462
    %v464 = vpop.f32.mrf.mxu0
    %465 = vmatprep.mubr.f32.mxu0 %v200
    %466 = vmatmul.mubr.f32.gmra.mxu0 %v199
    %v467 = vpop.f32.mrf.mxu0
    %v468 = vadd.f32 0.0, %v467
    %v469 = vpop.f32.mrf.mxu0
    %470 = vmatprep.mubr.f32.mxu0 %v202
    %471 = vmatmul.mubr.f32.gmra.mxu0 %v201
    %v472 = vpop.f32.mrf.mxu0
    %v473 = vadd.f32 0.0, %v472
    %v474 = vpop.f32.mrf.mxu0
    %475 = vdwg.mxu0
    %476 = vmatprep.subr.mxu0 0.0
    %477 = vmatpush1.xpose.msra.mxu0 0.0
    %478 = vmatprep.subr.mxu0 0.0
    %479 = vmatpush1.xpose.msra.mxu0 0.0
    %480 = vmatprep.subr.mxu0 0.0
    %481 = vmatpush1.xpose.msra.mxu0 0.0
    %482 = vmatprep.subr.mxu0 0.0
    %483 = vmatpush1.xpose.msra.mxu0 0.0
    %484 = vmatprep.subr.mxu0 0.0
    %485 = vmatpush1.xpose.msra.mxu0 0.0
    %486 = vmatprep.subr.mxu0 0.0
    %487 = vmatpush1.xpose.msra.mxu0 0.0
    %488 = vmatprep.subr.mxu0 0.0
    %489 = vmatpush1.xpose.msra.mxu0 0.0
    %490 = vmatprep.subr.mxu0 0.0
    %491 = vmatpush1.xpose.msra.mxu0 0.0
    %492 = vmatprep.subr.mxu0 0.0
    %493 = vmatpush1.xpose.msra.mxu0 0.0
    %494 = vmatprep.subr.mxu0 0.0
    %495 = vmatpush1.xpose.msra.mxu0 0.0
    %496 = vmatprep.subr.mxu0 0.0
    %497 = vmatpush1.xpose.msra.mxu0 0.0
    %498 = vmatprep.subr.mxu0 0.0
    %499 = vmatpush1.xpose.msra.mxu0 0.0
    %500 = vmatprep.subr.mxu0 0.0
    %501 = vmatpush1.xpose.msra.mxu0 0.0
    %502 = vmatprep.subr.mxu0 0.0
    %503 = vmatpush1.xpose.msra.mxu0 0.0
    %504 = vmatprep.subr.mxu0 0.0
    %505 = vmatpush1.xpose.msra.mxu0 0.0
    %506 = vmatprep.subr.mxu0 %v330
    %507 = vmatpush1.xpose.msra.mxu0 %v329
    %508 = vmatprep.subr.mxu0 0.0
    %509 = vmatpush2.xpose.msra.mxu0 0.0
    %510 = vmatprep.subr.mxu0 0.0
    %511 = vmatpush2.xpose.msra.mxu0 0.0
    %512 = vmatprep.subr.mxu0 0.0
    %513 = vmatpush2.xpose.msra.mxu0 0.0
    %514 = vmatprep.subr.mxu0 0.0
    %515 = vmatpush2.xpose.msra.mxu0 0.0
    %516 = vmatprep.subr.mxu0 0.0
    %517 = vmatpush2.xpose.msra.mxu0 0.0
    %518 = vmatprep.subr.mxu0 0.0
    %519 = vmatpush2.xpose.msra.mxu0 0.0
    %520 = vmatprep.subr.mxu0 0.0
    %521 = vmatpush2.xpose.msra.mxu0 0.0
    %522 = vmatprep.subr.mxu0 0.0
    %523 = vmatpush2.xpose.msra.mxu0 0.0
    %524 = vmatprep.subr.mxu0 0.0
    %525 = vmatpush2.xpose.msra.mxu0 0.0
    %526 = vmatprep.subr.mxu0 0.0
    %527 = vmatpush2.xpose.msra.mxu0 0.0
    %528 = vmatprep.subr.mxu0 0.0
    %529 = vmatpush2.xpose.msra.mxu0 0.0
    %530 = vmatprep.subr.mxu0 0.0
    %531 = vmatpush2.xpose.msra.mxu0 0.0
    %532 = vmatprep.subr.mxu0 0.0
    %533 = vmatpush2.xpose.msra.mxu0 0.0
    %534 = vmatprep.subr.mxu0 0.0
    %535 = vmatpush2.xpose.msra.mxu0 0.0
    %536 = vmatprep.subr.mxu0 0.0
    %537 = vmatpush2.xpose.msra.mxu0 0.0
    %538 = vmatprep.subr.mxu0 0.0
    %539 = vmatpush2.xpose.msra.mxu0 0.0
    %540 = vmatprep.mubr.f32.mxu0 1.0
    %541 = vmatmul.mubr.f32.gmra.mxu0 1.0
    %v542 = vpop.f32.mrf.mxu0
    %v543 = vadd.f32 0.0, %v542
    %v544 = vpop.f32.mrf.mxu0
    %545 = vdwg.mxu0
    %v546 = vlaneseq
    %v547 = vshrl.u32 %v546, 7
    %v548 = vsub.s32 0, %v547
    %v549 = vrot.slane %v543, %v548
    %v550 = vmul.f32 %v549, %v33
    %v551 = vmul.f32 %v549, %v34
    %v552 = vmul.f32 %v549, %v35
    %v553 = vmul.f32 %v549, %v36
    %v554 = vmul.f32 %v549, %v37
    %v555 = vmul.f32 %v549, %v38
    %v556 = vmul.f32 %v549, %v39
    %v557 = vmul.f32 %v549, %v40
    %v558 = vmul.f32 %v549, %v41
    %v559 = vmul.f32 %v549, %v42
    %v560 = vmul.f32 %v549, %v43
    %v561 = vmul.f32 %v549, %v44
    %v562 = vmul.f32 %v549, %v45
    %v563 = vmul.f32 %v549, %v46
    %v564 = vmul.f32 %v549, %v47
    %v565 = vmul.f32 %v549, %v48
    %v566 = vsub.f32 %v398, %v550
    %v567 = vsub.f32 %v403, %v551
    %v568 = vsub.f32 %v408, %v552
    %v569 = vsub.f32 %v413, %v553
    %v570 = vsub.f32 %v418, %v554
    %v571 = vsub.f32 %v423, %v555
    %v572 = vsub.f32 %v428, %v556
    %v573 = vsub.f32 %v433, %v557
    %v574 = vsub.f32 %v438, %v558
    %v575 = vsub.f32 %v443, %v559
    %v576 = vsub.f32 %v448, %v560
    %v577 = vsub.f32 %v453, %v561
    %v578 = vsub.f32 %v458, %v562
    %v579 = vsub.f32 %v463, %v563
    %v580 = vsub.f32 %v468, %v564
    %v581 = vsub.f32 %v473, %v565
    %v582 = vmul.f32 %v566, %v566
    %v583 = vmul.f32 %v567, %v567
    %v584 = vmul.f32 %v568, %v568
    %v585 = vmul.f32 %v569, %v569
    %v586 = vmul.f32 %v570, %v570
    %v587 = vmul.f32 %v571, %v571
    %v588 = vmul.f32 %v572, %v572
    %v589 = vmul.f32 %v573, %v573
    %v590 = vmul.f32 %v574, %v574
    %v591 = vmul.f32 %v575, %v575
    %v592 = vmul.f32 %v576, %v576
    %v593 = vmul.f32 %v577, %v577
    %v594 = vmul.f32 %v578, %v578
    %v595 = vmul.f32 %v579, %v579
    %v596 = vmul.f32 %v580, %v580
    %v597 = vmul.f32 %v581, %v581
    %vm598 = vcmask 64512
    %v599 = vsel %vm598, %v582, 0.0
    %v600 = vsel %vm598, %v583, 0.0
    %v601 = vadd.f32 %v599, %v600
    %v602 = vsel %vm598, %v584, 0.0
    %v603 = vadd.f32 %v601, %v602
    %v604 = vsel %vm598, %v585, 0.0
    %v605 = vadd.f32 %v603, %v604
    %v606 = vsel %vm598, %v586, 0.0
    %v607 = vadd.f32 %v605, %v606
    %v608 = vsel %vm598, %v587, 0.0
    %v609 = vadd.f32 %v607, %v608
    %v610 = vsel %vm598, %v588, 0.0
    %v611 = vadd.f32 %v609, %v610
    %v612 = vsel %vm598, %v589, 0.0
    %v613 = vadd.f32 %v611, %v612
    %v614 = vsel %vm598, %v590, 0.0
    %v615 = vadd.f32 %v613, %v614
    %v616 = vsel %vm598, %v591, 0.0
    %v617 = vadd.f32 %v615, %v616
    %v618 = vsel %vm598, %v592, 0.0
    %v619 = vadd.f32 %v617, %v618
    %v620 = vsel %vm598, %v593, 0.0
    %v621 = vadd.f32 %v619, %v620
    %v622 = vsel %vm598, %v594, 0.0
    %v623 = vadd.f32 %v621, %v622
    %v624 = vsel %vm598, %v595, 0.0
    %v625 = vadd.f32 %v623, %v624
    %v626 = vsel %vm598, %v596, 0.0
    %v627 = vadd.f32 %v625, %v626
    %v628 = vsel %vm598, %v597, 0.0
    %v629 = vadd.f32 %v627, %v628
    %v630 = vrot.slane %v629, 4
    %v631 = vadd.f32 %v629, %v630
    %v632 = vrot.slane %v631, 2
    %v633 = vadd.f32 %v631, %v632
    %v634 = vrot.slane %v633, 1
    %v635 = vadd.f32 %v633, %v634
    %v636 = vmax.f32 %v635, 1e-24
    %v637 = vrsqrt.pop %v636
    %v638 = vmul.f32 %v566, %v637
    %v639 = vmul.f32 %v567, %v637
    %v640 = vmul.f32 %v568, %v637
    %v641 = vmul.f32 %v569, %v637
    %v642 = vmul.f32 %v570, %v637
    %v643 = vmul.f32 %v571, %v637
    %v644 = vmul.f32 %v572, %v637
    %v645 = vmul.f32 %v573, %v637
    %v646 = vmul.f32 %v574, %v637
    %v647 = vmul.f32 %v575, %v637
    %v648 = vmul.f32 %v576, %v637
    %v649 = vmul.f32 %v577, %v637
    %v650 = vmul.f32 %v578, %v637
    %v651 = vmul.f32 %v579, %v637
    %v652 = vmul.f32 %v580, %v637
    %v653 = vmul.f32 %v581, %v637
    %v654 = vmul.f32 %v638, %v638
    %v655 = vmul.f32 %v639, %v639
    %v656 = vmul.f32 %v640, %v640
    %v657 = vmul.f32 %v641, %v641
    %v658 = vmul.f32 %v642, %v642
    %v659 = vmul.f32 %v643, %v643
    %v660 = vmul.f32 %v644, %v644
    %v661 = vmul.f32 %v645, %v645
    %v662 = vmul.f32 %v646, %v646
    %v663 = vmul.f32 %v647, %v647
    %v664 = vmul.f32 %v648, %v648
    %v665 = vmul.f32 %v649, %v649
    %v666 = vmul.f32 %v650, %v650
    %v667 = vmul.f32 %v651, %v651
    %v668 = vmul.f32 %v652, %v652
    %v669 = vmul.f32 %v653, %v653
    %v670 = vsel %vm598, %v654, 0.0
    %v671 = vsel %vm598, %v655, 0.0
    %v672 = vadd.f32 %v670, %v671
    %v673 = vsel %vm598, %v656, 0.0
    %v674 = vadd.f32 %v672, %v673
    %v675 = vsel %vm598, %v657, 0.0
    %v676 = vadd.f32 %v674, %v675
    %v677 = vsel %vm598, %v658, 0.0
    %v678 = vadd.f32 %v676, %v677
    %v679 = vsel %vm598, %v659, 0.0
    %v680 = vadd.f32 %v678, %v679
    %v681 = vsel %vm598, %v660, 0.0
    %v682 = vadd.f32 %v680, %v681
    %v683 = vsel %vm598, %v661, 0.0
    %v684 = vadd.f32 %v682, %v683
    %v685 = vsel %vm598, %v662, 0.0
    %v686 = vadd.f32 %v684, %v685
    %v687 = vsel %vm598, %v663, 0.0
    %v688 = vadd.f32 %v686, %v687
    %v689 = vsel %vm598, %v664, 0.0
    %v690 = vadd.f32 %v688, %v689
    %v691 = vsel %vm598, %v665, 0.0
    %v692 = vadd.f32 %v690, %v691
    %v693 = vsel %vm598, %v666, 0.0
    %v694 = vadd.f32 %v692, %v693
    %v695 = vsel %vm598, %v667, 0.0
    %v696 = vadd.f32 %v694, %v695
    %v697 = vsel %vm598, %v668, 0.0
    %v698 = vadd.f32 %v696, %v697
    %v699 = vsel %vm598, %v669, 0.0
    %v700 = vadd.f32 %v698, %v699
    %v701 = vrot.slane %v700, 4
    %v702 = vadd.f32 %v700, %v701
    %v703 = vrot.slane %v702, 2
    %v704 = vadd.f32 %v702, %v703
    %v705 = vrot.slane %v704, 1
    %v706 = vadd.f32 %v704, %v705
    %v707 = vsel %vm598, %v706, 0.0
    %708 = vadd.xlane.f32.xlu0 %v707
    %v709 = vpop.xlane.xlu0 %708
    %v710 = vmax.f32 %v709, 1e-24
    %v711 = vrsqrt.pop %v710
    %v712 = vmul.f32 %v638, %v711
    %v713 = vmul.f32 %v639, %v711
    %v714 = vmul.f32 %v640, %v711
    %v715 = vmul.f32 %v641, %v711
    %v716 = vmul.f32 %v642, %v711
    %v717 = vmul.f32 %v643, %v711
    %v718 = vmul.f32 %v644, %v711
    %v719 = vmul.f32 %v645, %v711
    %v720 = vmul.f32 %v646, %v711
    %v721 = vmul.f32 %v647, %v711
    %v722 = vmul.f32 %v648, %v711
    %v723 = vmul.f32 %v649, %v711
    %v724 = vmul.f32 %v650, %v711
    %v725 = vmul.f32 %v651, %v711
    %v726 = vmul.f32 %v652, %v711
    %v727 = vmul.f32 %v653, %v711
    %728 = vst.msk [vmem:[%s4] sm:$0xff] %vm598, %v712
    %729 = vst.msk [vmem:[%s4 + $0x8] sm:$0xff] %vm598, %v713
    %730 = vst.msk [vmem:[%s4 + $0x10] sm:$0xff] %vm598, %v714
    %731 = vst.msk [vmem:[%s4 + $0x18] sm:$0xff] %vm598, %v715
    %732 = vst.msk [vmem:[%s4 + $0x20] sm:$0xff] %vm598, %v716
    %733 = vst.msk [vmem:[%s4 + $0x28] sm:$0xff] %vm598, %v717
    %734 = vst.msk [vmem:[%s4 + $0x30] sm:$0xff] %vm598, %v718
    %735 = vst.msk [vmem:[%s4 + $0x38] sm:$0xff] %vm598, %v719
    %736 = vst.msk [vmem:[%s4 + $0x40] sm:$0xff] %vm598, %v720
    %737 = vst.msk [vmem:[%s4 + $0x48] sm:$0xff] %vm598, %v721
    %738 = vst.msk [vmem:[%s4 + $0x50] sm:$0xff] %vm598, %v722
    %739 = vst.msk [vmem:[%s4 + $0x58] sm:$0xff] %vm598, %v723
    %740 = vst.msk [vmem:[%s4 + $0x60] sm:$0xff] %vm598, %v724
    %741 = vst.msk [vmem:[%s4 + $0x68] sm:$0xff] %vm598, %v725
    %742 = vst.msk [vmem:[%s4 + $0x70] sm:$0xff] %vm598, %v726
    %743 = vst.msk [vmem:[%s4 + $0x78] sm:$0xff] %vm598, %v727
    %s744 = scalar_lea.vmem [#allocation2], 256
    %v745 = vld [vmem:[%s744] sm:$0xff]
    %v746 = vld [vmem:[%s744 + $0x8] sm:$0xff]
    %v747 = vld [vmem:[%s744 + $0x10] sm:$0xff]
    %v748 = vld [vmem:[%s744 + $0x18] sm:$0xff]
    %v749 = vld [vmem:[%s744 + $0x20] sm:$0xff]
    %v750 = vld [vmem:[%s744 + $0x28] sm:$0xff]
    %v751 = vld [vmem:[%s744 + $0x30] sm:$0xff]
    %v752 = vld [vmem:[%s744 + $0x38] sm:$0xff]
    %v753 = vld [vmem:[%s744 + $0x40] sm:$0xff]
    %v754 = vld [vmem:[%s744 + $0x48] sm:$0xff]
    %v755 = vld [vmem:[%s744 + $0x50] sm:$0xff]
    %v756 = vld [vmem:[%s744 + $0x58] sm:$0xff]
    %v757 = vld [vmem:[%s744 + $0x60] sm:$0xff]
    %v758 = vld [vmem:[%s744 + $0x68] sm:$0xff]
    %v759 = vld [vmem:[%s744 + $0x70] sm:$0xff]
    %v760 = vld [vmem:[%s744 + $0x78] sm:$0xff]
    %v761 = vld [vmem:[%s744 + $0x80] sm:$0xff]
    %v762 = vld [vmem:[%s744 + $0x88] sm:$0xff]
    %v763 = vld [vmem:[%s744 + $0x90] sm:$0xff]
    %v764 = vld [vmem:[%s744 + $0x98] sm:$0xff]
    %v765 = vld [vmem:[%s744 + $0xa0] sm:$0xff]
    %v766 = vld [vmem:[%s744 + $0xa8] sm:$0xff]
    %v767 = vld [vmem:[%s744 + $0xb0] sm:$0xff]
    %v768 = vld [vmem:[%s744 + $0xb8] sm:$0xff]
    %v769 = vld [vmem:[%s744 + $0xc0] sm:$0xff]
    %v770 = vld [vmem:[%s744 + $0xc8] sm:$0xff]
    %v771 = vld [vmem:[%s744 + $0xd0] sm:$0xff]
    %v772 = vld [vmem:[%s744 + $0xd8] sm:$0xff]
    %v773 = vld [vmem:[%s744 + $0xe0] sm:$0xff]
    %v774 = vld [vmem:[%s744 + $0xe8] sm:$0xff]
    %v775 = vld [vmem:[%s744 + $0xf0] sm:$0xff]
    %v776 = vld [vmem:[%s744 + $0xf8] sm:$0xff]
    %v777 = vmul.f32 %v745, %v745
    %v778 = vmul.f32 %v746, %v746
    %v779 = vmul.f32 %v747, %v747
    %v780 = vmul.f32 %v748, %v748
    %v781 = vmul.f32 %v749, %v749
    %v782 = vmul.f32 %v750, %v750
    %v783 = vmul.f32 %v751, %v751
    %v784 = vmul.f32 %v752, %v752
    %v785 = vmul.f32 %v753, %v753
    %v786 = vmul.f32 %v754, %v754
    %v787 = vmul.f32 %v755, %v755
    %v788 = vmul.f32 %v756, %v756
    %v789 = vmul.f32 %v757, %v757
    %v790 = vmul.f32 %v758, %v758
    %v791 = vmul.f32 %v759, %v759
    %v792 = vmul.f32 %v760, %v760
    %v793 = vmul.f32 %v761, %v761
    %v794 = vmul.f32 %v762, %v762
    %v795 = vmul.f32 %v763, %v763
    %v796 = vmul.f32 %v764, %v764
    %v797 = vmul.f32 %v765, %v765
    %v798 = vmul.f32 %v766, %v766
    %v799 = vmul.f32 %v767, %v767
    %v800 = vmul.f32 %v768, %v768
    %v801 = vmul.f32 %v769, %v769
    %v802 = vmul.f32 %v770, %v770
    %v803 = vmul.f32 %v771, %v771
    %v804 = vmul.f32 %v772, %v772
    %v805 = vmul.f32 %v773, %v773
    %v806 = vmul.f32 %v774, %v774
    %v807 = vmul.f32 %v775, %v775
    %v808 = vmul.f32 %v776, %v776
    %v809 = vadd.f32 %v777, %v779
    %v810 = vadd.f32 %v809, %v781
    %v811 = vadd.f32 %v810, %v783
    %v812 = vadd.f32 %v811, %v785
    %v813 = vadd.f32 %v812, %v787
    %v814 = vadd.f32 %v813, %v789
    %v815 = vadd.f32 %v814, %v791
    %v816 = vadd.f32 %v815, %v793
    %v817 = vadd.f32 %v816, %v795
    %v818 = vadd.f32 %v817, %v797
    %v819 = vadd.f32 %v818, %v799
    %v820 = vadd.f32 %v819, %v801
    %v821 = vadd.f32 %v820, %v803
    %v822 = vadd.f32 %v821, %v805
    %v823 = vadd.f32 %v822, %v807
    %v824 = vrot.slane %v823, 4
    %v825 = vadd.f32 %v823, %v824
    %v826 = vrot.slane %v825, 2
    %v827 = vadd.f32 %v825, %v826
    %v828 = vrot.slane %v827, 1
    %v829 = vadd.f32 %v827, %v828
    %v830 = vadd.f32 %v778, %v780
    %v831 = vadd.f32 %v830, %v782
    %v832 = vadd.f32 %v831, %v784
    %v833 = vadd.f32 %v832, %v786
    %v834 = vadd.f32 %v833, %v788
    %v835 = vadd.f32 %v834, %v790
    %v836 = vadd.f32 %v835, %v792
    %v837 = vadd.f32 %v836, %v794
    %v838 = vadd.f32 %v837, %v796
    %v839 = vadd.f32 %v838, %v798
    %v840 = vadd.f32 %v839, %v800
    %v841 = vadd.f32 %v840, %v802
    %v842 = vadd.f32 %v841, %v804
    %v843 = vadd.f32 %v842, %v806
    %v844 = vadd.f32 %v843, %v808
    %v845 = vrot.slane %v844, 4
    %v846 = vadd.f32 %v844, %v845
    %v847 = vrot.slane %v846, 2
    %v848 = vadd.f32 %v846, %v847
    %v849 = vrot.slane %v848, 1
    %v850 = vadd.f32 %v848, %v849
    %v851 = vmax.f32 %v829, 1e-24
    %v852 = vmax.f32 %v850, 1e-24
    %v853 = vrsqrt.pop %v851
    %v854 = vrsqrt.pop %v852
    %v855 = vmul.f32 %v745, %v853
    %v856 = vmul.f32 %v746, %v854
    %v857 = vmul.f32 %v747, %v853
    %v858 = vmul.f32 %v748, %v854
    %v859 = vmul.f32 %v749, %v853
    %v860 = vmul.f32 %v750, %v854
    %v861 = vmul.f32 %v751, %v853
    %v862 = vmul.f32 %v752, %v854
    %v863 = vmul.f32 %v753, %v853
    %v864 = vmul.f32 %v754, %v854
    %v865 = vmul.f32 %v755, %v853
    %v866 = vmul.f32 %v756, %v854
    %v867 = vmul.f32 %v757, %v853
    %v868 = vmul.f32 %v758, %v854
    %v869 = vmul.f32 %v759, %v853
    %v870 = vmul.f32 %v760, %v854
    %v871 = vmul.f32 %v761, %v853
    %v872 = vmul.f32 %v762, %v854
    %v873 = vmul.f32 %v763, %v853
    %v874 = vmul.f32 %v764, %v854
    %v875 = vmul.f32 %v765, %v853
    %v876 = vmul.f32 %v766, %v854
    %v877 = vmul.f32 %v767, %v853
    %v878 = vmul.f32 %v768, %v854
    %v879 = vmul.f32 %v769, %v853
    %v880 = vmul.f32 %v770, %v854
    %v881 = vmul.f32 %v771, %v853
    %v882 = vmul.f32 %v772, %v854
    %v883 = vmul.f32 %v773, %v853
    %v884 = vmul.f32 %v774, %v854
    %v885 = vmul.f32 %v775, %v853
    %v886 = vmul.f32 %v776, %v854
    %887 = vmatprep.subr.mxu0 %v886
    %888 = vmatpush1.msra.mxu0 %v885
    %889 = vmatprep.subr.mxu0 %v884
    %890 = vmatpush1.msra.mxu0 %v883
    %891 = vmatprep.subr.mxu0 %v882
    %892 = vmatpush1.msra.mxu0 %v881
    %893 = vmatprep.subr.mxu0 %v880
    %894 = vmatpush1.msra.mxu0 %v879
    %895 = vmatprep.subr.mxu0 %v878
    %896 = vmatpush1.msra.mxu0 %v877
    %897 = vmatprep.subr.mxu0 %v876
    %898 = vmatpush1.msra.mxu0 %v875
    %899 = vmatprep.subr.mxu0 %v874
    %900 = vmatpush1.msra.mxu0 %v873
    %901 = vmatprep.subr.mxu0 %v872
    %902 = vmatpush1.msra.mxu0 %v871
    %903 = vmatprep.subr.mxu0 %v870
    %904 = vmatpush1.msra.mxu0 %v869
    %905 = vmatprep.subr.mxu0 %v868
    %906 = vmatpush1.msra.mxu0 %v867
    %907 = vmatprep.subr.mxu0 %v866
    %908 = vmatpush1.msra.mxu0 %v865
    %909 = vmatprep.subr.mxu0 %v864
    %910 = vmatpush1.msra.mxu0 %v863
    %911 = vmatprep.subr.mxu0 %v862
    %912 = vmatpush1.msra.mxu0 %v861
    %913 = vmatprep.subr.mxu0 %v860
    %914 = vmatpush1.msra.mxu0 %v859
    %915 = vmatprep.subr.mxu0 %v858
    %916 = vmatpush1.msra.mxu0 %v857
    %917 = vmatprep.subr.mxu0 %v856
    %918 = vmatpush1.msra.mxu0 %v855
    %919 = vmatprep.subr.mxu0 0.0
    %920 = vmatpush2.msra.mxu0 0.0
    %921 = vmatprep.subr.mxu0 0.0
    %922 = vmatpush2.msra.mxu0 0.0
    %923 = vmatprep.subr.mxu0 0.0
    %924 = vmatpush2.msra.mxu0 0.0
    %925 = vmatprep.subr.mxu0 0.0
    %926 = vmatpush2.msra.mxu0 0.0
    %927 = vmatprep.subr.mxu0 0.0
    %928 = vmatpush2.msra.mxu0 0.0
    %929 = vmatprep.subr.mxu0 0.0
    %930 = vmatpush2.msra.mxu0 0.0
    %931 = vmatprep.subr.mxu0 0.0
    %932 = vmatpush2.msra.mxu0 0.0
    %933 = vmatprep.subr.mxu0 0.0
    %934 = vmatpush2.msra.mxu0 0.0
    %935 = vmatprep.subr.mxu0 0.0
    %936 = vmatpush2.msra.mxu0 0.0
    %937 = vmatprep.subr.mxu0 0.0
    %938 = vmatpush2.msra.mxu0 0.0
    %939 = vmatprep.subr.mxu0 0.0
    %940 = vmatpush2.msra.mxu0 0.0
    %941 = vmatprep.subr.mxu0 0.0
    %942 = vmatpush2.msra.mxu0 0.0
    %943 = vmatprep.subr.mxu0 0.0
    %944 = vmatpush2.msra.mxu0 0.0
    %945 = vmatprep.subr.mxu0 0.0
    %946 = vmatpush2.msra.mxu0 0.0
    %947 = vmatprep.subr.mxu0 0.0
    %948 = vmatpush2.msra.mxu0 0.0
    %949 = vmatprep.subr.mxu0 0.0
    %950 = vmatpush2.msra.mxu0 0.0
    %951 = vmatprep.mubr.f32.mxu0 0.0
    %952 = vmatmul.mubr.f32.gmra.mxu0 %v31
    %v953 = vpop.f32.mrf.mxu0
    %v954 = vadd.f32 %v54, %v953
    %v955 = vpop.f32.mrf.mxu0
    %v956 = vadd.f32 %v54, %v955
    %957 = vmatprep.mubr.f32.mxu0 0.0
    %958 = vmatmul.mubr.f32.gmra.mxu0 %v32
    %v959 = vpop.f32.mrf.mxu0
    %v960 = vadd.f32 %v59, %v959
    %v961 = vpop.f32.mrf.mxu0
    %v962 = vadd.f32 %v59, %v961
    %963 = vdwg.mxu0
    %v964 = vsel %vm280, %v960, -inf
    %v965 = vmax.f32 %v954, %v964
    %v966 = vrot.slane %v965, 4
    %v967 = vmax.f32 %v965, %v966
    %v968 = vrot.slane %v967, 2
    %v969 = vmax.f32 %v967, %v968
    %v970 = vrot.slane %v969, 1
    %v971 = vmax.f32 %v969, %v970
    %v972 = vsel %vm280, %v962, -inf
    %v973 = vmax.f32 %v956, %v972
    %v974 = vrot.slane %v973, 4
    %v975 = vmax.f32 %v973, %v974
    %v976 = vrot.slane %v975, 2
    %v977 = vmax.f32 %v975, %v976
    %v978 = vrot.slane %v977, 1
    %v979 = vmax.f32 %v977, %v978
    %v980 = vsub.f32 %v954, %v971
    %v981 = vsub.f32 %v956, %v979
    %v982 = vsub.f32 %v960, %v971
    %v983 = vsub.f32 %v962, %v979
    %v984 = vmul.f32 %v980, 1.442695
    %v985 = vpow.pop %v984
    %v986 = vmul.f32 %v981, 1.442695
    %v987 = vpow.pop %v986
    %v988 = vmul.f32 %v982, 1.442695
    %v989 = vpow.pop %v988
    %v990 = vmul.f32 %v983, 1.442695
    %v991 = vpow.pop %v990
    %v992 = vsel %vm280, %v989, 0.0
    %v993 = vadd.f32 %v985, %v992
    %v994 = vrot.slane %v993, 4
    %v995 = vadd.f32 %v993, %v994
    %v996 = vrot.slane %v995, 2
    %v997 = vadd.f32 %v995, %v996
    %v998 = vrot.slane %v997, 1
    %v999 = vadd.f32 %v997, %v998
    %v1000 = vsel %vm280, %v991, 0.0
    %v1001 = vadd.f32 %v987, %v1000
    %v1002 = vrot.slane %v1001, 4
    %v1003 = vadd.f32 %v1001, %v1002
    %v1004 = vrot.slane %v1003, 2
    %v1005 = vadd.f32 %v1003, %v1004
    %v1006 = vrot.slane %v1005, 1
    %v1007 = vadd.f32 %v1005, %v1006
    %v1008 = vrcp.pop %v999
    %v1009 = vmul.f32 1.0, %v1008
    %v1010 = vrcp.pop %v1007
    %v1011 = vmul.f32 1.0, %v1010
    %v1012 = vmul.f32 %v985, %v1009
    %v1013 = vmul.f32 %v987, %v1011
    %1014 = vmatprep.subr.mxu0 0.0
    %1015 = vmatpush1.xpose.msra.mxu0 0.0
    %1016 = vmatprep.subr.mxu0 0.0
    %1017 = vmatpush1.xpose.msra.mxu0 0.0
    %1018 = vmatprep.subr.mxu0 0.0
    %1019 = vmatpush1.xpose.msra.mxu0 0.0
    %1020 = vmatprep.subr.mxu0 0.0
    %1021 = vmatpush1.xpose.msra.mxu0 0.0
    %1022 = vmatprep.subr.mxu0 0.0
    %1023 = vmatpush1.xpose.msra.mxu0 0.0
    %1024 = vmatprep.subr.mxu0 0.0
    %1025 = vmatpush1.xpose.msra.mxu0 0.0
    %1026 = vmatprep.subr.mxu0 0.0
    %1027 = vmatpush1.xpose.msra.mxu0 0.0
    %1028 = vmatprep.subr.mxu0 0.0
    %1029 = vmatpush1.xpose.msra.mxu0 0.0
    %1030 = vmatprep.subr.mxu0 0.0
    %1031 = vmatpush1.xpose.msra.mxu0 0.0
    %1032 = vmatprep.subr.mxu0 0.0
    %1033 = vmatpush1.xpose.msra.mxu0 0.0
    %1034 = vmatprep.subr.mxu0 0.0
    %1035 = vmatpush1.xpose.msra.mxu0 0.0
    %1036 = vmatprep.subr.mxu0 0.0
    %1037 = vmatpush1.xpose.msra.mxu0 0.0
    %1038 = vmatprep.subr.mxu0 0.0
    %1039 = vmatpush1.xpose.msra.mxu0 0.0
    %1040 = vmatprep.subr.mxu0 0.0
    %1041 = vmatpush1.xpose.msra.mxu0 0.0
    %1042 = vmatprep.subr.mxu0 0.0
    %1043 = vmatpush1.xpose.msra.mxu0 0.0
    %1044 = vmatprep.subr.mxu0 %v1013
    %1045 = vmatpush1.xpose.msra.mxu0 %v1012
    %1046 = vmatprep.subr.mxu0 0.0
    %1047 = vmatpush2.xpose.msra.mxu0 0.0
    %1048 = vmatprep.subr.mxu0 0.0
    %1049 = vmatpush2.xpose.msra.mxu0 0.0
    %1050 = vmatprep.subr.mxu0 0.0
    %1051 = vmatpush2.xpose.msra.mxu0 0.0
    %1052 = vmatprep.subr.mxu0 0.0
    %1053 = vmatpush2.xpose.msra.mxu0 0.0
    %1054 = vmatprep.subr.mxu0 0.0
    %1055 = vmatpush2.xpose.msra.mxu0 0.0
    %1056 = vmatprep.subr.mxu0 0.0
    %1057 = vmatpush2.xpose.msra.mxu0 0.0
    %1058 = vmatprep.subr.mxu0 0.0
    %1059 = vmatpush2.xpose.msra.mxu0 0.0
    %1060 = vmatprep.subr.mxu0 0.0
    %1061 = vmatpush2.xpose.msra.mxu0 0.0
    %1062 = vmatprep.subr.mxu0 0.0
    %1063 = vmatpush2.xpose.msra.mxu0 0.0
    %1064 = vmatprep.subr.mxu0 0.0
    %1065 = vmatpush2.xpose.msra.mxu0 0.0
    %1066 = vmatprep.subr.mxu0 0.0
    %1067 = vmatpush2.xpose.msra.mxu0 0.0
    %1068 = vmatprep.subr.mxu0 0.0
    %1069 = vmatpush2.xpose.msra.mxu0 0.0
    %1070 = vmatprep.subr.mxu0 0.0
    %1071 = vmatpush2.xpose.msra.mxu0 0.0
    %1072 = vmatprep.subr.mxu0 0.0
    %1073 = vmatpush2.xpose.msra.mxu0 0.0
    %1074 = vmatprep.subr.mxu0 0.0
    %1075 = vmatpush2.xpose.msra.mxu0 0.0
    %1076 = vmatprep.subr.mxu0 0.0
    %1077 = vmatpush2.xpose.msra.mxu0 0.0
    %1078 = vmatprep.mubr.f32.mxu0 %v856
    %1079 = vmatmul.mubr.f32.gmra.mxu0 %v855
    %v1080 = vpop.f32.mrf.mxu0
    %v1081 = vadd.f32 0.0, %v1080
    %v1082 = vpop.f32.mrf.mxu0
    %1083 = vmatprep.mubr.f32.mxu0 %v858
    %1084 = vmatmul.mubr.f32.gmra.mxu0 %v857
    %v1085 = vpop.f32.mrf.mxu0
    %v1086 = vadd.f32 0.0, %v1085
    %v1087 = vpop.f32.mrf.mxu0
    %1088 = vmatprep.mubr.f32.mxu0 %v860
    %1089 = vmatmul.mubr.f32.gmra.mxu0 %v859
    %v1090 = vpop.f32.mrf.mxu0
    %v1091 = vadd.f32 0.0, %v1090
    %v1092 = vpop.f32.mrf.mxu0
    %1093 = vmatprep.mubr.f32.mxu0 %v862
    %1094 = vmatmul.mubr.f32.gmra.mxu0 %v861
    %v1095 = vpop.f32.mrf.mxu0
    %v1096 = vadd.f32 0.0, %v1095
    %v1097 = vpop.f32.mrf.mxu0
    %1098 = vmatprep.mubr.f32.mxu0 %v864
    %1099 = vmatmul.mubr.f32.gmra.mxu0 %v863
    %v1100 = vpop.f32.mrf.mxu0
    %v1101 = vadd.f32 0.0, %v1100
    %v1102 = vpop.f32.mrf.mxu0
    %1103 = vmatprep.mubr.f32.mxu0 %v866
    %1104 = vmatmul.mubr.f32.gmra.mxu0 %v865
    %v1105 = vpop.f32.mrf.mxu0
    %v1106 = vadd.f32 0.0, %v1105
    %v1107 = vpop.f32.mrf.mxu0
    %1108 = vmatprep.mubr.f32.mxu0 %v868
    %1109 = vmatmul.mubr.f32.gmra.mxu0 %v867
    %v1110 = vpop.f32.mrf.mxu0
    %v1111 = vadd.f32 0.0, %v1110
    %v1112 = vpop.f32.mrf.mxu0
    %1113 = vmatprep.mubr.f32.mxu0 %v870
    %1114 = vmatmul.mubr.f32.gmra.mxu0 %v869
    %v1115 = vpop.f32.mrf.mxu0
    %v1116 = vadd.f32 0.0, %v1115
    %v1117 = vpop.f32.mrf.mxu0
    %1118 = vmatprep.mubr.f32.mxu0 %v872
    %1119 = vmatmul.mubr.f32.gmra.mxu0 %v871
    %v1120 = vpop.f32.mrf.mxu0
    %v1121 = vadd.f32 0.0, %v1120
    %v1122 = vpop.f32.mrf.mxu0
    %1123 = vmatprep.mubr.f32.mxu0 %v874
    %1124 = vmatmul.mubr.f32.gmra.mxu0 %v873
    %v1125 = vpop.f32.mrf.mxu0
    %v1126 = vadd.f32 0.0, %v1125
    %v1127 = vpop.f32.mrf.mxu0
    %1128 = vmatprep.mubr.f32.mxu0 %v876
    %1129 = vmatmul.mubr.f32.gmra.mxu0 %v875
    %v1130 = vpop.f32.mrf.mxu0
    %v1131 = vadd.f32 0.0, %v1130
    %v1132 = vpop.f32.mrf.mxu0
    %1133 = vmatprep.mubr.f32.mxu0 %v878
    %1134 = vmatmul.mubr.f32.gmra.mxu0 %v877
    %v1135 = vpop.f32.mrf.mxu0
    %v1136 = vadd.f32 0.0, %v1135
    %v1137 = vpop.f32.mrf.mxu0
    %1138 = vmatprep.mubr.f32.mxu0 %v880
    %1139 = vmatmul.mubr.f32.gmra.mxu0 %v879
    %v1140 = vpop.f32.mrf.mxu0
    %v1141 = vadd.f32 0.0, %v1140
    %v1142 = vpop.f32.mrf.mxu0
    %1143 = vmatprep.mubr.f32.mxu0 %v882
    %1144 = vmatmul.mubr.f32.gmra.mxu0 %v881
    %v1145 = vpop.f32.mrf.mxu0
    %v1146 = vadd.f32 0.0, %v1145
    %v1147 = vpop.f32.mrf.mxu0
    %1148 = vmatprep.mubr.f32.mxu0 %v884
    %1149 = vmatmul.mubr.f32.gmra.mxu0 %v883
    %v1150 = vpop.f32.mrf.mxu0
    %v1151 = vadd.f32 0.0, %v1150
    %v1152 = vpop.f32.mrf.mxu0
    %1153 = vmatprep.mubr.f32.mxu0 %v886
    %1154 = vmatmul.mubr.f32.gmra.mxu0 %v885
    %v1155 = vpop.f32.mrf.mxu0
    %v1156 = vadd.f32 0.0, %v1155
    %v1157 = vpop.f32.mrf.mxu0
    %1158 = vdwg.mxu0
    %1159 = vmatprep.subr.mxu0 0.0
    %1160 = vmatpush1.xpose.msra.mxu0 0.0
    %1161 = vmatprep.subr.mxu0 0.0
    %1162 = vmatpush1.xpose.msra.mxu0 0.0
    %1163 = vmatprep.subr.mxu0 0.0
    %1164 = vmatpush1.xpose.msra.mxu0 0.0
    %1165 = vmatprep.subr.mxu0 0.0
    %1166 = vmatpush1.xpose.msra.mxu0 0.0
    %1167 = vmatprep.subr.mxu0 0.0
    %1168 = vmatpush1.xpose.msra.mxu0 0.0
    %1169 = vmatprep.subr.mxu0 0.0
    %1170 = vmatpush1.xpose.msra.mxu0 0.0
    %1171 = vmatprep.subr.mxu0 0.0
    %1172 = vmatpush1.xpose.msra.mxu0 0.0
    %1173 = vmatprep.subr.mxu0 0.0
    %1174 = vmatpush1.xpose.msra.mxu0 0.0
    %1175 = vmatprep.subr.mxu0 0.0
    %1176 = vmatpush1.xpose.msra.mxu0 0.0
    %1177 = vmatprep.subr.mxu0 0.0
    %1178 = vmatpush1.xpose.msra.mxu0 0.0
    %1179 = vmatprep.subr.mxu0 0.0
    %1180 = vmatpush1.xpose.msra.mxu0 0.0
    %1181 = vmatprep.subr.mxu0 0.0
    %1182 = vmatpush1.xpose.msra.mxu0 0.0
    %1183 = vmatprep.subr.mxu0 0.0
    %1184 = vmatpush1.xpose.msra.mxu0 0.0
    %1185 = vmatprep.subr.mxu0 0.0
    %1186 = vmatpush1.xpose.msra.mxu0 0.0
    %1187 = vmatprep.subr.mxu0 0.0
    %1188 = vmatpush1.xpose.msra.mxu0 0.0
    %1189 = vmatprep.subr.mxu0 %v1013
    %1190 = vmatpush1.xpose.msra.mxu0 %v1012
    %1191 = vmatprep.subr.mxu0 0.0
    %1192 = vmatpush2.xpose.msra.mxu0 0.0
    %1193 = vmatprep.subr.mxu0 0.0
    %1194 = vmatpush2.xpose.msra.mxu0 0.0
    %1195 = vmatprep.subr.mxu0 0.0
    %1196 = vmatpush2.xpose.msra.mxu0 0.0
    %1197 = vmatprep.subr.mxu0 0.0
    %1198 = vmatpush2.xpose.msra.mxu0 0.0
    %1199 = vmatprep.subr.mxu0 0.0
    %1200 = vmatpush2.xpose.msra.mxu0 0.0
    %1201 = vmatprep.subr.mxu0 0.0
    %1202 = vmatpush2.xpose.msra.mxu0 0.0
    %1203 = vmatprep.subr.mxu0 0.0
    %1204 = vmatpush2.xpose.msra.mxu0 0.0
    %1205 = vmatprep.subr.mxu0 0.0
    %1206 = vmatpush2.xpose.msra.mxu0 0.0
    %1207 = vmatprep.subr.mxu0 0.0
    %1208 = vmatpush2.xpose.msra.mxu0 0.0
    %1209 = vmatprep.subr.mxu0 0.0
    %1210 = vmatpush2.xpose.msra.mxu0 0.0
    %1211 = vmatprep.subr.mxu0 0.0
    %1212 = vmatpush2.xpose.msra.mxu0 0.0
    %1213 = vmatprep.subr.mxu0 0.0
    %1214 = vmatpush2.xpose.msra.mxu0 0.0
    %1215 = vmatprep.subr.mxu0 0.0
    %1216 = vmatpush2.xpose.msra.mxu0 0.0
    %1217 = vmatprep.subr.mxu0 0.0
    %1218 = vmatpush2.xpose.msra.mxu0 0.0
    %1219 = vmatprep.subr.mxu0 0.0
    %1220 = vmatpush2.xpose.msra.mxu0 0.0
    %1221 = vmatprep.subr.mxu0 0.0
    %1222 = vmatpush2.xpose.msra.mxu0 0.0
    %1223 = vmatprep.mubr.f32.mxu0 1.0
    %1224 = vmatmul.mubr.f32.gmra.mxu0 1.0
    %v1225 = vpop.f32.mrf.mxu0
    %v1226 = vadd.f32 0.0, %v1225
    %v1227 = vpop.f32.mrf.mxu0
    %1228 = vdwg.mxu0
    %v1229 = vlaneseq
    %v1230 = vshrl.u32 %v1229, 7
    %v1231 = vsub.s32 0, %v1230
    %v1232 = vrot.slane %v1226, %v1231
    %v1233 = vmul.f32 %v1232, %v33
    %v1234 = vmul.f32 %v1232, %v34
    %v1235 = vmul.f32 %v1232, %v35
    %v1236 = vmul.f32 %v1232, %v36
    %v1237 = vmul.f32 %v1232, %v37
    %v1238 = vmul.f32 %v1232, %v38
    %v1239 = vmul.f32 %v1232, %v39
    %v1240 = vmul.f32 %v1232, %v40
    %v1241 = vmul.f32 %v1232, %v41
    %v1242 = vmul.f32 %v1232, %v42
    %v1243 = vmul.f32 %v1232, %v43
    %v1244 = vmul.f32 %v1232, %v44
    %v1245 = vmul.f32 %v1232, %v45
    %v1246 = vmul.f32 %v1232, %v46
    %v1247 = vmul.f32 %v1232, %v47
    %v1248 = vmul.f32 %v1232, %v48
    %v1249 = vsub.f32 %v1081, %v1233
    %v1250 = vsub.f32 %v1086, %v1234
    %v1251 = vsub.f32 %v1091, %v1235
    %v1252 = vsub.f32 %v1096, %v1236
    %v1253 = vsub.f32 %v1101, %v1237
    %v1254 = vsub.f32 %v1106, %v1238
    %v1255 = vsub.f32 %v1111, %v1239
    %v1256 = vsub.f32 %v1116, %v1240
    %v1257 = vsub.f32 %v1121, %v1241
    %v1258 = vsub.f32 %v1126, %v1242
    %v1259 = vsub.f32 %v1131, %v1243
    %v1260 = vsub.f32 %v1136, %v1244
    %v1261 = vsub.f32 %v1141, %v1245
    %v1262 = vsub.f32 %v1146, %v1246
    %v1263 = vsub.f32 %v1151, %v1247
    %v1264 = vsub.f32 %v1156, %v1248
    %v1265 = vmul.f32 %v1249, %v1249
    %v1266 = vmul.f32 %v1250, %v1250
    %v1267 = vmul.f32 %v1251, %v1251
    %v1268 = vmul.f32 %v1252, %v1252
    %v1269 = vmul.f32 %v1253, %v1253
    %v1270 = vmul.f32 %v1254, %v1254
    %v1271 = vmul.f32 %v1255, %v1255
    %v1272 = vmul.f32 %v1256, %v1256
    %v1273 = vmul.f32 %v1257, %v1257
    %v1274 = vmul.f32 %v1258, %v1258
    %v1275 = vmul.f32 %v1259, %v1259
    %v1276 = vmul.f32 %v1260, %v1260
    %v1277 = vmul.f32 %v1261, %v1261
    %v1278 = vmul.f32 %v1262, %v1262
    %v1279 = vmul.f32 %v1263, %v1263
    %v1280 = vmul.f32 %v1264, %v1264
    %v1281 = vsel %vm598, %v1265, 0.0
    %v1282 = vsel %vm598, %v1266, 0.0
    %v1283 = vadd.f32 %v1281, %v1282
    %v1284 = vsel %vm598, %v1267, 0.0
    %v1285 = vadd.f32 %v1283, %v1284
    %v1286 = vsel %vm598, %v1268, 0.0
    %v1287 = vadd.f32 %v1285, %v1286
    %v1288 = vsel %vm598, %v1269, 0.0
    %v1289 = vadd.f32 %v1287, %v1288
    %v1290 = vsel %vm598, %v1270, 0.0
    %v1291 = vadd.f32 %v1289, %v1290
    %v1292 = vsel %vm598, %v1271, 0.0
    %v1293 = vadd.f32 %v1291, %v1292
    %v1294 = vsel %vm598, %v1272, 0.0
    %v1295 = vadd.f32 %v1293, %v1294
    %v1296 = vsel %vm598, %v1273, 0.0
    %v1297 = vadd.f32 %v1295, %v1296
    %v1298 = vsel %vm598, %v1274, 0.0
    %v1299 = vadd.f32 %v1297, %v1298
    %v1300 = vsel %vm598, %v1275, 0.0
    %v1301 = vadd.f32 %v1299, %v1300
    %v1302 = vsel %vm598, %v1276, 0.0
    %v1303 = vadd.f32 %v1301, %v1302
    %v1304 = vsel %vm598, %v1277, 0.0
    %v1305 = vadd.f32 %v1303, %v1304
    %v1306 = vsel %vm598, %v1278, 0.0
    %v1307 = vadd.f32 %v1305, %v1306
    %v1308 = vsel %vm598, %v1279, 0.0
    %v1309 = vadd.f32 %v1307, %v1308
    %v1310 = vsel %vm598, %v1280, 0.0
    %v1311 = vadd.f32 %v1309, %v1310
    %v1312 = vrot.slane %v1311, 4
    %v1313 = vadd.f32 %v1311, %v1312
    %v1314 = vrot.slane %v1313, 2
    %v1315 = vadd.f32 %v1313, %v1314
    %v1316 = vrot.slane %v1315, 1
    %v1317 = vadd.f32 %v1315, %v1316
    %v1318 = vmax.f32 %v1317, 1e-24
    %v1319 = vrsqrt.pop %v1318
    %v1320 = vmul.f32 %v1249, %v1319
    %v1321 = vmul.f32 %v1250, %v1319
    %v1322 = vmul.f32 %v1251, %v1319
    %v1323 = vmul.f32 %v1252, %v1319
    %v1324 = vmul.f32 %v1253, %v1319
    %v1325 = vmul.f32 %v1254, %v1319
    %v1326 = vmul.f32 %v1255, %v1319
    %v1327 = vmul.f32 %v1256, %v1319
    %v1328 = vmul.f32 %v1257, %v1319
    %v1329 = vmul.f32 %v1258, %v1319
    %v1330 = vmul.f32 %v1259, %v1319
    %v1331 = vmul.f32 %v1260, %v1319
    %v1332 = vmul.f32 %v1261, %v1319
    %v1333 = vmul.f32 %v1262, %v1319
    %v1334 = vmul.f32 %v1263, %v1319
    %v1335 = vmul.f32 %v1264, %v1319
    %v1336 = vmul.f32 %v1320, %v1320
    %v1337 = vmul.f32 %v1321, %v1321
    %v1338 = vmul.f32 %v1322, %v1322
    %v1339 = vmul.f32 %v1323, %v1323
    %v1340 = vmul.f32 %v1324, %v1324
    %v1341 = vmul.f32 %v1325, %v1325
    %v1342 = vmul.f32 %v1326, %v1326
    %v1343 = vmul.f32 %v1327, %v1327
    %v1344 = vmul.f32 %v1328, %v1328
    %v1345 = vmul.f32 %v1329, %v1329
    %v1346 = vmul.f32 %v1330, %v1330
    %v1347 = vmul.f32 %v1331, %v1331
    %v1348 = vmul.f32 %v1332, %v1332
    %v1349 = vmul.f32 %v1333, %v1333
    %v1350 = vmul.f32 %v1334, %v1334
    %v1351 = vmul.f32 %v1335, %v1335
    %v1352 = vsel %vm598, %v1336, 0.0
    %v1353 = vsel %vm598, %v1337, 0.0
    %v1354 = vadd.f32 %v1352, %v1353
    %v1355 = vsel %vm598, %v1338, 0.0
    %v1356 = vadd.f32 %v1354, %v1355
    %v1357 = vsel %vm598, %v1339, 0.0
    %v1358 = vadd.f32 %v1356, %v1357
    %v1359 = vsel %vm598, %v1340, 0.0
    %v1360 = vadd.f32 %v1358, %v1359
    %v1361 = vsel %vm598, %v1341, 0.0
    %v1362 = vadd.f32 %v1360, %v1361
    %v1363 = vsel %vm598, %v1342, 0.0
    %v1364 = vadd.f32 %v1362, %v1363
    %v1365 = vsel %vm598, %v1343, 0.0
    %v1366 = vadd.f32 %v1364, %v1365
    %v1367 = vsel %vm598, %v1344, 0.0
    %v1368 = vadd.f32 %v1366, %v1367
    %v1369 = vsel %vm598, %v1345, 0.0
    %v1370 = vadd.f32 %v1368, %v1369
    %v1371 = vsel %vm598, %v1346, 0.0
    %v1372 = vadd.f32 %v1370, %v1371
    %v1373 = vsel %vm598, %v1347, 0.0
    %v1374 = vadd.f32 %v1372, %v1373
    %v1375 = vsel %vm598, %v1348, 0.0
    %v1376 = vadd.f32 %v1374, %v1375
    %v1377 = vsel %vm598, %v1349, 0.0
    %v1378 = vadd.f32 %v1376, %v1377
    %v1379 = vsel %vm598, %v1350, 0.0
    %v1380 = vadd.f32 %v1378, %v1379
    %v1381 = vsel %vm598, %v1351, 0.0
    %v1382 = vadd.f32 %v1380, %v1381
    %v1383 = vrot.slane %v1382, 4
    %v1384 = vadd.f32 %v1382, %v1383
    %v1385 = vrot.slane %v1384, 2
    %v1386 = vadd.f32 %v1384, %v1385
    %v1387 = vrot.slane %v1386, 1
    %v1388 = vadd.f32 %v1386, %v1387
    %v1389 = vsel %vm598, %v1388, 0.0
    %1390 = vadd.xlane.f32.xlu0 %v1389
    %v1391 = vpop.xlane.xlu0 %1390
    %v1392 = vmax.f32 %v1391, 1e-24
    %v1393 = vrsqrt.pop %v1392
    %v1394 = vmul.f32 %v1320, %v1393
    %v1395 = vmul.f32 %v1321, %v1393
    %v1396 = vmul.f32 %v1322, %v1393
    %v1397 = vmul.f32 %v1323, %v1393
    %v1398 = vmul.f32 %v1324, %v1393
    %v1399 = vmul.f32 %v1325, %v1393
    %v1400 = vmul.f32 %v1326, %v1393
    %v1401 = vmul.f32 %v1327, %v1393
    %v1402 = vmul.f32 %v1328, %v1393
    %v1403 = vmul.f32 %v1329, %v1393
    %v1404 = vmul.f32 %v1330, %v1393
    %v1405 = vmul.f32 %v1331, %v1393
    %v1406 = vmul.f32 %v1332, %v1393
    %v1407 = vmul.f32 %v1333, %v1393
    %v1408 = vmul.f32 %v1334, %v1393
    %v1409 = vmul.f32 %v1335, %v1393
    %s1410 = scalar_lea.vmem %s4, 128
    %1411 = vst.msk [vmem:[%s1410] sm:$0xff] %vm598, %v1394
    %1412 = vst.msk [vmem:[%s1410 + $0x8] sm:$0xff] %vm598, %v1395
    %1413 = vst.msk [vmem:[%s1410 + $0x10] sm:$0xff] %vm598, %v1396
    %1414 = vst.msk [vmem:[%s1410 + $0x18] sm:$0xff] %vm598, %v1397
    %1415 = vst.msk [vmem:[%s1410 + $0x20] sm:$0xff] %vm598, %v1398
    %1416 = vst.msk [vmem:[%s1410 + $0x28] sm:$0xff] %vm598, %v1399
    %1417 = vst.msk [vmem:[%s1410 + $0x30] sm:$0xff] %vm598, %v1400
    %1418 = vst.msk [vmem:[%s1410 + $0x38] sm:$0xff] %vm598, %v1401
    %1419 = vst.msk [vmem:[%s1410 + $0x40] sm:$0xff] %vm598, %v1402
    %1420 = vst.msk [vmem:[%s1410 + $0x48] sm:$0xff] %vm598, %v1403
    %1421 = vst.msk [vmem:[%s1410 + $0x50] sm:$0xff] %vm598, %v1404
    %1422 = vst.msk [vmem:[%s1410 + $0x58] sm:$0xff] %vm598, %v1405
    %1423 = vst.msk [vmem:[%s1410 + $0x60] sm:$0xff] %vm598, %v1406
    %1424 = vst.msk [vmem:[%s1410 + $0x68] sm:$0xff] %vm598, %v1407
    %1425 = vst.msk [vmem:[%s1410 + $0x70] sm:$0xff] %vm598, %v1408
    %1426 = vst.msk [vmem:[%s1410 + $0x78] sm:$0xff] %vm598, %v1409
    %s1427 = scalar_lea.vmem [#allocation2], 512
    %v1428 = vld [vmem:[%s1427] sm:$0xff]
    %v1429 = vld [vmem:[%s1427 + $0x8] sm:$0xff]
    %v1430 = vld [vmem:[%s1427 + $0x10] sm:$0xff]
    %v1431 = vld [vmem:[%s1427 + $0x18] sm:$0xff]
    %v1432 = vld [vmem:[%s1427 + $0x20] sm:$0xff]
    %v1433 = vld [vmem:[%s1427 + $0x28] sm:$0xff]
    %v1434 = vld [vmem:[%s1427 + $0x30] sm:$0xff]
    %v1435 = vld [vmem:[%s1427 + $0x38] sm:$0xff]
    %v1436 = vld [vmem:[%s1427 + $0x40] sm:$0xff]
    %v1437 = vld [vmem:[%s1427 + $0x48] sm:$0xff]
    %v1438 = vld [vmem:[%s1427 + $0x50] sm:$0xff]
    %v1439 = vld [vmem:[%s1427 + $0x58] sm:$0xff]
    %v1440 = vld [vmem:[%s1427 + $0x60] sm:$0xff]
    %v1441 = vld [vmem:[%s1427 + $0x68] sm:$0xff]
    %v1442 = vld [vmem:[%s1427 + $0x70] sm:$0xff]
    %v1443 = vld [vmem:[%s1427 + $0x78] sm:$0xff]
    %v1444 = vld [vmem:[%s1427 + $0x80] sm:$0xff]
    %v1445 = vld [vmem:[%s1427 + $0x88] sm:$0xff]
    %v1446 = vld [vmem:[%s1427 + $0x90] sm:$0xff]
    %v1447 = vld [vmem:[%s1427 + $0x98] sm:$0xff]
    %v1448 = vld [vmem:[%s1427 + $0xa0] sm:$0xff]
    %v1449 = vld [vmem:[%s1427 + $0xa8] sm:$0xff]
    %v1450 = vld [vmem:[%s1427 + $0xb0] sm:$0xff]
    %v1451 = vld [vmem:[%s1427 + $0xb8] sm:$0xff]
    %v1452 = vld [vmem:[%s1427 + $0xc0] sm:$0xff]
    %v1453 = vld [vmem:[%s1427 + $0xc8] sm:$0xff]
    %v1454 = vld [vmem:[%s1427 + $0xd0] sm:$0xff]
    %v1455 = vld [vmem:[%s1427 + $0xd8] sm:$0xff]
    %v1456 = vld [vmem:[%s1427 + $0xe0] sm:$0xff]
    %v1457 = vld [vmem:[%s1427 + $0xe8] sm:$0xff]
    %v1458 = vld [vmem:[%s1427 + $0xf0] sm:$0xff]
    %v1459 = vld [vmem:[%s1427 + $0xf8] sm:$0xff]
    %v1460 = vmul.f32 %v1428, %v1428
    %v1461 = vmul.f32 %v1429, %v1429
    %v1462 = vmul.f32 %v1430, %v1430
    %v1463 = vmul.f32 %v1431, %v1431
    %v1464 = vmul.f32 %v1432, %v1432
    %v1465 = vmul.f32 %v1433, %v1433
    %v1466 = vmul.f32 %v1434, %v1434
    %v1467 = vmul.f32 %v1435, %v1435
    %v1468 = vmul.f32 %v1436, %v1436
    %v1469 = vmul.f32 %v1437, %v1437
    %v1470 = vmul.f32 %v1438, %v1438
    %v1471 = vmul.f32 %v1439, %v1439
    %v1472 = vmul.f32 %v1440, %v1440
    %v1473 = vmul.f32 %v1441, %v1441
    %v1474 = vmul.f32 %v1442, %v1442
    %v1475 = vmul.f32 %v1443, %v1443
    %v1476 = vmul.f32 %v1444, %v1444
    %v1477 = vmul.f32 %v1445, %v1445
    %v1478 = vmul.f32 %v1446, %v1446
    %v1479 = vmul.f32 %v1447, %v1447
    %v1480 = vmul.f32 %v1448, %v1448
    %v1481 = vmul.f32 %v1449, %v1449
    %v1482 = vmul.f32 %v1450, %v1450
    %v1483 = vmul.f32 %v1451, %v1451
    %v1484 = vmul.f32 %v1452, %v1452
    %v1485 = vmul.f32 %v1453, %v1453
    %v1486 = vmul.f32 %v1454, %v1454
    %v1487 = vmul.f32 %v1455, %v1455
    %v1488 = vmul.f32 %v1456, %v1456
    %v1489 = vmul.f32 %v1457, %v1457
    %v1490 = vmul.f32 %v1458, %v1458
    %v1491 = vmul.f32 %v1459, %v1459
    %v1492 = vadd.f32 %v1460, %v1462
    %v1493 = vadd.f32 %v1492, %v1464
    %v1494 = vadd.f32 %v1493, %v1466
    %v1495 = vadd.f32 %v1494, %v1468
    %v1496 = vadd.f32 %v1495, %v1470
    %v1497 = vadd.f32 %v1496, %v1472
    %v1498 = vadd.f32 %v1497, %v1474
    %v1499 = vadd.f32 %v1498, %v1476
    %v1500 = vadd.f32 %v1499, %v1478
    %v1501 = vadd.f32 %v1500, %v1480
    %v1502 = vadd.f32 %v1501, %v1482
    %v1503 = vadd.f32 %v1502, %v1484
    %v1504 = vadd.f32 %v1503, %v1486
    %v1505 = vadd.f32 %v1504, %v1488
    %v1506 = vadd.f32 %v1505, %v1490
    %v1507 = vrot.slane %v1506, 4
    %v1508 = vadd.f32 %v1506, %v1507
    %v1509 = vrot.slane %v1508, 2
    %v1510 = vadd.f32 %v1508, %v1509
    %v1511 = vrot.slane %v1510, 1
    %v1512 = vadd.f32 %v1510, %v1511
    %v1513 = vadd.f32 %v1461, %v1463
    %v1514 = vadd.f32 %v1513, %v1465
    %v1515 = vadd.f32 %v1514, %v1467
    %v1516 = vadd.f32 %v1515, %v1469
    %v1517 = vadd.f32 %v1516, %v1471
    %v1518 = vadd.f32 %v1517, %v1473
    %v1519 = vadd.f32 %v1518, %v1475
    %v1520 = vadd.f32 %v1519, %v1477
    %v1521 = vadd.f32 %v1520, %v1479
    %v1522 = vadd.f32 %v1521, %v1481
    %v1523 = vadd.f32 %v1522, %v1483
    %v1524 = vadd.f32 %v1523, %v1485
    %v1525 = vadd.f32 %v1524, %v1487
    %v1526 = vadd.f32 %v1525, %v1489
    %v1527 = vadd.f32 %v1526, %v1491
    %v1528 = vrot.slane %v1527, 4
    %v1529 = vadd.f32 %v1527, %v1528
    %v1530 = vrot.slane %v1529, 2
    %v1531 = vadd.f32 %v1529, %v1530
    %v1532 = vrot.slane %v1531, 1
    %v1533 = vadd.f32 %v1531, %v1532
    %v1534 = vmax.f32 %v1512, 1e-24
    %v1535 = vmax.f32 %v1533, 1e-24
    %v1536 = vrsqrt.pop %v1534
    %v1537 = vrsqrt.pop %v1535
    %v1538 = vmul.f32 %v1428, %v1536
    %v1539 = vmul.f32 %v1429, %v1537
    %v1540 = vmul.f32 %v1430, %v1536
    %v1541 = vmul.f32 %v1431, %v1537
    %v1542 = vmul.f32 %v1432, %v1536
    %v1543 = vmul.f32 %v1433, %v1537
    %v1544 = vmul.f32 %v1434, %v1536
    %v1545 = vmul.f32 %v1435, %v1537
    %v1546 = vmul.f32 %v1436, %v1536
    %v1547 = vmul.f32 %v1437, %v1537
    %v1548 = vmul.f32 %v1438, %v1536
    %v1549 = vmul.f32 %v1439, %v1537
    %v1550 = vmul.f32 %v1440, %v1536
    %v1551 = vmul.f32 %v1441, %v1537
    %v1552 = vmul.f32 %v1442, %v1536
    %v1553 = vmul.f32 %v1443, %v1537
    %v1554 = vmul.f32 %v1444, %v1536
    %v1555 = vmul.f32 %v1445, %v1537
    %v1556 = vmul.f32 %v1446, %v1536
    %v1557 = vmul.f32 %v1447, %v1537
    %v1558 = vmul.f32 %v1448, %v1536
    %v1559 = vmul.f32 %v1449, %v1537
    %v1560 = vmul.f32 %v1450, %v1536
    %v1561 = vmul.f32 %v1451, %v1537
    %v1562 = vmul.f32 %v1452, %v1536
    %v1563 = vmul.f32 %v1453, %v1537
    %v1564 = vmul.f32 %v1454, %v1536
    %v1565 = vmul.f32 %v1455, %v1537
    %v1566 = vmul.f32 %v1456, %v1536
    %v1567 = vmul.f32 %v1457, %v1537
    %v1568 = vmul.f32 %v1458, %v1536
    %v1569 = vmul.f32 %v1459, %v1537
    %1570 = vmatprep.subr.mxu0 %v1569
    %1571 = vmatpush1.msra.mxu0 %v1568
    %1572 = vmatprep.subr.mxu0 %v1567
    %1573 = vmatpush1.msra.mxu0 %v1566
    %1574 = vmatprep.subr.mxu0 %v1565
    %1575 = vmatpush1.msra.mxu0 %v1564
    %1576 = vmatprep.subr.mxu0 %v1563
    %1577 = vmatpush1.msra.mxu0 %v1562
    %1578 = vmatprep.subr.mxu0 %v1561
    %1579 = vmatpush1.msra.mxu0 %v1560
    %1580 = vmatprep.subr.mxu0 %v1559
    %1581 = vmatpush1.msra.mxu0 %v1558
    %1582 = vmatprep.subr.mxu0 %v1557
    %1583 = vmatpush1.msra.mxu0 %v1556
    %1584 = vmatprep.subr.mxu0 %v1555
    %1585 = vmatpush1.msra.mxu0 %v1554
    %1586 = vmatprep.subr.mxu0 %v1553
    %1587 = vmatpush1.msra.mxu0 %v1552
    %1588 = vmatprep.subr.mxu0 %v1551
    %1589 = vmatpush1.msra.mxu0 %v1550
    %1590 = vmatprep.subr.mxu0 %v1549
    %1591 = vmatpush1.msra.mxu0 %v1548
    %1592 = vmatprep.subr.mxu0 %v1547
    %1593 = vmatpush1.msra.mxu0 %v1546
    %1594 = vmatprep.subr.mxu0 %v1545
    %1595 = vmatpush1.msra.mxu0 %v1544
    %1596 = vmatprep.subr.mxu0 %v1543
    %1597 = vmatpush1.msra.mxu0 %v1542
    %1598 = vmatprep.subr.mxu0 %v1541
    %1599 = vmatpush1.msra.mxu0 %v1540
    %1600 = vmatprep.subr.mxu0 %v1539
    %1601 = vmatpush1.msra.mxu0 %v1538
    %1602 = vmatprep.subr.mxu0 0.0
    %1603 = vmatpush2.msra.mxu0 0.0
    %1604 = vmatprep.subr.mxu0 0.0
    %1605 = vmatpush2.msra.mxu0 0.0
    %1606 = vmatprep.subr.mxu0 0.0
    %1607 = vmatpush2.msra.mxu0 0.0
    %1608 = vmatprep.subr.mxu0 0.0
    %1609 = vmatpush2.msra.mxu0 0.0
    %1610 = vmatprep.subr.mxu0 0.0
    %1611 = vmatpush2.msra.mxu0 0.0
    %1612 = vmatprep.subr.mxu0 0.0
    %1613 = vmatpush2.msra.mxu0 0.0
    %1614 = vmatprep.subr.mxu0 0.0
    %1615 = vmatpush2.msra.mxu0 0.0
    %1616 = vmatprep.subr.mxu0 0.0
    %1617 = vmatpush2.msra.mxu0 0.0
    %1618 = vmatprep.subr.mxu0 0.0
    %1619 = vmatpush2.msra.mxu0 0.0
    %1620 = vmatprep.subr.mxu0 0.0
    %1621 = vmatpush2.msra.mxu0 0.0
    %1622 = vmatprep.subr.mxu0 0.0
    %1623 = vmatpush2.msra.mxu0 0.0
    %1624 = vmatprep.subr.mxu0 0.0
    %1625 = vmatpush2.msra.mxu0 0.0
    %1626 = vmatprep.subr.mxu0 0.0
    %1627 = vmatpush2.msra.mxu0 0.0
    %1628 = vmatprep.subr.mxu0 0.0
    %1629 = vmatpush2.msra.mxu0 0.0
    %1630 = vmatprep.subr.mxu0 0.0
    %1631 = vmatpush2.msra.mxu0 0.0
    %1632 = vmatprep.subr.mxu0 0.0
    %1633 = vmatpush2.msra.mxu0 0.0
    %1634 = vmatprep.mubr.f32.mxu0 0.0
    %1635 = vmatmul.mubr.f32.gmra.mxu0 %v31
    %v1636 = vpop.f32.mrf.mxu0
    %v1637 = vadd.f32 %v54, %v1636
    %v1638 = vpop.f32.mrf.mxu0
    %v1639 = vadd.f32 %v54, %v1638
    %1640 = vmatprep.mubr.f32.mxu0 0.0
    %1641 = vmatmul.mubr.f32.gmra.mxu0 %v32
    %v1642 = vpop.f32.mrf.mxu0
    %v1643 = vadd.f32 %v59, %v1642
    %v1644 = vpop.f32.mrf.mxu0
    %v1645 = vadd.f32 %v59, %v1644
    %1646 = vdwg.mxu0
    %v1647 = vsel %vm280, %v1643, -inf
    %v1648 = vmax.f32 %v1637, %v1647
    %v1649 = vrot.slane %v1648, 4
    %v1650 = vmax.f32 %v1648, %v1649
    %v1651 = vrot.slane %v1650, 2
    %v1652 = vmax.f32 %v1650, %v1651
    %v1653 = vrot.slane %v1652, 1
    %v1654 = vmax.f32 %v1652, %v1653
    %v1655 = vsel %vm280, %v1645, -inf
    %v1656 = vmax.f32 %v1639, %v1655
    %v1657 = vrot.slane %v1656, 4
    %v1658 = vmax.f32 %v1656, %v1657
    %v1659 = vrot.slane %v1658, 2
    %v1660 = vmax.f32 %v1658, %v1659
    %v1661 = vrot.slane %v1660, 1
    %v1662 = vmax.f32 %v1660, %v1661
    %v1663 = vsub.f32 %v1637, %v1654
    %v1664 = vsub.f32 %v1639, %v1662
    %v1665 = vsub.f32 %v1643, %v1654
    %v1666 = vsub.f32 %v1645, %v1662
    %v1667 = vmul.f32 %v1663, 1.442695
    %v1668 = vpow.pop %v1667
    %v1669 = vmul.f32 %v1664, 1.442695
    %v1670 = vpow.pop %v1669
    %v1671 = vmul.f32 %v1665, 1.442695
    %v1672 = vpow.pop %v1671
    %v1673 = vmul.f32 %v1666, 1.442695
    %v1674 = vpow.pop %v1673
    %v1675 = vsel %vm280, %v1672, 0.0
    %v1676 = vadd.f32 %v1668, %v1675
    %v1677 = vrot.slane %v1676, 4
    %v1678 = vadd.f32 %v1676, %v1677
    %v1679 = vrot.slane %v1678, 2
    %v1680 = vadd.f32 %v1678, %v1679
    %v1681 = vrot.slane %v1680, 1
    %v1682 = vadd.f32 %v1680, %v1681
    %v1683 = vsel %vm280, %v1674, 0.0
    %v1684 = vadd.f32 %v1670, %v1683
    %v1685 = vrot.slane %v1684, 4
    %v1686 = vadd.f32 %v1684, %v1685
    %v1687 = vrot.slane %v1686, 2
    %v1688 = vadd.f32 %v1686, %v1687
    %v1689 = vrot.slane %v1688, 1
    %v1690 = vadd.f32 %v1688, %v1689
    %v1691 = vrcp.pop %v1682
    %v1692 = vmul.f32 1.0, %v1691
    %v1693 = vrcp.pop %v1690
    %v1694 = vmul.f32 1.0, %v1693
    %v1695 = vmul.f32 %v1668, %v1692
    %v1696 = vmul.f32 %v1670, %v1694
    %1697 = vmatprep.subr.mxu0 0.0
    %1698 = vmatpush1.xpose.msra.mxu0 0.0
    %1699 = vmatprep.subr.mxu0 0.0
    %1700 = vmatpush1.xpose.msra.mxu0 0.0
    %1701 = vmatprep.subr.mxu0 0.0
    %1702 = vmatpush1.xpose.msra.mxu0 0.0
    %1703 = vmatprep.subr.mxu0 0.0
    %1704 = vmatpush1.xpose.msra.mxu0 0.0
    %1705 = vmatprep.subr.mxu0 0.0
    %1706 = vmatpush1.xpose.msra.mxu0 0.0
    %1707 = vmatprep.subr.mxu0 0.0
    %1708 = vmatpush1.xpose.msra.mxu0 0.0
    %1709 = vmatprep.subr.mxu0 0.0
    %1710 = vmatpush1.xpose.msra.mxu0 0.0
    %1711 = vmatprep.subr.mxu0 0.0
    %1712 = vmatpush1.xpose.msra.mxu0 0.0
    %1713 = vmatprep.subr.mxu0 0.0
    %1714 = vmatpush1.xpose.msra.mxu0 0.0
    %1715 = vmatprep.subr.mxu0 0.0
    %1716 = vmatpush1.xpose.msra.mxu0 0.0
    %1717 = vmatprep.subr.mxu0 0.0
    %1718 = vmatpush1.xpose.msra.mxu0 0.0
    %1719 = vmatprep.subr.mxu0 0.0
    %1720 = vmatpush1.xpose.msra.mxu0 0.0
    %1721 = vmatprep.subr.mxu0 0.0
    %1722 = vmatpush1.xpose.msra.mxu0 0.0
    %1723 = vmatprep.subr.mxu0 0.0
    %1724 = vmatpush1.xpose.msra.mxu0 0.0
    %1725 = vmatprep.subr.mxu0 0.0
    %1726 = vmatpush1.xpose.msra.mxu0 0.0
    %1727 = vmatprep.subr.mxu0 %v1696
    %1728 = vmatpush1.xpose.msra.mxu0 %v1695
    %1729 = vmatprep.subr.mxu0 0.0
    %1730 = vmatpush2.xpose.msra.mxu0 0.0
    %1731 = vmatprep.subr.mxu0 0.0
    %1732 = vmatpush2.xpose.msra.mxu0 0.0
    %1733 = vmatprep.subr.mxu0 0.0
    %1734 = vmatpush2.xpose.msra.mxu0 0.0
    %1735 = vmatprep.subr.mxu0 0.0
    %1736 = vmatpush2.xpose.msra.mxu0 0.0
    %1737 = vmatprep.subr.mxu0 0.0
    %1738 = vmatpush2.xpose.msra.mxu0 0.0
    %1739 = vmatprep.subr.mxu0 0.0
    %1740 = vmatpush2.xpose.msra.mxu0 0.0
    %1741 = vmatprep.subr.mxu0 0.0
    %1742 = vmatpush2.xpose.msra.mxu0 0.0
    %1743 = vmatprep.subr.mxu0 0.0
    %1744 = vmatpush2.xpose.msra.mxu0 0.0
    %1745 = vmatprep.subr.mxu0 0.0
    %1746 = vmatpush2.xpose.msra.mxu0 0.0
    %1747 = vmatprep.subr.mxu0 0.0
    %1748 = vmatpush2.xpose.msra.mxu0 0.0
    %1749 = vmatprep.subr.mxu0 0.0
    %1750 = vmatpush2.xpose.msra.mxu0 0.0
    %1751 = vmatprep.subr.mxu0 0.0
    %1752 = vmatpush2.xpose.msra.mxu0 0.0
    %1753 = vmatprep.subr.mxu0 0.0
    %1754 = vmatpush2.xpose.msra.mxu0 0.0
    %1755 = vmatprep.subr.mxu0 0.0
    %1756 = vmatpush2.xpose.msra.mxu0 0.0
    %1757 = vmatprep.subr.mxu0 0.0
    %1758 = vmatpush2.xpose.msra.mxu0 0.0
    %1759 = vmatprep.subr.mxu0 0.0
    %1760 = vmatpush2.xpose.msra.mxu0 0.0
    %1761 = vmatprep.mubr.f32.mxu0 %v1539
    %1762 = vmatmul.mubr.f32.gmra.mxu0 %v1538
    %v1763 = vpop.f32.mrf.mxu0
    %v1764 = vadd.f32 0.0, %v1763
    %v1765 = vpop.f32.mrf.mxu0
    %1766 = vmatprep.mubr.f32.mxu0 %v1541
    %1767 = vmatmul.mubr.f32.gmra.mxu0 %v1540
    %v1768 = vpop.f32.mrf.mxu0
    %v1769 = vadd.f32 0.0, %v1768
    %v1770 = vpop.f32.mrf.mxu0
    %1771 = vmatprep.mubr.f32.mxu0 %v1543
    %1772 = vmatmul.mubr.f32.gmra.mxu0 %v1542
    %v1773 = vpop.f32.mrf.mxu0
    %v1774 = vadd.f32 0.0, %v1773
    %v1775 = vpop.f32.mrf.mxu0
    %1776 = vmatprep.mubr.f32.mxu0 %v1545
    %1777 = vmatmul.mubr.f32.gmra.mxu0 %v1544
    %v1778 = vpop.f32.mrf.mxu0
    %v1779 = vadd.f32 0.0, %v1778
    %v1780 = vpop.f32.mrf.mxu0
    %1781 = vmatprep.mubr.f32.mxu0 %v1547
    %1782 = vmatmul.mubr.f32.gmra.mxu0 %v1546
    %v1783 = vpop.f32.mrf.mxu0
    %v1784 = vadd.f32 0.0, %v1783
    %v1785 = vpop.f32.mrf.mxu0
    %1786 = vmatprep.mubr.f32.mxu0 %v1549
    %1787 = vmatmul.mubr.f32.gmra.mxu0 %v1548
    %v1788 = vpop.f32.mrf.mxu0
    %v1789 = vadd.f32 0.0, %v1788
    %v1790 = vpop.f32.mrf.mxu0
    %1791 = vmatprep.mubr.f32.mxu0 %v1551
    %1792 = vmatmul.mubr.f32.gmra.mxu0 %v1550
    %v1793 = vpop.f32.mrf.mxu0
    %v1794 = vadd.f32 0.0, %v1793
    %v1795 = vpop.f32.mrf.mxu0
    %1796 = vmatprep.mubr.f32.mxu0 %v1553
    %1797 = vmatmul.mubr.f32.gmra.mxu0 %v1552
    %v1798 = vpop.f32.mrf.mxu0
    %v1799 = vadd.f32 0.0, %v1798
    %v1800 = vpop.f32.mrf.mxu0
    %1801 = vmatprep.mubr.f32.mxu0 %v1555
    %1802 = vmatmul.mubr.f32.gmra.mxu0 %v1554
    %v1803 = vpop.f32.mrf.mxu0
    %v1804 = vadd.f32 0.0, %v1803
    %v1805 = vpop.f32.mrf.mxu0
    %1806 = vmatprep.mubr.f32.mxu0 %v1557
    %1807 = vmatmul.mubr.f32.gmra.mxu0 %v1556
    %v1808 = vpop.f32.mrf.mxu0
    %v1809 = vadd.f32 0.0, %v1808
    %v1810 = vpop.f32.mrf.mxu0
    %1811 = vmatprep.mubr.f32.mxu0 %v1559
    %1812 = vmatmul.mubr.f32.gmra.mxu0 %v1558
    %v1813 = vpop.f32.mrf.mxu0
    %v1814 = vadd.f32 0.0, %v1813
    %v1815 = vpop.f32.mrf.mxu0
    %1816 = vmatprep.mubr.f32.mxu0 %v1561
    %1817 = vmatmul.mubr.f32.gmra.mxu0 %v1560
    %v1818 = vpop.f32.mrf.mxu0
    %v1819 = vadd.f32 0.0, %v1818
    %v1820 = vpop.f32.mrf.mxu0
    %1821 = vmatprep.mubr.f32.mxu0 %v1563
    %1822 = vmatmul.mubr.f32.gmra.mxu0 %v1562
    %v1823 = vpop.f32.mrf.mxu0
    %v1824 = vadd.f32 0.0, %v1823
    %v1825 = vpop.f32.mrf.mxu0
    %1826 = vmatprep.mubr.f32.mxu0 %v1565
    %1827 = vmatmul.mubr.f32.gmra.mxu0 %v1564
    %v1828 = vpop.f32.mrf.mxu0
    %v1829 = vadd.f32 0.0, %v1828
    %v1830 = vpop.f32.mrf.mxu0
    %1831 = vmatprep.mubr.f32.mxu0 %v1567
    %1832 = vmatmul.mubr.f32.gmra.mxu0 %v1566
    %v1833 = vpop.f32.mrf.mxu0
    %v1834 = vadd.f32 0.0, %v1833
    %v1835 = vpop.f32.mrf.mxu0
    %1836 = vmatprep.mubr.f32.mxu0 %v1569
    %1837 = vmatmul.mubr.f32.gmra.mxu0 %v1568
    %v1838 = vpop.f32.mrf.mxu0
    %v1839 = vadd.f32 0.0, %v1838
    %v1840 = vpop.f32.mrf.mxu0
    %1841 = vdwg.mxu0
    %1842 = vmatprep.subr.mxu0 0.0
    %1843 = vmatpush1.xpose.msra.mxu0 0.0
    %1844 = vmatprep.subr.mxu0 0.0
    %1845 = vmatpush1.xpose.msra.mxu0 0.0
    %1846 = vmatprep.subr.mxu0 0.0
    %1847 = vmatpush1.xpose.msra.mxu0 0.0
    %1848 = vmatprep.subr.mxu0 0.0
    %1849 = vmatpush1.xpose.msra.mxu0 0.0
    %1850 = vmatprep.subr.mxu0 0.0
    %1851 = vmatpush1.xpose.msra.mxu0 0.0
    %1852 = vmatprep.subr.mxu0 0.0
    %1853 = vmatpush1.xpose.msra.mxu0 0.0
    %1854 = vmatprep.subr.mxu0 0.0
    %1855 = vmatpush1.xpose.msra.mxu0 0.0
    %1856 = vmatprep.subr.mxu0 0.0
    %1857 = vmatpush1.xpose.msra.mxu0 0.0
    %1858 = vmatprep.subr.mxu0 0.0
    %1859 = vmatpush1.xpose.msra.mxu0 0.0
    %1860 = vmatprep.subr.mxu0 0.0
    %1861 = vmatpush1.xpose.msra.mxu0 0.0
    %1862 = vmatprep.subr.mxu0 0.0
    %1863 = vmatpush1.xpose.msra.mxu0 0.0
    %1864 = vmatprep.subr.mxu0 0.0
    %1865 = vmatpush1.xpose.msra.mxu0 0.0
    %1866 = vmatprep.subr.mxu0 0.0
    %1867 = vmatpush1.xpose.msra.mxu0 0.0
    %1868 = vmatprep.subr.mxu0 0.0
    %1869 = vmatpush1.xpose.msra.mxu0 0.0
    %1870 = vmatprep.subr.mxu0 0.0
    %1871 = vmatpush1.xpose.msra.mxu0 0.0
    %1872 = vmatprep.subr.mxu0 %v1696
    %1873 = vmatpush1.xpose.msra.mxu0 %v1695
    %1874 = vmatprep.subr.mxu0 0.0
    %1875 = vmatpush2.xpose.msra.mxu0 0.0
    %1876 = vmatprep.subr.mxu0 0.0
    %1877 = vmatpush2.xpose.msra.mxu0 0.0
    %1878 = vmatprep.subr.mxu0 0.0
    %1879 = vmatpush2.xpose.msra.mxu0 0.0
    %1880 = vmatprep.subr.mxu0 0.0
    %1881 = vmatpush2.xpose.msra.mxu0 0.0
    %1882 = vmatprep.subr.mxu0 0.0
    %1883 = vmatpush2.xpose.msra.mxu0 0.0
    %1884 = vmatprep.subr.mxu0 0.0
    %1885 = vmatpush2.xpose.msra.mxu0 0.0
    %1886 = vmatprep.subr.mxu0 0.0
    %1887 = vmatpush2.xpose.msra.mxu0 0.0
    %1888 = vmatprep.subr.mxu0 0.0
    %1889 = vmatpush2.xpose.msra.mxu0 0.0
    %1890 = vmatprep.subr.mxu0 0.0
    %1891 = vmatpush2.xpose.msra.mxu0 0.0
    %1892 = vmatprep.subr.mxu0 0.0
    %1893 = vmatpush2.xpose.msra.mxu0 0.0
    %1894 = vmatprep.subr.mxu0 0.0
    %1895 = vmatpush2.xpose.msra.mxu0 0.0
    %1896 = vmatprep.subr.mxu0 0.0
    %1897 = vmatpush2.xpose.msra.mxu0 0.0
    %1898 = vmatprep.subr.mxu0 0.0
    %1899 = vmatpush2.xpose.msra.mxu0 0.0
    %1900 = vmatprep.subr.mxu0 0.0
    %1901 = vmatpush2.xpose.msra.mxu0 0.0
    %1902 = vmatprep.subr.mxu0 0.0
    %1903 = vmatpush2.xpose.msra.mxu0 0.0
    %1904 = vmatprep.subr.mxu0 0.0
    %1905 = vmatpush2.xpose.msra.mxu0 0.0
    %1906 = vmatprep.mubr.f32.mxu0 1.0
    %1907 = vmatmul.mubr.f32.gmra.mxu0 1.0
    %v1908 = vpop.f32.mrf.mxu0
    %v1909 = vadd.f32 0.0, %v1908
    %v1910 = vpop.f32.mrf.mxu0
    %1911 = vdwg.mxu0
    %v1912 = vlaneseq
    %v1913 = vshrl.u32 %v1912, 7
    %v1914 = vsub.s32 0, %v1913
    %v1915 = vrot.slane %v1909, %v1914
    %v1916 = vmul.f32 %v1915, %v33
    %v1917 = vmul.f32 %v1915, %v34
    %v1918 = vmul.f32 %v1915, %v35
    %v1919 = vmul.f32 %v1915, %v36
    %v1920 = vmul.f32 %v1915, %v37
    %v1921 = vmul.f32 %v1915, %v38
    %v1922 = vmul.f32 %v1915, %v39
    %v1923 = vmul.f32 %v1915, %v40
    %v1924 = vmul.f32 %v1915, %v41
    %v1925 = vmul.f32 %v1915, %v42
    %v1926 = vmul.f32 %v1915, %v43
    %v1927 = vmul.f32 %v1915, %v44
    %v1928 = vmul.f32 %v1915, %v45
    %v1929 = vmul.f32 %v1915, %v46
    %v1930 = vmul.f32 %v1915, %v47
    %v1931 = vmul.f32 %v1915, %v48
    %v1932 = vsub.f32 %v1764, %v1916
    %v1933 = vsub.f32 %v1769, %v1917
    %v1934 = vsub.f32 %v1774, %v1918
    %v1935 = vsub.f32 %v1779, %v1919
    %v1936 = vsub.f32 %v1784, %v1920
    %v1937 = vsub.f32 %v1789, %v1921
    %v1938 = vsub.f32 %v1794, %v1922
    %v1939 = vsub.f32 %v1799, %v1923
    %v1940 = vsub.f32 %v1804, %v1924
    %v1941 = vsub.f32 %v1809, %v1925
    %v1942 = vsub.f32 %v1814, %v1926
    %v1943 = vsub.f32 %v1819, %v1927
    %v1944 = vsub.f32 %v1824, %v1928
    %v1945 = vsub.f32 %v1829, %v1929
    %v1946 = vsub.f32 %v1834, %v1930
    %v1947 = vsub.f32 %v1839, %v1931
    %v1948 = vmul.f32 %v1932, %v1932
    %v1949 = vmul.f32 %v1933, %v1933
    %v1950 = vmul.f32 %v1934, %v1934
    %v1951 = vmul.f32 %v1935, %v1935
    %v1952 = vmul.f32 %v1936, %v1936
    %v1953 = vmul.f32 %v1937, %v1937
    %v1954 = vmul.f32 %v1938, %v1938
    %v1955 = vmul.f32 %v1939, %v1939
    %v1956 = vmul.f32 %v1940, %v1940
    %v1957 = vmul.f32 %v1941, %v1941
    %v1958 = vmul.f32 %v1942, %v1942
    %v1959 = vmul.f32 %v1943, %v1943
    %v1960 = vmul.f32 %v1944, %v1944
    %v1961 = vmul.f32 %v1945, %v1945
    %v1962 = vmul.f32 %v1946, %v1946
    %v1963 = vmul.f32 %v1947, %v1947
    %v1964 = vsel %vm598, %v1948, 0.0
    %v1965 = vsel %vm598, %v1949, 0.0
    %v1966 = vadd.f32 %v1964, %v1965
    %v1967 = vsel %vm598, %v1950, 0.0
    %v1968 = vadd.f32 %v1966, %v1967
    %v1969 = vsel %vm598, %v1951, 0.0
    %v1970 = vadd.f32 %v1968, %v1969
    %v1971 = vsel %vm598, %v1952, 0.0
    %v1972 = vadd.f32 %v1970, %v1971
    %v1973 = vsel %vm598, %v1953, 0.0
    %v1974 = vadd.f32 %v1972, %v1973
    %v1975 = vsel %vm598, %v1954, 0.0
    %v1976 = vadd.f32 %v1974, %v1975
    %v1977 = vsel %vm598, %v1955, 0.0
    %v1978 = vadd.f32 %v1976, %v1977
    %v1979 = vsel %vm598, %v1956, 0.0
    %v1980 = vadd.f32 %v1978, %v1979
    %v1981 = vsel %vm598, %v1957, 0.0
    %v1982 = vadd.f32 %v1980, %v1981
    %v1983 = vsel %vm598, %v1958, 0.0
    %v1984 = vadd.f32 %v1982, %v1983
    %v1985 = vsel %vm598, %v1959, 0.0
    %v1986 = vadd.f32 %v1984, %v1985
    %v1987 = vsel %vm598, %v1960, 0.0
    %v1988 = vadd.f32 %v1986, %v1987
    %v1989 = vsel %vm598, %v1961, 0.0
    %v1990 = vadd.f32 %v1988, %v1989
    %v1991 = vsel %vm598, %v1962, 0.0
    %v1992 = vadd.f32 %v1990, %v1991
    %v1993 = vsel %vm598, %v1963, 0.0
    %v1994 = vadd.f32 %v1992, %v1993
    %v1995 = vrot.slane %v1994, 4
    %v1996 = vadd.f32 %v1994, %v1995
    %v1997 = vrot.slane %v1996, 2
    %v1998 = vadd.f32 %v1996, %v1997
    %v1999 = vrot.slane %v1998, 1
    %v2000 = vadd.f32 %v1998, %v1999
    %v2001 = vmax.f32 %v2000, 1e-24
    %v2002 = vrsqrt.pop %v2001
    %v2003 = vmul.f32 %v1932, %v2002
    %v2004 = vmul.f32 %v1933, %v2002
    %v2005 = vmul.f32 %v1934, %v2002
    %v2006 = vmul.f32 %v1935, %v2002
    %v2007 = vmul.f32 %v1936, %v2002
    %v2008 = vmul.f32 %v1937, %v2002
    %v2009 = vmul.f32 %v1938, %v2002
    %v2010 = vmul.f32 %v1939, %v2002
    %v2011 = vmul.f32 %v1940, %v2002
    %v2012 = vmul.f32 %v1941, %v2002
    %v2013 = vmul.f32 %v1942, %v2002
    %v2014 = vmul.f32 %v1943, %v2002
    %v2015 = vmul.f32 %v1944, %v2002
    %v2016 = vmul.f32 %v1945, %v2002
    %v2017 = vmul.f32 %v1946, %v2002
    %v2018 = vmul.f32 %v1947, %v2002
    %v2019 = vmul.f32 %v2003, %v2003
    %v2020 = vmul.f32 %v2004, %v2004
    %v2021 = vmul.f32 %v2005, %v2005
    %v2022 = vmul.f32 %v2006, %v2006
    %v2023 = vmul.f32 %v2007, %v2007
    %v2024 = vmul.f32 %v2008, %v2008
    %v2025 = vmul.f32 %v2009, %v2009
    %v2026 = vmul.f32 %v2010, %v2010
    %v2027 = vmul.f32 %v2011, %v2011
    %v2028 = vmul.f32 %v2012, %v2012
    %v2029 = vmul.f32 %v2013, %v2013
    %v2030 = vmul.f32 %v2014, %v2014
    %v2031 = vmul.f32 %v2015, %v2015
    %v2032 = vmul.f32 %v2016, %v2016
    %v2033 = vmul.f32 %v2017, %v2017
    %v2034 = vmul.f32 %v2018, %v2018
    %v2035 = vsel %vm598, %v2019, 0.0
    %v2036 = vsel %vm598, %v2020, 0.0
    %v2037 = vadd.f32 %v2035, %v2036
    %v2038 = vsel %vm598, %v2021, 0.0
    %v2039 = vadd.f32 %v2037, %v2038
    %v2040 = vsel %vm598, %v2022, 0.0
    %v2041 = vadd.f32 %v2039, %v2040
    %v2042 = vsel %vm598, %v2023, 0.0
    %v2043 = vadd.f32 %v2041, %v2042
    %v2044 = vsel %vm598, %v2024, 0.0
    %v2045 = vadd.f32 %v2043, %v2044
    %v2046 = vsel %vm598, %v2025, 0.0
    %v2047 = vadd.f32 %v2045, %v2046
    %v2048 = vsel %vm598, %v2026, 0.0
    %v2049 = vadd.f32 %v2047, %v2048
    %v2050 = vsel %vm598, %v2027, 0.0
    %v2051 = vadd.f32 %v2049, %v2050
    %v2052 = vsel %vm598, %v2028, 0.0
    %v2053 = vadd.f32 %v2051, %v2052
    %v2054 = vsel %vm598, %v2029, 0.0
    %v2055 = vadd.f32 %v2053, %v2054
    %v2056 = vsel %vm598, %v2030, 0.0
    %v2057 = vadd.f32 %v2055, %v2056
    %v2058 = vsel %vm598, %v2031, 0.0
    %v2059 = vadd.f32 %v2057, %v2058
    %v2060 = vsel %vm598, %v2032, 0.0
    %v2061 = vadd.f32 %v2059, %v2060
    %v2062 = vsel %vm598, %v2033, 0.0
    %v2063 = vadd.f32 %v2061, %v2062
    %v2064 = vsel %vm598, %v2034, 0.0
    %v2065 = vadd.f32 %v2063, %v2064
    %v2066 = vrot.slane %v2065, 4
    %v2067 = vadd.f32 %v2065, %v2066
    %v2068 = vrot.slane %v2067, 2
    %v2069 = vadd.f32 %v2067, %v2068
    %v2070 = vrot.slane %v2069, 1
    %v2071 = vadd.f32 %v2069, %v2070
    %v2072 = vsel %vm598, %v2071, 0.0
    %2073 = vadd.xlane.f32.xlu0 %v2072
    %v2074 = vpop.xlane.xlu0 %2073
    %v2075 = vmax.f32 %v2074, 1e-24
    %v2076 = vrsqrt.pop %v2075
    %v2077 = vmul.f32 %v2003, %v2076
    %v2078 = vmul.f32 %v2004, %v2076
    %v2079 = vmul.f32 %v2005, %v2076
    %v2080 = vmul.f32 %v2006, %v2076
    %v2081 = vmul.f32 %v2007, %v2076
    %v2082 = vmul.f32 %v2008, %v2076
    %v2083 = vmul.f32 %v2009, %v2076
    %v2084 = vmul.f32 %v2010, %v2076
    %v2085 = vmul.f32 %v2011, %v2076
    %v2086 = vmul.f32 %v2012, %v2076
    %v2087 = vmul.f32 %v2013, %v2076
    %v2088 = vmul.f32 %v2014, %v2076
    %v2089 = vmul.f32 %v2015, %v2076
    %v2090 = vmul.f32 %v2016, %v2076
    %v2091 = vmul.f32 %v2017, %v2076
    %v2092 = vmul.f32 %v2018, %v2076
    %s2093 = scalar_lea.vmem %s4, 256
    %2094 = vst.msk [vmem:[%s2093] sm:$0xff] %vm598, %v2077
    %2095 = vst.msk [vmem:[%s2093 + $0x8] sm:$0xff] %vm598, %v2078
    %2096 = vst.msk [vmem:[%s2093 + $0x10] sm:$0xff] %vm598, %v2079
    %2097 = vst.msk [vmem:[%s2093 + $0x18] sm:$0xff] %vm598, %v2080
    %2098 = vst.msk [vmem:[%s2093 + $0x20] sm:$0xff] %vm598, %v2081
    %2099 = vst.msk [vmem:[%s2093 + $0x28] sm:$0xff] %vm598, %v2082
    %2100 = vst.msk [vmem:[%s2093 + $0x30] sm:$0xff] %vm598, %v2083
    %2101 = vst.msk [vmem:[%s2093 + $0x38] sm:$0xff] %vm598, %v2084
    %2102 = vst.msk [vmem:[%s2093 + $0x40] sm:$0xff] %vm598, %v2085
    %2103 = vst.msk [vmem:[%s2093 + $0x48] sm:$0xff] %vm598, %v2086
    %2104 = vst.msk [vmem:[%s2093 + $0x50] sm:$0xff] %vm598, %v2087
    %2105 = vst.msk [vmem:[%s2093 + $0x58] sm:$0xff] %vm598, %v2088
    %2106 = vst.msk [vmem:[%s2093 + $0x60] sm:$0xff] %vm598, %v2089
    %2107 = vst.msk [vmem:[%s2093 + $0x68] sm:$0xff] %vm598, %v2090
    %2108 = vst.msk [vmem:[%s2093 + $0x70] sm:$0xff] %vm598, %v2091
    %2109 = vst.msk [vmem:[%s2093 + $0x78] sm:$0xff] %vm598, %v2092
    %s2110 = scalar_lea.vmem [#allocation2], 768
    %v2111 = vld [vmem:[%s2110] sm:$0xff]
    %v2112 = vld [vmem:[%s2110 + $0x8] sm:$0xff]
    %v2113 = vld [vmem:[%s2110 + $0x10] sm:$0xff]
    %v2114 = vld [vmem:[%s2110 + $0x18] sm:$0xff]
    %v2115 = vld [vmem:[%s2110 + $0x20] sm:$0xff]
    %v2116 = vld [vmem:[%s2110 + $0x28] sm:$0xff]
    %v2117 = vld [vmem:[%s2110 + $0x30] sm:$0xff]
    %v2118 = vld [vmem:[%s2110 + $0x38] sm:$0xff]
    %v2119 = vld [vmem:[%s2110 + $0x40] sm:$0xff]
    %v2120 = vld [vmem:[%s2110 + $0x48] sm:$0xff]
    %v2121 = vld [vmem:[%s2110 + $0x50] sm:$0xff]
    %v2122 = vld [vmem:[%s2110 + $0x58] sm:$0xff]
    %v2123 = vld [vmem:[%s2110 + $0x60] sm:$0xff]
    %v2124 = vld [vmem:[%s2110 + $0x68] sm:$0xff]
    %v2125 = vld [vmem:[%s2110 + $0x70] sm:$0xff]
    %v2126 = vld [vmem:[%s2110 + $0x78] sm:$0xff]
    %v2127 = vld [vmem:[%s2110 + $0x80] sm:$0xff]
    %v2128 = vld [vmem:[%s2110 + $0x88] sm:$0xff]
    %v2129 = vld [vmem:[%s2110 + $0x90] sm:$0xff]
    %v2130 = vld [vmem:[%s2110 + $0x98] sm:$0xff]
    %v2131 = vld [vmem:[%s2110 + $0xa0] sm:$0xff]
    %v2132 = vld [vmem:[%s2110 + $0xa8] sm:$0xff]
    %v2133 = vld [vmem:[%s2110 + $0xb0] sm:$0xff]
    %v2134 = vld [vmem:[%s2110 + $0xb8] sm:$0xff]
    %v2135 = vld [vmem:[%s2110 + $0xc0] sm:$0xff]
    %v2136 = vld [vmem:[%s2110 + $0xc8] sm:$0xff]
    %v2137 = vld [vmem:[%s2110 + $0xd0] sm:$0xff]
    %v2138 = vld [vmem:[%s2110 + $0xd8] sm:$0xff]
    %v2139 = vld [vmem:[%s2110 + $0xe0] sm:$0xff]
    %v2140 = vld [vmem:[%s2110 + $0xe8] sm:$0xff]
    %v2141 = vld [vmem:[%s2110 + $0xf0] sm:$0xff]
    %v2142 = vld [vmem:[%s2110 + $0xf8] sm:$0xff]
    %v2143 = vmul.f32 %v2111, %v2111
    %v2144 = vmul.f32 %v2112, %v2112
    %v2145 = vmul.f32 %v2113, %v2113
    %v2146 = vmul.f32 %v2114, %v2114
    %v2147 = vmul.f32 %v2115, %v2115
    %v2148 = vmul.f32 %v2116, %v2116
    %v2149 = vmul.f32 %v2117, %v2117
    %v2150 = vmul.f32 %v2118, %v2118
    %v2151 = vmul.f32 %v2119, %v2119
    %v2152 = vmul.f32 %v2120, %v2120
    %v2153 = vmul.f32 %v2121, %v2121
    %v2154 = vmul.f32 %v2122, %v2122
    %v2155 = vmul.f32 %v2123, %v2123
    %v2156 = vmul.f32 %v2124, %v2124
    %v2157 = vmul.f32 %v2125, %v2125
    %v2158 = vmul.f32 %v2126, %v2126
    %v2159 = vmul.f32 %v2127, %v2127
    %v2160 = vmul.f32 %v2128, %v2128
    %v2161 = vmul.f32 %v2129, %v2129
    %v2162 = vmul.f32 %v2130, %v2130
    %v2163 = vmul.f32 %v2131, %v2131
    %v2164 = vmul.f32 %v2132, %v2132
    %v2165 = vmul.f32 %v2133, %v2133
    %v2166 = vmul.f32 %v2134, %v2134
    %v2167 = vmul.f32 %v2135, %v2135
    %v2168 = vmul.f32 %v2136, %v2136
    %v2169 = vmul.f32 %v2137, %v2137
    %v2170 = vmul.f32 %v2138, %v2138
    %v2171 = vmul.f32 %v2139, %v2139
    %v2172 = vmul.f32 %v2140, %v2140
    %v2173 = vmul.f32 %v2141, %v2141
    %v2174 = vmul.f32 %v2142, %v2142
    %v2175 = vadd.f32 %v2143, %v2145
    %v2176 = vadd.f32 %v2175, %v2147
    %v2177 = vadd.f32 %v2176, %v2149
    %v2178 = vadd.f32 %v2177, %v2151
    %v2179 = vadd.f32 %v2178, %v2153
    %v2180 = vadd.f32 %v2179, %v2155
    %v2181 = vadd.f32 %v2180, %v2157
    %v2182 = vadd.f32 %v2181, %v2159
    %v2183 = vadd.f32 %v2182, %v2161
    %v2184 = vadd.f32 %v2183, %v2163
    %v2185 = vadd.f32 %v2184, %v2165
    %v2186 = vadd.f32 %v2185, %v2167
    %v2187 = vadd.f32 %v2186, %v2169
    %v2188 = vadd.f32 %v2187, %v2171
    %v2189 = vadd.f32 %v2188, %v2173
    %v2190 = vrot.slane %v2189, 4
    %v2191 = vadd.f32 %v2189, %v2190
    %v2192 = vrot.slane %v2191, 2
    %v2193 = vadd.f32 %v2191, %v2192
    %v2194 = vrot.slane %v2193, 1
    %v2195 = vadd.f32 %v2193, %v2194
    %v2196 = vadd.f32 %v2144, %v2146
    %v2197 = vadd.f32 %v2196, %v2148
    %v2198 = vadd.f32 %v2197, %v2150
    %v2199 = vadd.f32 %v2198, %v2152
    %v2200 = vadd.f32 %v2199, %v2154
    %v2201 = vadd.f32 %v2200, %v2156
    %v2202 = vadd.f32 %v2201, %v2158
    %v2203 = vadd.f32 %v2202, %v2160
    %v2204 = vadd.f32 %v2203, %v2162
    %v2205 = vadd.f32 %v2204, %v2164
    %v2206 = vadd.f32 %v2205, %v2166
    %v2207 = vadd.f32 %v2206, %v2168
    %v2208 = vadd.f32 %v2207, %v2170
    %v2209 = vadd.f32 %v2208, %v2172
    %v2210 = vadd.f32 %v2209, %v2174
    %v2211 = vrot.slane %v2210, 4
    %v2212 = vadd.f32 %v2210, %v2211
    %v2213 = vrot.slane %v2212, 2
    %v2214 = vadd.f32 %v2212, %v2213
    %v2215 = vrot.slane %v2214, 1
    %v2216 = vadd.f32 %v2214, %v2215
    %v2217 = vmax.f32 %v2195, 1e-24
    %v2218 = vmax.f32 %v2216, 1e-24
    %v2219 = vrsqrt.pop %v2217
    %v2220 = vrsqrt.pop %v2218
    %v2221 = vmul.f32 %v2111, %v2219
    %v2222 = vmul.f32 %v2112, %v2220
    %v2223 = vmul.f32 %v2113, %v2219
    %v2224 = vmul.f32 %v2114, %v2220
    %v2225 = vmul.f32 %v2115, %v2219
    %v2226 = vmul.f32 %v2116, %v2220
    %v2227 = vmul.f32 %v2117, %v2219
    %v2228 = vmul.f32 %v2118, %v2220
    %v2229 = vmul.f32 %v2119, %v2219
    %v2230 = vmul.f32 %v2120, %v2220
    %v2231 = vmul.f32 %v2121, %v2219
    %v2232 = vmul.f32 %v2122, %v2220
    %v2233 = vmul.f32 %v2123, %v2219
    %v2234 = vmul.f32 %v2124, %v2220
    %v2235 = vmul.f32 %v2125, %v2219
    %v2236 = vmul.f32 %v2126, %v2220
    %v2237 = vmul.f32 %v2127, %v2219
    %v2238 = vmul.f32 %v2128, %v2220
    %v2239 = vmul.f32 %v2129, %v2219
    %v2240 = vmul.f32 %v2130, %v2220
    %v2241 = vmul.f32 %v2131, %v2219
    %v2242 = vmul.f32 %v2132, %v2220
    %v2243 = vmul.f32 %v2133, %v2219
    %v2244 = vmul.f32 %v2134, %v2220
    %v2245 = vmul.f32 %v2135, %v2219
    %v2246 = vmul.f32 %v2136, %v2220
    %v2247 = vmul.f32 %v2137, %v2219
    %v2248 = vmul.f32 %v2138, %v2220
    %v2249 = vmul.f32 %v2139, %v2219
    %v2250 = vmul.f32 %v2140, %v2220
    %v2251 = vmul.f32 %v2141, %v2219
    %v2252 = vmul.f32 %v2142, %v2220
    %2253 = vmatprep.subr.mxu0 %v2252
    %2254 = vmatpush1.msra.mxu0 %v2251
    %2255 = vmatprep.subr.mxu0 %v2250
    %2256 = vmatpush1.msra.mxu0 %v2249
    %2257 = vmatprep.subr.mxu0 %v2248
    %2258 = vmatpush1.msra.mxu0 %v2247
    %2259 = vmatprep.subr.mxu0 %v2246
    %2260 = vmatpush1.msra.mxu0 %v2245
    %2261 = vmatprep.subr.mxu0 %v2244
    %2262 = vmatpush1.msra.mxu0 %v2243
    %2263 = vmatprep.subr.mxu0 %v2242
    %2264 = vmatpush1.msra.mxu0 %v2241
    %2265 = vmatprep.subr.mxu0 %v2240
    %2266 = vmatpush1.msra.mxu0 %v2239
    %2267 = vmatprep.subr.mxu0 %v2238
    %2268 = vmatpush1.msra.mxu0 %v2237
    %2269 = vmatprep.subr.mxu0 %v2236
    %2270 = vmatpush1.msra.mxu0 %v2235
    %2271 = vmatprep.subr.mxu0 %v2234
    %2272 = vmatpush1.msra.mxu0 %v2233
    %2273 = vmatprep.subr.mxu0 %v2232
    %2274 = vmatpush1.msra.mxu0 %v2231
    %2275 = vmatprep.subr.mxu0 %v2230
    %2276 = vmatpush1.msra.mxu0 %v2229
    %2277 = vmatprep.subr.mxu0 %v2228
    %2278 = vmatpush1.msra.mxu0 %v2227
    %2279 = vmatprep.subr.mxu0 %v2226
    %2280 = vmatpush1.msra.mxu0 %v2225
    %2281 = vmatprep.subr.mxu0 %v2224
    %2282 = vmatpush1.msra.mxu0 %v2223
    %2283 = vmatprep.subr.mxu0 %v2222
    %2284 = vmatpush1.msra.mxu0 %v2221
    %2285 = vmatprep.subr.mxu0 0.0
    %2286 = vmatpush2.msra.mxu0 0.0
    %2287 = vmatprep.subr.mxu0 0.0
    %2288 = vmatpush2.msra.mxu0 0.0
    %2289 = vmatprep.subr.mxu0 0.0
    %2290 = vmatpush2.msra.mxu0 0.0
    %2291 = vmatprep.subr.mxu0 0.0
    %2292 = vmatpush2.msra.mxu0 0.0
    %2293 = vmatprep.subr.mxu0 0.0
    %2294 = vmatpush2.msra.mxu0 0.0
    %2295 = vmatprep.subr.mxu0 0.0
    %2296 = vmatpush2.msra.mxu0 0.0
    %2297 = vmatprep.subr.mxu0 0.0
    %2298 = vmatpush2.msra.mxu0 0.0
    %2299 = vmatprep.subr.mxu0 0.0
    %2300 = vmatpush2.msra.mxu0 0.0
    %2301 = vmatprep.subr.mxu0 0.0
    %2302 = vmatpush2.msra.mxu0 0.0
    %2303 = vmatprep.subr.mxu0 0.0
    %2304 = vmatpush2.msra.mxu0 0.0
    %2305 = vmatprep.subr.mxu0 0.0
    %2306 = vmatpush2.msra.mxu0 0.0
    %2307 = vmatprep.subr.mxu0 0.0
    %2308 = vmatpush2.msra.mxu0 0.0
    %2309 = vmatprep.subr.mxu0 0.0
    %2310 = vmatpush2.msra.mxu0 0.0
    %2311 = vmatprep.subr.mxu0 0.0
    %2312 = vmatpush2.msra.mxu0 0.0
    %2313 = vmatprep.subr.mxu0 0.0
    %2314 = vmatpush2.msra.mxu0 0.0
    %2315 = vmatprep.subr.mxu0 0.0
    %2316 = vmatpush2.msra.mxu0 0.0
    %2317 = vmatprep.mubr.f32.mxu0 0.0
    %2318 = vmatmul.mubr.f32.gmra.mxu0 %v31
    %v2319 = vpop.f32.mrf.mxu0
    %v2320 = vadd.f32 %v54, %v2319
    %v2321 = vpop.f32.mrf.mxu0
    %v2322 = vadd.f32 %v54, %v2321
    %2323 = vmatprep.mubr.f32.mxu0 0.0
    %2324 = vmatmul.mubr.f32.gmra.mxu0 %v32
    %v2325 = vpop.f32.mrf.mxu0
    %v2326 = vadd.f32 %v59, %v2325
    %v2327 = vpop.f32.mrf.mxu0
    %v2328 = vadd.f32 %v59, %v2327
    %2329 = vdwg.mxu0
    %v2330 = vsel %vm280, %v2326, -inf
    %v2331 = vmax.f32 %v2320, %v2330
    %v2332 = vrot.slane %v2331, 4
    %v2333 = vmax.f32 %v2331, %v2332
    %v2334 = vrot.slane %v2333, 2
    %v2335 = vmax.f32 %v2333, %v2334
    %v2336 = vrot.slane %v2335, 1
    %v2337 = vmax.f32 %v2335, %v2336
    %v2338 = vsel %vm280, %v2328, -inf
    %v2339 = vmax.f32 %v2322, %v2338
    %v2340 = vrot.slane %v2339, 4
    %v2341 = vmax.f32 %v2339, %v2340
    %v2342 = vrot.slane %v2341, 2
    %v2343 = vmax.f32 %v2341, %v2342
    %v2344 = vrot.slane %v2343, 1
    %v2345 = vmax.f32 %v2343, %v2344
    %v2346 = vsub.f32 %v2320, %v2337
    %v2347 = vsub.f32 %v2322, %v2345
    %v2348 = vsub.f32 %v2326, %v2337
    %v2349 = vsub.f32 %v2328, %v2345
    %v2350 = vmul.f32 %v2346, 1.442695
    %v2351 = vpow.pop %v2350
    %v2352 = vmul.f32 %v2347, 1.442695
    %v2353 = vpow.pop %v2352
    %v2354 = vmul.f32 %v2348, 1.442695
    %v2355 = vpow.pop %v2354
    %v2356 = vmul.f32 %v2349, 1.442695
    %v2357 = vpow.pop %v2356
    %v2358 = vsel %vm280, %v2355, 0.0
    %v2359 = vadd.f32 %v2351, %v2358
    %v2360 = vrot.slane %v2359, 4
    %v2361 = vadd.f32 %v2359, %v2360
    %v2362 = vrot.slane %v2361, 2
    %v2363 = vadd.f32 %v2361, %v2362
    %v2364 = vrot.slane %v2363, 1
    %v2365 = vadd.f32 %v2363, %v2364
    %v2366 = vsel %vm280, %v2357, 0.0
    %v2367 = vadd.f32 %v2353, %v2366
    %v2368 = vrot.slane %v2367, 4
    %v2369 = vadd.f32 %v2367, %v2368
    %v2370 = vrot.slane %v2369, 2
    %v2371 = vadd.f32 %v2369, %v2370
    %v2372 = vrot.slane %v2371, 1
    %v2373 = vadd.f32 %v2371, %v2372
    %v2374 = vrcp.pop %v2365
    %v2375 = vmul.f32 1.0, %v2374
    %v2376 = vrcp.pop %v2373
    %v2377 = vmul.f32 1.0, %v2376
    %v2378 = vmul.f32 %v2351, %v2375
    %v2379 = vmul.f32 %v2353, %v2377
    %2380 = vmatprep.subr.mxu0 0.0
    %2381 = vmatpush1.xpose.msra.mxu0 0.0
    %2382 = vmatprep.subr.mxu0 0.0
    %2383 = vmatpush1.xpose.msra.mxu0 0.0
    %2384 = vmatprep.subr.mxu0 0.0
    %2385 = vmatpush1.xpose.msra.mxu0 0.0
    %2386 = vmatprep.subr.mxu0 0.0
    %2387 = vmatpush1.xpose.msra.mxu0 0.0
    %2388 = vmatprep.subr.mxu0 0.0
    %2389 = vmatpush1.xpose.msra.mxu0 0.0
    %2390 = vmatprep.subr.mxu0 0.0
    %2391 = vmatpush1.xpose.msra.mxu0 0.0
    %2392 = vmatprep.subr.mxu0 0.0
    %2393 = vmatpush1.xpose.msra.mxu0 0.0
    %2394 = vmatprep.subr.mxu0 0.0
    %2395 = vmatpush1.xpose.msra.mxu0 0.0
    %2396 = vmatprep.subr.mxu0 0.0
    %2397 = vmatpush1.xpose.msra.mxu0 0.0
    %2398 = vmatprep.subr.mxu0 0.0
    %2399 = vmatpush1.xpose.msra.mxu0 0.0
    %2400 = vmatprep.subr.mxu0 0.0
    %2401 = vmatpush1.xpose.msra.mxu0 0.0
    %2402 = vmatprep.subr.mxu0 0.0
    %2403 = vmatpush1.xpose.msra.mxu0 0.0
    %2404 = vmatprep.subr.mxu0 0.0
    %2405 = vmatpush1.xpose.msra.mxu0 0.0
    %2406 = vmatprep.subr.mxu0 0.0
    %2407 = vmatpush1.xpose.msra.mxu0 0.0
    %2408 = vmatprep.subr.mxu0 0.0
    %2409 = vmatpush1.xpose.msra.mxu0 0.0
    %2410 = vmatprep.subr.mxu0 %v2379
    %2411 = vmatpush1.xpose.msra.mxu0 %v2378
    %2412 = vmatprep.subr.mxu0 0.0
    %2413 = vmatpush2.xpose.msra.mxu0 0.0
    %2414 = vmatprep.subr.mxu0 0.0
    %2415 = vmatpush2.xpose.msra.mxu0 0.0
    %2416 = vmatprep.subr.mxu0 0.0
    %2417 = vmatpush2.xpose.msra.mxu0 0.0
    %2418 = vmatprep.subr.mxu0 0.0
    %2419 = vmatpush2.xpose.msra.mxu0 0.0
    %2420 = vmatprep.subr.mxu0 0.0
    %2421 = vmatpush2.xpose.msra.mxu0 0.0
    %2422 = vmatprep.subr.mxu0 0.0
    %2423 = vmatpush2.xpose.msra.mxu0 0.0
    %2424 = vmatprep.subr.mxu0 0.0
    %2425 = vmatpush2.xpose.msra.mxu0 0.0
    %2426 = vmatprep.subr.mxu0 0.0
    %2427 = vmatpush2.xpose.msra.mxu0 0.0
    %2428 = vmatprep.subr.mxu0 0.0
    %2429 = vmatpush2.xpose.msra.mxu0 0.0
    %2430 = vmatprep.subr.mxu0 0.0
    %2431 = vmatpush2.xpose.msra.mxu0 0.0
    %2432 = vmatprep.subr.mxu0 0.0
    %2433 = vmatpush2.xpose.msra.mxu0 0.0
    %2434 = vmatprep.subr.mxu0 0.0
    %2435 = vmatpush2.xpose.msra.mxu0 0.0
    %2436 = vmatprep.subr.mxu0 0.0
    %2437 = vmatpush2.xpose.msra.mxu0 0.0
    %2438 = vmatprep.subr.mxu0 0.0
    %2439 = vmatpush2.xpose.msra.mxu0 0.0
    %2440 = vmatprep.subr.mxu0 0.0
    %2441 = vmatpush2.xpose.msra.mxu0 0.0
    %2442 = vmatprep.subr.mxu0 0.0
    %2443 = vmatpush2.xpose.msra.mxu0 0.0
    %2444 = vmatprep.mubr.f32.mxu0 %v2222
    %2445 = vmatmul.mubr.f32.gmra.mxu0 %v2221
    %v2446 = vpop.f32.mrf.mxu0
    %v2447 = vadd.f32 0.0, %v2446
    %v2448 = vpop.f32.mrf.mxu0
    %2449 = vmatprep.mubr.f32.mxu0 %v2224
    %2450 = vmatmul.mubr.f32.gmra.mxu0 %v2223
    %v2451 = vpop.f32.mrf.mxu0
    %v2452 = vadd.f32 0.0, %v2451
    %v2453 = vpop.f32.mrf.mxu0
    %2454 = vmatprep.mubr.f32.mxu0 %v2226
    %2455 = vmatmul.mubr.f32.gmra.mxu0 %v2225
    %v2456 = vpop.f32.mrf.mxu0
    %v2457 = vadd.f32 0.0, %v2456
    %v2458 = vpop.f32.mrf.mxu0
    %2459 = vmatprep.mubr.f32.mxu0 %v2228
    %2460 = vmatmul.mubr.f32.gmra.mxu0 %v2227
    %v2461 = vpop.f32.mrf.mxu0
    %v2462 = vadd.f32 0.0, %v2461
    %v2463 = vpop.f32.mrf.mxu0
    %2464 = vmatprep.mubr.f32.mxu0 %v2230
    %2465 = vmatmul.mubr.f32.gmra.mxu0 %v2229
    %v2466 = vpop.f32.mrf.mxu0
    %v2467 = vadd.f32 0.0, %v2466
    %v2468 = vpop.f32.mrf.mxu0
    %2469 = vmatprep.mubr.f32.mxu0 %v2232
    %2470 = vmatmul.mubr.f32.gmra.mxu0 %v2231
    %v2471 = vpop.f32.mrf.mxu0
    %v2472 = vadd.f32 0.0, %v2471
    %v2473 = vpop.f32.mrf.mxu0
    %2474 = vmatprep.mubr.f32.mxu0 %v2234
    %2475 = vmatmul.mubr.f32.gmra.mxu0 %v2233
    %v2476 = vpop.f32.mrf.mxu0
    %v2477 = vadd.f32 0.0, %v2476
    %v2478 = vpop.f32.mrf.mxu0
    %2479 = vmatprep.mubr.f32.mxu0 %v2236
    %2480 = vmatmul.mubr.f32.gmra.mxu0 %v2235
    %v2481 = vpop.f32.mrf.mxu0
    %v2482 = vadd.f32 0.0, %v2481
    %v2483 = vpop.f32.mrf.mxu0
    %2484 = vmatprep.mubr.f32.mxu0 %v2238
    %2485 = vmatmul.mubr.f32.gmra.mxu0 %v2237
    %v2486 = vpop.f32.mrf.mxu0
    %v2487 = vadd.f32 0.0, %v2486
    %v2488 = vpop.f32.mrf.mxu0
    %2489 = vmatprep.mubr.f32.mxu0 %v2240
    %2490 = vmatmul.mubr.f32.gmra.mxu0 %v2239
    %v2491 = vpop.f32.mrf.mxu0
    %v2492 = vadd.f32 0.0, %v2491
    %v2493 = vpop.f32.mrf.mxu0
    %2494 = vmatprep.mubr.f32.mxu0 %v2242
    %2495 = vmatmul.mubr.f32.gmra.mxu0 %v2241
    %v2496 = vpop.f32.mrf.mxu0
    %v2497 = vadd.f32 0.0, %v2496
    %v2498 = vpop.f32.mrf.mxu0
    %2499 = vmatprep.mubr.f32.mxu0 %v2244
    %2500 = vmatmul.mubr.f32.gmra.mxu0 %v2243
    %v2501 = vpop.f32.mrf.mxu0
    %v2502 = vadd.f32 0.0, %v2501
    %v2503 = vpop.f32.mrf.mxu0
    %2504 = vmatprep.mubr.f32.mxu0 %v2246
    %2505 = vmatmul.mubr.f32.gmra.mxu0 %v2245
    %v2506 = vpop.f32.mrf.mxu0
    %v2507 = vadd.f32 0.0, %v2506
    %v2508 = vpop.f32.mrf.mxu0
    %2509 = vmatprep.mubr.f32.mxu0 %v2248
    %2510 = vmatmul.mubr.f32.gmra.mxu0 %v2247
    %v2511 = vpop.f32.mrf.mxu0
    %v2512 = vadd.f32 0.0, %v2511
    %v2513 = vpop.f32.mrf.mxu0
    %2514 = vmatprep.mubr.f32.mxu0 %v2250
    %2515 = vmatmul.mubr.f32.gmra.mxu0 %v2249
    %v2516 = vpop.f32.mrf.mxu0
    %v2517 = vadd.f32 0.0, %v2516
    %v2518 = vpop.f32.mrf.mxu0
    %2519 = vmatprep.mubr.f32.mxu0 %v2252
    %2520 = vmatmul.mubr.f32.gmra.mxu0 %v2251
    %v2521 = vpop.f32.mrf.mxu0
    %v2522 = vadd.f32 0.0, %v2521
    %v2523 = vpop.f32.mrf.mxu0
    %2524 = vdwg.mxu0
    %2525 = vmatprep.subr.mxu0 0.0
    %2526 = vmatpush1.xpose.msra.mxu0 0.0
    %2527 = vmatprep.subr.mxu0 0.0
    %2528 = vmatpush1.xpose.msra.mxu0 0.0
    %2529 = vmatprep.subr.mxu0 0.0
    %2530 = vmatpush1.xpose.msra.mxu0 0.0
    %2531 = vmatprep.subr.mxu0 0.0
    %2532 = vmatpush1.xpose.msra.mxu0 0.0
    %2533 = vmatprep.subr.mxu0 0.0
    %2534 = vmatpush1.xpose.msra.mxu0 0.0
    %2535 = vmatprep.subr.mxu0 0.0
    %2536 = vmatpush1.xpose.msra.mxu0 0.0
    %2537 = vmatprep.subr.mxu0 0.0
    %2538 = vmatpush1.xpose.msra.mxu0 0.0
    %2539 = vmatprep.subr.mxu0 0.0
    %2540 = vmatpush1.xpose.msra.mxu0 0.0
    %2541 = vmatprep.subr.mxu0 0.0
    %2542 = vmatpush1.xpose.msra.mxu0 0.0
    %2543 = vmatprep.subr.mxu0 0.0
    %2544 = vmatpush1.xpose.msra.mxu0 0.0
    %2545 = vmatprep.subr.mxu0 0.0
    %2546 = vmatpush1.xpose.msra.mxu0 0.0
    %2547 = vmatprep.subr.mxu0 0.0
    %2548 = vmatpush1.xpose.msra.mxu0 0.0
    %2549 = vmatprep.subr.mxu0 0.0
    %2550 = vmatpush1.xpose.msra.mxu0 0.0
    %2551 = vmatprep.subr.mxu0 0.0
    %2552 = vmatpush1.xpose.msra.mxu0 0.0
    %2553 = vmatprep.subr.mxu0 0.0
    %2554 = vmatpush1.xpose.msra.mxu0 0.0
    %2555 = vmatprep.subr.mxu0 %v2379
    %2556 = vmatpush1.xpose.msra.mxu0 %v2378
    %2557 = vmatprep.subr.mxu0 0.0
    %2558 = vmatpush2.xpose.msra.mxu0 0.0
    %2559 = vmatprep.subr.mxu0 0.0
    %2560 = vmatpush2.xpose.msra.mxu0 0.0
    %2561 = vmatprep.subr.mxu0 0.0
    %2562 = vmatpush2.xpose.msra.mxu0 0.0
    %2563 = vmatprep.subr.mxu0 0.0
    %2564 = vmatpush2.xpose.msra.mxu0 0.0
    %2565 = vmatprep.subr.mxu0 0.0
    %2566 = vmatpush2.xpose.msra.mxu0 0.0
    %2567 = vmatprep.subr.mxu0 0.0
    %2568 = vmatpush2.xpose.msra.mxu0 0.0
    %2569 = vmatprep.subr.mxu0 0.0
    %2570 = vmatpush2.xpose.msra.mxu0 0.0
    %2571 = vmatprep.subr.mxu0 0.0
    %2572 = vmatpush2.xpose.msra.mxu0 0.0
    %2573 = vmatprep.subr.mxu0 0.0
    %2574 = vmatpush2.xpose.msra.mxu0 0.0
    %2575 = vmatprep.subr.mxu0 0.0
    %2576 = vmatpush2.xpose.msra.mxu0 0.0
    %2577 = vmatprep.subr.mxu0 0.0
    %2578 = vmatpush2.xpose.msra.mxu0 0.0
    %2579 = vmatprep.subr.mxu0 0.0
    %2580 = vmatpush2.xpose.msra.mxu0 0.0
    %2581 = vmatprep.subr.mxu0 0.0
    %2582 = vmatpush2.xpose.msra.mxu0 0.0
    %2583 = vmatprep.subr.mxu0 0.0
    %2584 = vmatpush2.xpose.msra.mxu0 0.0
    %2585 = vmatprep.subr.mxu0 0.0
    %2586 = vmatpush2.xpose.msra.mxu0 0.0
    %2587 = vmatprep.subr.mxu0 0.0
    %2588 = vmatpush2.xpose.msra.mxu0 0.0
    %2589 = vmatprep.mubr.f32.mxu0 1.0
    %2590 = vmatmul.mubr.f32.gmra.mxu0 1.0
    %v2591 = vpop.f32.mrf.mxu0
    %v2592 = vadd.f32 0.0, %v2591
    %v2593 = vpop.f32.mrf.mxu0
    %2594 = vdwg.mxu0
    %v2595 = vlaneseq
    %v2596 = vshrl.u32 %v2595, 7
    %v2597 = vsub.s32 0, %v2596
    %v2598 = vrot.slane %v2592, %v2597
    %v2599 = vmul.f32 %v2598, %v33
    %v2600 = vmul.f32 %v2598, %v34
    %v2601 = vmul.f32 %v2598, %v35
    %v2602 = vmul.f32 %v2598, %v36
    %v2603 = vmul.f32 %v2598, %v37
    %v2604 = vmul.f32 %v2598, %v38
    %v2605 = vmul.f32 %v2598, %v39
    %v2606 = vmul.f32 %v2598, %v40
    %v2607 = vmul.f32 %v2598, %v41
    %v2608 = vmul.f32 %v2598, %v42
    %v2609 = vmul.f32 %v2598, %v43
    %v2610 = vmul.f32 %v2598, %v44
    %v2611 = vmul.f32 %v2598, %v45
    %v2612 = vmul.f32 %v2598, %v46
    %v2613 = vmul.f32 %v2598, %v47
    %v2614 = vmul.f32 %v2598, %v48
    %v2615 = vsub.f32 %v2447, %v2599
    %v2616 = vsub.f32 %v2452, %v2600
    %v2617 = vsub.f32 %v2457, %v2601
    %v2618 = vsub.f32 %v2462, %v2602
    %v2619 = vsub.f32 %v2467, %v2603
    %v2620 = vsub.f32 %v2472, %v2604
    %v2621 = vsub.f32 %v2477, %v2605
    %v2622 = vsub.f32 %v2482, %v2606
    %v2623 = vsub.f32 %v2487, %v2607
    %v2624 = vsub.f32 %v2492, %v2608
    %v2625 = vsub.f32 %v2497, %v2609
    %v2626 = vsub.f32 %v2502, %v2610
    %v2627 = vsub.f32 %v2507, %v2611
    %v2628 = vsub.f32 %v2512, %v2612
    %v2629 = vsub.f32 %v2517, %v2613
    %v2630 = vsub.f32 %v2522, %v2614
    %v2631 = vmul.f32 %v2615, %v2615
    %v2632 = vmul.f32 %v2616, %v2616
    %v2633 = vmul.f32 %v2617, %v2617
    %v2634 = vmul.f32 %v2618, %v2618
    %v2635 = vmul.f32 %v2619, %v2619
    %v2636 = vmul.f32 %v2620, %v2620
    %v2637 = vmul.f32 %v2621, %v2621
    %v2638 = vmul.f32 %v2622, %v2622
    %v2639 = vmul.f32 %v2623, %v2623
    %v2640 = vmul.f32 %v2624, %v2624
    %v2641 = vmul.f32 %v2625, %v2625
    %v2642 = vmul.f32 %v2626, %v2626
    %v2643 = vmul.f32 %v2627, %v2627
    %v2644 = vmul.f32 %v2628, %v2628
    %v2645 = vmul.f32 %v2629, %v2629
    %v2646 = vmul.f32 %v2630, %v2630
    %v2647 = vsel %vm598, %v2631, 0.0
    %v2648 = vsel %vm598, %v2632, 0.0
    %v2649 = vadd.f32 %v2647, %v2648
    %v2650 = vsel %vm598, %v2633, 0.0
    %v2651 = vadd.f32 %v2649, %v2650
    %v2652 = vsel %vm598, %v2634, 0.0
    %v2653 = vadd.f32 %v2651, %v2652
    %v2654 = vsel %vm598, %v2635, 0.0
    %v2655 = vadd.f32 %v2653, %v2654
    %v2656 = vsel %vm598, %v2636, 0.0
    %v2657 = vadd.f32 %v2655, %v2656
    %v2658 = vsel %vm598, %v2637, 0.0
    %v2659 = vadd.f32 %v2657, %v2658
    %v2660 = vsel %vm598, %v2638, 0.0
    %v2661 = vadd.f32 %v2659, %v2660
    %v2662 = vsel %vm598, %v2639, 0.0
    %v2663 = vadd.f32 %v2661, %v2662
    %v2664 = vsel %vm598, %v2640, 0.0
    %v2665 = vadd.f32 %v2663, %v2664
    %v2666 = vsel %vm598, %v2641, 0.0
    %v2667 = vadd.f32 %v2665, %v2666
    %v2668 = vsel %vm598, %v2642, 0.0
    %v2669 = vadd.f32 %v2667, %v2668
    %v2670 = vsel %vm598, %v2643, 0.0
    %v2671 = vadd.f32 %v2669, %v2670
    %v2672 = vsel %vm598, %v2644, 0.0
    %v2673 = vadd.f32 %v2671, %v2672
    %v2674 = vsel %vm598, %v2645, 0.0
    %v2675 = vadd.f32 %v2673, %v2674
    %v2676 = vsel %vm598, %v2646, 0.0
    %v2677 = vadd.f32 %v2675, %v2676
    %v2678 = vrot.slane %v2677, 4
    %v2679 = vadd.f32 %v2677, %v2678
    %v2680 = vrot.slane %v2679, 2
    %v2681 = vadd.f32 %v2679, %v2680
    %v2682 = vrot.slane %v2681, 1
    %v2683 = vadd.f32 %v2681, %v2682
    %v2684 = vmax.f32 %v2683, 1e-24
    %v2685 = vrsqrt.pop %v2684
    %v2686 = vmul.f32 %v2615, %v2685
    %v2687 = vmul.f32 %v2616, %v2685
    %v2688 = vmul.f32 %v2617, %v2685
    %v2689 = vmul.f32 %v2618, %v2685
    %v2690 = vmul.f32 %v2619, %v2685
    %v2691 = vmul.f32 %v2620, %v2685
    %v2692 = vmul.f32 %v2621, %v2685
    %v2693 = vmul.f32 %v2622, %v2685
    %v2694 = vmul.f32 %v2623, %v2685
    %v2695 = vmul.f32 %v2624, %v2685
    %v2696 = vmul.f32 %v2625, %v2685
    %v2697 = vmul.f32 %v2626, %v2685
    %v2698 = vmul.f32 %v2627, %v2685
    %v2699 = vmul.f32 %v2628, %v2685
    %v2700 = vmul.f32 %v2629, %v2685
    %v2701 = vmul.f32 %v2630, %v2685
    %v2702 = vmul.f32 %v2686, %v2686
    %v2703 = vmul.f32 %v2687, %v2687
    %v2704 = vmul.f32 %v2688, %v2688
    %v2705 = vmul.f32 %v2689, %v2689
    %v2706 = vmul.f32 %v2690, %v2690
    %v2707 = vmul.f32 %v2691, %v2691
    %v2708 = vmul.f32 %v2692, %v2692
    %v2709 = vmul.f32 %v2693, %v2693
    %v2710 = vmul.f32 %v2694, %v2694
    %v2711 = vmul.f32 %v2695, %v2695
    %v2712 = vmul.f32 %v2696, %v2696
    %v2713 = vmul.f32 %v2697, %v2697
    %v2714 = vmul.f32 %v2698, %v2698
    %v2715 = vmul.f32 %v2699, %v2699
    %v2716 = vmul.f32 %v2700, %v2700
    %v2717 = vmul.f32 %v2701, %v2701
    %v2718 = vsel %vm598, %v2702, 0.0
    %v2719 = vsel %vm598, %v2703, 0.0
    %v2720 = vadd.f32 %v2718, %v2719
    %v2721 = vsel %vm598, %v2704, 0.0
    %v2722 = vadd.f32 %v2720, %v2721
    %v2723 = vsel %vm598, %v2705, 0.0
    %v2724 = vadd.f32 %v2722, %v2723
    %v2725 = vsel %vm598, %v2706, 0.0
    %v2726 = vadd.f32 %v2724, %v2725
    %v2727 = vsel %vm598, %v2707, 0.0
    %v2728 = vadd.f32 %v2726, %v2727
    %v2729 = vsel %vm598, %v2708, 0.0
    %v2730 = vadd.f32 %v2728, %v2729
    %v2731 = vsel %vm598, %v2709, 0.0
    %v2732 = vadd.f32 %v2730, %v2731
    %v2733 = vsel %vm598, %v2710, 0.0
    %v2734 = vadd.f32 %v2732, %v2733
    %v2735 = vsel %vm598, %v2711, 0.0
    %v2736 = vadd.f32 %v2734, %v2735
    %v2737 = vsel %vm598, %v2712, 0.0
    %v2738 = vadd.f32 %v2736, %v2737
    %v2739 = vsel %vm598, %v2713, 0.0
    %v2740 = vadd.f32 %v2738, %v2739
    %v2741 = vsel %vm598, %v2714, 0.0
    %v2742 = vadd.f32 %v2740, %v2741
    %v2743 = vsel %vm598, %v2715, 0.0
    %v2744 = vadd.f32 %v2742, %v2743
    %v2745 = vsel %vm598, %v2716, 0.0
    %v2746 = vadd.f32 %v2744, %v2745
    %v2747 = vsel %vm598, %v2717, 0.0
    %v2748 = vadd.f32 %v2746, %v2747
    %v2749 = vrot.slane %v2748, 4
    %v2750 = vadd.f32 %v2748, %v2749
    %v2751 = vrot.slane %v2750, 2
    %v2752 = vadd.f32 %v2750, %v2751
    %v2753 = vrot.slane %v2752, 1
    %v2754 = vadd.f32 %v2752, %v2753
    %v2755 = vsel %vm598, %v2754, 0.0
    %2756 = vadd.xlane.f32.xlu0 %v2755
    %v2757 = vpop.xlane.xlu0 %2756
    %v2758 = vmax.f32 %v2757, 1e-24
    %v2759 = vrsqrt.pop %v2758
    %v2760 = vmul.f32 %v2686, %v2759
    %v2761 = vmul.f32 %v2687, %v2759
    %v2762 = vmul.f32 %v2688, %v2759
    %v2763 = vmul.f32 %v2689, %v2759
    %v2764 = vmul.f32 %v2690, %v2759
    %v2765 = vmul.f32 %v2691, %v2759
    %v2766 = vmul.f32 %v2692, %v2759
    %v2767 = vmul.f32 %v2693, %v2759
    %v2768 = vmul.f32 %v2694, %v2759
    %v2769 = vmul.f32 %v2695, %v2759
    %v2770 = vmul.f32 %v2696, %v2759
    %v2771 = vmul.f32 %v2697, %v2759
    %v2772 = vmul.f32 %v2698, %v2759
    %v2773 = vmul.f32 %v2699, %v2759
    %v2774 = vmul.f32 %v2700, %v2759
    %v2775 = vmul.f32 %v2701, %v2759
    %s2776 = scalar_lea.vmem %s4, 384
    %2777 = vst.msk [vmem:[%s2776] sm:$0xff] %vm598, %v2760
    %2778 = vst.msk [vmem:[%s2776 + $0x8] sm:$0xff] %vm598, %v2761
    %2779 = vst.msk [vmem:[%s2776 + $0x10] sm:$0xff] %vm598, %v2762
    %2780 = vst.msk [vmem:[%s2776 + $0x18] sm:$0xff] %vm598, %v2763
    %2781 = vst.msk [vmem:[%s2776 + $0x20] sm:$0xff] %vm598, %v2764
    %2782 = vst.msk [vmem:[%s2776 + $0x28] sm:$0xff] %vm598, %v2765
    %2783 = vst.msk [vmem:[%s2776 + $0x30] sm:$0xff] %vm598, %v2766
    %2784 = vst.msk [vmem:[%s2776 + $0x38] sm:$0xff] %vm598, %v2767
    %2785 = vst.msk [vmem:[%s2776 + $0x40] sm:$0xff] %vm598, %v2768
    %2786 = vst.msk [vmem:[%s2776 + $0x48] sm:$0xff] %vm598, %v2769
    %2787 = vst.msk [vmem:[%s2776 + $0x50] sm:$0xff] %vm598, %v2770
    %2788 = vst.msk [vmem:[%s2776 + $0x58] sm:$0xff] %vm598, %v2771
    %2789 = vst.msk [vmem:[%s2776 + $0x60] sm:$0xff] %vm598, %v2772
    %2790 = vst.msk [vmem:[%s2776 + $0x68] sm:$0xff] %vm598, %v2773
    %2791 = vst.msk [vmem:[%s2776 + $0x70] sm:$0xff] %vm598, %v2774
    %2792 = vst.msk [vmem:[%s2776 + $0x78] sm:$0xff] %vm598, %v2775
    // Predicated region
    $region22: #{tpu_custom_call.1} parent=1 // pred_check
      _
    $region23: #{tpu_custom_call.1} parent=1 // pred_check_branch
      %2794 = sbr.rel (0) target = $region25
    $region24: #{tpu_custom_call.1} parent=1 // pred_region
      _
    $region25: #{tpu_custom_call.1} parent=1 // pred_fallthru
      _
    // Predicated region
    $region26: #{tpu_custom_call.1} parent=1 // pred_check
      _
    $region27: #{tpu_custom_call.1} parent=1 // pred_check_branch
      %2796 = sbr.rel (0) target = $region29
    $region28: #{tpu_custom_call.1} parent=1 // pred_region
      _
    $region29: #{tpu_custom_call.1} parent=1 // pred_fallthru
      _
    %2797 = vsyncpa [#allocation3], 1

</llo_original>
